<compile_context>
chip_gen: v7x
topology: tpu7x:2x2x1
jax: 0.10.0
libtpu: 0.0.40
codegen_flags: <defaults>
</compile_context>

<pallas_src>
import functools

import jax
import jax.numpy as jnp
from jax import lax
from jax.experimental import pallas as pl
from jax.experimental.pallas import tpu as pltpu

KSIZE = 7
PAD = 3


def cbam_kernel(x_ref, fcw_ref, fcb_ref, saw_ref, o_ref, *, H, W):
    # x_ref   : (1, C, H*W)  input feature map, lane-dense (VMEM, input dtype)
    # fcw_ref : (C, C)       channel-attention 1x1 conv weight (VMEM, f32)
    # fcb_ref : (C, 1)       channel-attention bias, sublane-major (VMEM, f32)
    # saw_ref : (2, 49)      spatial-attention 7x7 conv weight, flat (VMEM, f32)
    # o_ref   : (1, C, H*W)  output, lane-dense (VMEM)
    HW = H * W
    x = x_ref[0]                                                        # (C, HW)

    # ---------------- Channel attention ----------------
    # Global average pool (lane-axis reduce, f32 accumulation, no f32 copy of x).
    pooled = jnp.mean(x, axis=1, keepdims=True, dtype=jnp.float32)      # (C, 1)
    att = jnp.dot(fcw_ref[...], pooled,
                  preferred_element_type=jnp.float32) + fcb_ref[...]    # (C, 1)
    ch_scale = jax.nn.sigmoid(att)                                      # (C, 1) f32
    xs = x * ch_scale.astype(x.dtype)                                   # (C, HW)

    # ---------------- Spatial attention ----------------
    # Channel mean / max planes, kept flat and stacked on the sublane axis so the
    # two conv input channels share every roll / mask / MAC below.
    mean_p = jnp.mean(xs, axis=0, keepdims=True, dtype=jnp.float32)     # (1, HW)
    max_p = jnp.max(xs, axis=0, keepdims=True).astype(jnp.float32)      # (1, HW)
    planes = jnp.concatenate([mean_p, max_p], axis=0)                   # (2, HW)

    # Row / column index of every flat position (for zero-padding boundary masks).
    lane = lax.broadcasted_iota(jnp.int32, (1, HW), 1)
    if W & (W - 1) == 0:                 # power-of-two fast path (bitwise ops only)
        col = lane & (W - 1)
        row = lane >> (W.bit_length() - 1)
    else:
        col = lane % W
        row = lane // W

    # 7x7 cross-correlation (2 in-channels -> 1 out-channel) as lane rotations (XLU)
    # plus boundary masks; column shifts are hoisted out of the row loop (roll is
    # linear), per-channel accumulation summed over sublanes at the end.
    conv = jnp.zeros((2, HW), jnp.float32)
    for jj in range(KSIZE):                          # static: 7 column offsets
        dj = jj - PAD
        q = pltpu.roll(planes, shift=(-dj) % HW, axis=1)
        q = jnp.where((col >= -dj) & (col <= W - 1 - dj), q, 0.0)

        def row_step(ii, acc, q=q, jj=jj):
            di = ii - PAD
            r = pltpu.roll(q, shift=jnp.mod(-di * W, HW), axis=1)
            r = jnp.where((row >= -di) & (row <= H - 1 - di), r, 0.0)
            wpair = saw_ref[:, pl.ds(ii * KSIZE + jj, 1)]               # (2, 1)
            return acc + wpair * r

        conv = lax.fori_loop(0, KSIZE, row_step, conv, unroll=True)

    sa = jax.nn.sigmoid(jnp.sum(conv, axis=0, keepdims=True))           # (1, HW)
    o_ref[0] = (xs * sa.astype(xs.dtype)).astype(o_ref.dtype)


def cbam_forward(x, fc_w, fc_b, sa_w):
    """CBAM forward.

    x    : (B, C, H, W)
    fc_w : (C, C)      ChannelAttention.fc weight (Conv2d(C,C,1) squeezed)
    fc_b : (C,)        ChannelAttention.fc bias
    sa_w : (2, 7, 7)   SpatialAttention.cv1 weight (Conv2d(2,1,7) squeezed)
    """
    B, C, H, W = x.shape
    HW = H * W
    x_flat = x.reshape(B, C, HW)                        # lane-dense view (free)
    fcw = fc_w.astype(jnp.float32)
    fcb = fc_b.reshape(C, 1).astype(jnp.float32)        # sublane-major bias
    saw = sa_w.reshape(2, KSIZE * KSIZE).astype(jnp.float32)

    blk_bytes = C * HW * x.dtype.itemsize
    vmem_limit = int(min(8 * blk_bytes + (16 << 20), 64 << 20))

    out_flat = pl.pallas_call(
        functools.partial(cbam_kernel, H=H, W=W),
        out_shape=jax.ShapeDtypeStruct((B, C, HW), x.dtype),
        grid_spec=pltpu.PrefetchScalarGridSpec(
            num_scalar_prefetch=0,
            grid=(B,),
            in_specs=[
                pl.BlockSpec((1, C, HW), lambda b: (b, 0, 0)),        # x (lane-dense)
                pl.BlockSpec((C, C), lambda b: (0, 0)),               # fc weight
                pl.BlockSpec((C, 1), lambda b: (0, 0)),               # fc bias
                pl.BlockSpec((2, KSIZE * KSIZE), lambda b: (0, 0)),   # 7x7 weight
            ],
            out_specs=pl.BlockSpec((1, C, HW), lambda b: (b, 0, 0)),
        ),
        compiler_params=pltpu.CompilerParams(
            dimension_semantics=("parallel",),
            vmem_limit_bytes=vmem_limit),
    )(x_flat, fcw, fcb, saw)
    return out_flat.reshape(B, C, H, W)


def cbam_reference(x, fc_w, fc_b, sa_w):
    """Pure-JAX reference matching the PyTorch CBAM module."""
    pooled = jnp.mean(x, axis=(2, 3))                                  # (B, C)
    ca = jax.nn.sigmoid(pooled @ fc_w.T + fc_b)[:, :, None, None]      # (B,C,1,1)
    xs = x * ca
    cat = jnp.concatenate([jnp.mean(xs, axis=1, keepdims=True),
                           jnp.max(xs, axis=1, keepdims=True)], axis=1)
    conv = lax.conv_general_dilated(
        cat, sa_w.reshape(1, 2, KSIZE, KSIZE),
        window_strides=(1, 1), padding=((PAD, PAD), (PAD, PAD)),
        dimension_numbers=("NCHW", "OIHW", "NCHW"))
    return xs * jax.nn.sigmoid(conv)


if __name__ == "__main__":
    B, C, H, W = 2, 8, 16, 16

    key = jax.random.PRNGKey(0)
    k1, k2, k3, k4 = jax.random.split(key, 4)
    x = jax.random.normal(k1, (B, C, H, W), dtype=jnp.float32)
    fc_w = jax.random.normal(k2, (C, C), dtype=jnp.float32) * (1.0 / C ** 0.5)
    fc_b = jax.random.normal(k3, (C,), dtype=jnp.float32) * 0.1
    sa_w = jax.random.normal(k4, (2, KSIZE, KSIZE), dtype=jnp.float32) * 0.1

    out = jax.block_until_ready(cbam_forward(x, fc_w, fc_b, sa_w))
    ref = cbam_reference(x, fc_w, fc_b, sa_w)

    assert out.shape == (B, C, H, W)
    assert jnp.allclose(out, ref, atol=2e-5, rtol=2e-5), (
        "mismatch vs reference, max abs err = "
        f"{float(jnp.max(jnp.abs(out - ref)))}")

    print("KERNEL_OK")
</pallas_src>

<mosaic_0001>
module attributes {stable_mosaic.version = 11 : i64} {
  func.func @cbam_kernel(%arg0: i32, %arg1: memref<1x8x256xf32, #tpu.memory_space<vmem>>, %arg2: memref<8x8xf32, #tpu.memory_space<vmem>>, %arg3: memref<8x1xf32, #tpu.memory_space<vmem>>, %arg4: memref<2x49xf32, #tpu.memory_space<vmem>>, %arg5: memref<1x8x256xf32, #tpu.memory_space<vmem>>) attributes {dimension_semantics = [#tpu.dimension_semantics<parallel>], iteration_bounds = array<i64: 2>, scalar_prefetch = 0 : i64, scratch_operands = 0 : i64, tpu.core_type = #tpu.core_type<tc>, window_params = [{transform_indices = @transform_0, window_bounds = array<i64: 1, 8, 256>}, {pipeline_mode = #tpu.pipeline_mode<synchronous>, transform_indices = @transform_1, window_bounds = array<i64: 8, 8>}, {pipeline_mode = #tpu.pipeline_mode<synchronous>, transform_indices = @transform_2, window_bounds = array<i64: 8, 1>}, {pipeline_mode = #tpu.pipeline_mode<synchronous>, transform_indices = @transform_3, window_bounds = array<i64: 2, 49>}, {transform_indices = @transform_4, window_bounds = array<i64: 1, 8, 256>}]} {
    %c0 = arith.constant 0 : index
    %c0_0 = arith.constant 0 : index
    %c0_1 = arith.constant 0 : index
    %0 = vector.load %arg1[%c0, %c0_0, %c0_1] : memref<1x8x256xf32, #tpu.memory_space<vmem>>, vector<1x8x256xf32>
    %1 = vector.shape_cast %0 : vector<1x8x256xf32> to vector<8x256xf32>
    %cst = arith.constant dense<0.000000e+00> : vector<8xf32>
    %2 = vector.multi_reduction <add>, %1, %cst [1] : vector<8x256xf32> to vector<8xf32>
    %3 = vector.shape_cast %2 : vector<8xf32> to vector<8x1xf32>
    %cst_2 = arith.constant 2.560000e+02 : f32
    %4 = vector.broadcast %cst_2 : f32 to vector<8x1xf32>
    %5 = arith.divf %3, %4 : vector<8x1xf32>
    %c0_3 = arith.constant 0 : index
    %c0_4 = arith.constant 0 : index
    %6 = vector.load %arg2[%c0_3, %c0_4] : memref<8x8xf32, #tpu.memory_space<vmem>>, vector<8x8xf32>
    %cst_5 = arith.constant dense<0.000000e+00> : vector<8x1xf32>
    %7 = tpu.matmul %6, %5, %cst_5 {dimension_numbers = #tpu.dot_dimension_numbers<[1], [0], [0], [1], [0, 0, 1, 1], [], []>} : vector<8x8xf32>, vector<8x1xf32>, vector<8x1xf32> -> vector<8x1xf32>
    %c0_6 = arith.constant 0 : index
    %c0_7 = arith.constant 0 : index
    %8 = vector.load %arg3[%c0_6, %c0_7] : memref<8x1xf32, #tpu.memory_space<vmem>>, vector<8x1xf32>
    %9 = arith.addf %7, %8 : vector<8x1xf32>
    %10 = arith.negf %9 : vector<8x1xf32>
    %11 = math.exp %10 : vector<8x1xf32>
    %cst_8 = arith.constant 1.000000e+00 : f32
    %12 = vector.broadcast %cst_8 : f32 to vector<8x1xf32>
    %13 = arith.addf %12, %11 : vector<8x1xf32>
    %14 = arith.divf %12, %13 : vector<8x1xf32>
    %15 = vector.broadcast %14 : vector<8x1xf32> to vector<8x256xf32>
    %16 = arith.mulf %1, %15 : vector<8x256xf32>
    %cst_9 = arith.constant dense<0.000000e+00> : vector<256xf32>
    %17 = vector.multi_reduction <add>, %16, %cst_9 [0] : vector<8x256xf32> to vector<256xf32>
    %18 = vector.shape_cast %17 : vector<256xf32> to vector<1x256xf32>
    %cst_10 = arith.constant 8.000000e+00 : f32
    %19 = vector.broadcast %cst_10 : f32 to vector<1x256xf32>
    %20 = arith.divf %18, %19 : vector<1x256xf32>
    %cst_11 = arith.constant dense<0xFF800000> : vector<256xf32>
    %21 = vector.multi_reduction <maximumf>, %16, %cst_11 [0] : vector<8x256xf32> to vector<256xf32>
    %22 = vector.shape_cast %21 : vector<256xf32> to vector<1x256xf32>
    %23 = tpu.concatenate %20, %22 in 0 : vector<1x256xf32>, vector<1x256xf32> -> vector<2x256xf32>
    %24 = tpu.iota {dimensions = array<i32: 1>} : vector<1x256xi32>
    %c15_i32 = arith.constant 15 : i32
    %25 = vector.broadcast %c15_i32 : i32 to vector<1x256xi32>
    %26 = arith.andi %24, %25 : vector<1x256xi32>
    %c4_i32 = arith.constant 4 : i32
    %27 = vector.broadcast %c4_i32 : i32 to vector<1x256xi32>
    %28 = arith.shrsi %24, %27 : vector<1x256xi32>
    %cst_12 = arith.constant 0.000000e+00 : f32
    %29 = vector.broadcast %cst_12 : f32 to vector<2x256xf32>
    %c3_i32 = arith.constant 3 : i32
    %30 = tpu.dynamic_rotate %23 by %c3_i32 dim 1 : vector<2x256xf32>, i32 -> vector<2x256xf32>
    %c3_i32_13 = arith.constant 3 : i32
    %31 = vector.broadcast %c3_i32_13 : i32 to vector<1x256xi32>
    %32 = arith.cmpi sge, %26, %31 : vector<1x256xi32>
    %c18_i32 = arith.constant 18 : i32
    %33 = vector.broadcast %c18_i32 : i32 to vector<1x256xi32>
    %34 = arith.cmpi sle, %26, %33 : vector<1x256xi32>
    %35 = arith.andi %32, %34 : vector<1x256xi1>
    %cst_14 = arith.constant 0.000000e+00 : f32
    %36 = vector.shape_cast %35 : vector<1x256xi1> to vector<1x256xi1>
    %37 = vector.broadcast %36 : vector<1x256xi1> to vector<2x256xi1>
    %38 = vector.broadcast %cst_14 : f32 to vector<2x256xf32>
    %39 = arith.select %37, %30, %38 : vector<2x256xi1>, vector<2x256xf32>
    %c0_i32 = arith.constant 0 : i32
    %c3_i32_15 = arith.constant 3 : i32
    %40 = arith.subi %c0_i32, %c3_i32_15 : i32
    %c0_i32_16 = arith.constant 0 : i32
    %41 = arith.subi %c0_i32_16, %40 : i32
    %c16_i32 = arith.constant 16 : i32
    %42 = arith.muli %41, %c16_i32 : i32
    %c256_i32 = arith.constant 256 : i32
    %c0_i32_17 = arith.constant 0 : i32
    %43 = arith.cmpi eq, %c256_i32, %c0_i32_17 : i32
    %c1_i32 = arith.constant 1 : i32
    %44 = arith.select %43, %c1_i32, %c256_i32 : i32
    %45 = arith.remsi %42, %44 : i32
    %c0_i32_18 = arith.constant 0 : i32
    %46 = arith.cmpi ne, %45, %c0_i32_18 : i32
    %c0_i32_19 = arith.constant 0 : i32
    %47 = arith.cmpi slt, %45, %c0_i32_19 : i32
    %c0_i32_20 = arith.constant 0 : i32
    %48 = arith.cmpi slt, %44, %c0_i32_20 : i32
    %49 = arith.xori %47, %48 : i1
    %50 = arith.andi %49, %46 : i1
    %51 = arith.addi %45, %44 : i32
    %52 = arith.select %50, %51, %45 : i32
    %53 = tpu.dynamic_rotate %39 by %52 dim 1 : vector<2x256xf32>, i32 -> vector<2x256xf32>
    %c0_i32_21 = arith.constant 0 : i32
    %54 = arith.subi %c0_i32_21, %40 : i32
    %55 = vector.broadcast %54 : i32 to vector<1x256xi32>
    %56 = arith.cmpi sge, %28, %55 : vector<1x256xi32>
    %c15_i32_22 = arith.constant 15 : i32
    %57 = arith.subi %c15_i32_22, %40 : i32
    %58 = vector.broadcast %57 : i32 to vector<1x256xi32>
    %59 = arith.cmpi sle, %28, %58 : vector<1x256xi32>
    %60 = arith.andi %56, %59 : vector<1x256xi1>
    %cst_23 = arith.constant 0.000000e+00 : f32
    %61 = vector.shape_cast %60 : vector<1x256xi1> to vector<1x256xi1>
    %62 = vector.broadcast %61 : vector<1x256xi1> to vector<2x256xi1>
    %63 = vector.broadcast %cst_23 : f32 to vector<2x256xf32>
    %64 = arith.select %62, %53, %63 : vector<2x256xi1>, vector<2x256xf32>
    %c7_i32 = arith.constant 7 : i32
    %65 = arith.muli %c0_i32, %c7_i32 : i32
    %c0_i32_24 = arith.constant 0 : i32
    %66 = arith.addi %65, %c0_i32_24 : i32
    %c0_25 = arith.constant 0 : index
    %67 = arith.index_cast %66 : i32 to index
    %68 = vector.load %arg4[%c0_25, %67] : memref<2x49xf32, #tpu.memory_space<vmem>>, vector<2x1xf32>
    %69 = vector.broadcast %68 : vector<2x1xf32> to vector<2x256xf32>
    %70 = arith.mulf %69, %64 : vector<2x256xf32>
    %71 = arith.addf %29, %70 : vector<2x256xf32>
    %c1_i32_26 = arith.constant 1 : i32
    %c3_i32_27 = arith.constant 3 : i32
    %72 = arith.subi %c1_i32_26, %c3_i32_27 : i32
    %c0_i32_28 = arith.constant 0 : i32
    %73 = arith.subi %c0_i32_28, %72 : i32
    %c16_i32_29 = arith.constant 16 : i32
    %74 = arith.muli %73, %c16_i32_29 : i32
    %c256_i32_30 = arith.constant 256 : i32
    %c0_i32_31 = arith.constant 0 : i32
    %75 = arith.cmpi eq, %c256_i32_30, %c0_i32_31 : i32
    %c1_i32_32 = arith.constant 1 : i32
    %76 = arith.select %75, %c1_i32_32, %c256_i32_30 : i32
    %77 = arith.remsi %74, %76 : i32
    %c0_i32_33 = arith.constant 0 : i32
    %78 = arith.cmpi ne, %77, %c0_i32_33 : i32
    %c0_i32_34 = arith.constant 0 : i32
    %79 = arith.cmpi slt, %77, %c0_i32_34 : i32
    %c0_i32_35 = arith.constant 0 : i32
    %80 = arith.cmpi slt, %76, %c0_i32_35 : i32
    %81 = arith.xori %79, %80 : i1
    %82 = arith.andi %81, %78 : i1
    %83 = arith.addi %77, %76 : i32
    %84 = arith.select %82, %83, %77 : i32
    %85 = tpu.dynamic_rotate %39 by %84 dim 1 : vector<2x256xf32>, i32 -> vector<2x256xf32>
    %c0_i32_36 = arith.constant 0 : i32
    %86 = arith.subi %c0_i32_36, %72 : i32
    %87 = vector.broadcast %86 : i32 to vector<1x256xi32>
    %88 = arith.cmpi sge, %28, %87 : vector<1x256xi32>
    %c15_i32_37 = arith.constant 15 : i32
    %89 = arith.subi %c15_i32_37, %72 : i32
    %90 = vector.broadcast %89 : i32 to vector<1x256xi32>
    %91 = arith.cmpi sle, %28, %90 : vector<1x256xi32>
    %92 = arith.andi %88, %91 : vector<1x256xi1>
    %cst_38 = arith.constant 0.000000e+00 : f32
    %93 = vector.shape_cast %92 : vector<1x256xi1> to vector<1x256xi1>
    %94 = vector.broadcast %93 : vector<1x256xi1> to vector<2x256xi1>
    %95 = vector.broadcast %cst_38 : f32 to vector<2x256xf32>
    %96 = arith.select %94, %85, %95 : vector<2x256xi1>, vector<2x256xf32>
    %c7_i32_39 = arith.constant 7 : i32
    %97 = arith.muli %c1_i32_26, %c7_i32_39 : i32
    %c0_i32_40 = arith.constant 0 : i32
    %98 = arith.addi %97, %c0_i32_40 : i32
    %c0_41 = arith.constant 0 : index
    %99 = arith.index_cast %98 : i32 to index
    %100 = vector.load %arg4[%c0_41, %99] : memref<2x49xf32, #tpu.memory_space<vmem>>, vector<2x1xf32>
    %101 = vector.broadcast %100 : vector<2x1xf32> to vector<2x256xf32>
    %102 = arith.mulf %101, %96 : vector<2x256xf32>
    %103 = arith.addf %71, %102 : vector<2x256xf32>
    %c2_i32 = arith.constant 2 : i32
    %c3_i32_42 = arith.constant 3 : i32
    %104 = arith.subi %c2_i32, %c3_i32_42 : i32
    %c0_i32_43 = arith.constant 0 : i32
    %105 = arith.subi %c0_i32_43, %104 : i32
    %c16_i32_44 = arith.constant 16 : i32
    %106 = arith.muli %105, %c16_i32_44 : i32
    %c256_i32_45 = arith.constant 256 : i32
    %c0_i32_46 = arith.constant 0 : i32
    %107 = arith.cmpi eq, %c256_i32_45, %c0_i32_46 : i32
    %c1_i32_47 = arith.constant 1 : i32
    %108 = arith.select %107, %c1_i32_47, %c256_i32_45 : i32
    %109 = arith.remsi %106, %108 : i32
    %c0_i32_48 = arith.constant 0 : i32
    %110 = arith.cmpi ne, %109, %c0_i32_48 : i32
    %c0_i32_49 = arith.constant 0 : i32
    %111 = arith.cmpi slt, %109, %c0_i32_49 : i32
    %c0_i32_50 = arith.constant 0 : i32
    %112 = arith.cmpi slt, %108, %c0_i32_50 : i32
    %113 = arith.xori %111, %112 : i1
    %114 = arith.andi %113, %110 : i1
    %115 = arith.addi %109, %108 : i32
    %116 = arith.select %114, %115, %109 : i32
    %117 = tpu.dynamic_rotate %39 by %116 dim 1 : vector<2x256xf32>, i32 -> vector<2x256xf32>
    %c0_i32_51 = arith.constant 0 : i32
    %118 = arith.subi %c0_i32_51, %104 : i32
    %119 = vector.broadcast %118 : i32 to vector<1x256xi32>
    %120 = arith.cmpi sge, %28, %119 : vector<1x256xi32>
    %c15_i32_52 = arith.constant 15 : i32
    %121 = arith.subi %c15_i32_52, %104 : i32
    %122 = vector.broadcast %121 : i32 to vector<1x256xi32>
    %123 = arith.cmpi sle, %28, %122 : vector<1x256xi32>
    %124 = arith.andi %120, %123 : vector<1x256xi1>
    %cst_53 = arith.constant 0.000000e+00 : f32
    %125 = vector.shape_cast %124 : vector<1x256xi1> to vector<1x256xi1>
    %126 = vector.broadcast %125 : vector<1x256xi1> to vector<2x256xi1>
    %127 = vector.broadcast %cst_53 : f32 to vector<2x256xf32>
    %128 = arith.select %126, %117, %127 : vector<2x256xi1>, vector<2x256xf32>
    %c7_i32_54 = arith.constant 7 : i32
    %129 = arith.muli %c2_i32, %c7_i32_54 : i32
    %c0_i32_55 = arith.constant 0 : i32
    %130 = arith.addi %129, %c0_i32_55 : i32
    %c0_56 = arith.constant 0 : index
    %131 = arith.index_cast %130 : i32 to index
    %132 = vector.load %arg4[%c0_56, %131] : memref<2x49xf32, #tpu.memory_space<vmem>>, vector<2x1xf32>
    %133 = vector.broadcast %132 : vector<2x1xf32> to vector<2x256xf32>
    %134 = arith.mulf %133, %128 : vector<2x256xf32>
    %135 = arith.addf %103, %134 : vector<2x256xf32>
    %c3_i32_57 = arith.constant 3 : i32
    %c3_i32_58 = arith.constant 3 : i32
    %136 = arith.subi %c3_i32_57, %c3_i32_58 : i32
    %c0_i32_59 = arith.constant 0 : i32
    %137 = arith.subi %c0_i32_59, %136 : i32
    %c16_i32_60 = arith.constant 16 : i32
    %138 = arith.muli %137, %c16_i32_60 : i32
    %c256_i32_61 = arith.constant 256 : i32
    %c0_i32_62 = arith.constant 0 : i32
    %139 = arith.cmpi eq, %c256_i32_61, %c0_i32_62 : i32
    %c1_i32_63 = arith.constant 1 : i32
    %140 = arith.select %139, %c1_i32_63, %c256_i32_61 : i32
    %141 = arith.remsi %138, %140 : i32
    %c0_i32_64 = arith.constant 0 : i32
    %142 = arith.cmpi ne, %141, %c0_i32_64 : i32
    %c0_i32_65 = arith.constant 0 : i32
    %143 = arith.cmpi slt, %141, %c0_i32_65 : i32
    %c0_i32_66 = arith.constant 0 : i32
    %144 = arith.cmpi slt, %140, %c0_i32_66 : i32
    %145 = arith.xori %143, %144 : i1
    %146 = arith.andi %145, %142 : i1
    %147 = arith.addi %141, %140 : i32
    %148 = arith.select %146, %147, %141 : i32
    %149 = tpu.dynamic_rotate %39 by %148 dim 1 : vector<2x256xf32>, i32 -> vector<2x256xf32>
    %c0_i32_67 = arith.constant 0 : i32
    %150 = arith.subi %c0_i32_67, %136 : i32
    %151 = vector.broadcast %150 : i32 to vector<1x256xi32>
    %152 = arith.cmpi sge, %28, %151 : vector<1x256xi32>
    %c15_i32_68 = arith.constant 15 : i32
    %153 = arith.subi %c15_i32_68, %136 : i32
    %154 = vector.broadcast %153 : i32 to vector<1x256xi32>
    %155 = arith.cmpi sle, %28, %154 : vector<1x256xi32>
    %156 = arith.andi %152, %155 : vector<1x256xi1>
    %cst_69 = arith.constant 0.000000e+00 : f32
    %157 = vector.shape_cast %156 : vector<1x256xi1> to vector<1x256xi1>
    %158 = vector.broadcast %157 : vector<1x256xi1> to vector<2x256xi1>
    %159 = vector.broadcast %cst_69 : f32 to vector<2x256xf32>
    %160 = arith.select %158, %149, %159 : vector<2x256xi1>, vector<2x256xf32>
    %c7_i32_70 = arith.constant 7 : i32
    %161 = arith.muli %c3_i32_57, %c7_i32_70 : i32
    %c0_i32_71 = arith.constant 0 : i32
    %162 = arith.addi %161, %c0_i32_71 : i32
    %c0_72 = arith.constant 0 : index
    %163 = arith.index_cast %162 : i32 to index
    %164 = vector.load %arg4[%c0_72, %163] : memref<2x49xf32, #tpu.memory_space<vmem>>, vector<2x1xf32>
    %165 = vector.broadcast %164 : vector<2x1xf32> to vector<2x256xf32>
    %166 = arith.mulf %165, %160 : vector<2x256xf32>
    %167 = arith.addf %135, %166 : vector<2x256xf32>
    %c4_i32_73 = arith.constant 4 : i32
    %c3_i32_74 = arith.constant 3 : i32
    %168 = arith.subi %c4_i32_73, %c3_i32_74 : i32
    %c0_i32_75 = arith.constant 0 : i32
    %169 = arith.subi %c0_i32_75, %168 : i32
    %c16_i32_76 = arith.constant 16 : i32
    %170 = arith.muli %169, %c16_i32_76 : i32
    %c256_i32_77 = arith.constant 256 : i32
    %c0_i32_78 = arith.constant 0 : i32
    %171 = arith.cmpi eq, %c256_i32_77, %c0_i32_78 : i32
    %c1_i32_79 = arith.constant 1 : i32
    %172 = arith.select %171, %c1_i32_79, %c256_i32_77 : i32
    %173 = arith.remsi %170, %172 : i32
    %c0_i32_80 = arith.constant 0 : i32
    %174 = arith.cmpi ne, %173, %c0_i32_80 : i32
    %c0_i32_81 = arith.constant 0 : i32
    %175 = arith.cmpi slt, %173, %c0_i32_81 : i32
    %c0_i32_82 = arith.constant 0 : i32
    %176 = arith.cmpi slt, %172, %c0_i32_82 : i32
    %177 = arith.xori %175, %176 : i1
    %178 = arith.andi %177, %174 : i1
    %179 = arith.addi %173, %172 : i32
    %180 = arith.select %178, %179, %173 : i32
    %181 = tpu.dynamic_rotate %39 by %180 dim 1 : vector<2x256xf32>, i32 -> vector<2x256xf32>
    %c0_i32_83 = arith.constant 0 : i32
    %182 = arith.subi %c0_i32_83, %168 : i32
    %183 = vector.broadcast %182 : i32 to vector<1x256xi32>
    %184 = arith.cmpi sge, %28, %183 : vector<1x256xi32>
    %c15_i32_84 = arith.constant 15 : i32
    %185 = arith.subi %c15_i32_84, %168 : i32
    %186 = vector.broadcast %185 : i32 to vector<1x256xi32>
    %187 = arith.cmpi sle, %28, %186 : vector<1x256xi32>
    %188 = arith.andi %184, %187 : vector<1x256xi1>
    %cst_85 = arith.constant 0.000000e+00 : f32
    %189 = vector.shape_cast %188 : vector<1x256xi1> to vector<1x256xi1>
    %190 = vector.broadcast %189 : vector<1x256xi1> to vector<2x256xi1>
    %191 = vector.broadcast %cst_85 : f32 to vector<2x256xf32>
    %192 = arith.select %190, %181, %191 : vector<2x256xi1>, vector<2x256xf32>
    %c7_i32_86 = arith.constant 7 : i32
    %193 = arith.muli %c4_i32_73, %c7_i32_86 : i32
    %c0_i32_87 = arith.constant 0 : i32
    %194 = arith.addi %193, %c0_i32_87 : i32
    %c0_88 = arith.constant 0 : index
    %195 = arith.index_cast %194 : i32 to index
    %196 = vector.load %arg4[%c0_88, %195] : memref<2x49xf32, #tpu.memory_space<vmem>>, vector<2x1xf32>
    %197 = vector.broadcast %196 : vector<2x1xf32> to vector<2x256xf32>
    %198 = arith.mulf %197, %192 : vector<2x256xf32>
    %199 = arith.addf %167, %198 : vector<2x256xf32>
    %c5_i32 = arith.constant 5 : i32
    %c3_i32_89 = arith.constant 3 : i32
    %200 = arith.subi %c5_i32, %c3_i32_89 : i32
    %c0_i32_90 = arith.constant 0 : i32
    %201 = arith.subi %c0_i32_90, %200 : i32
    %c16_i32_91 = arith.constant 16 : i32
    %202 = arith.muli %201, %c16_i32_91 : i32
    %c256_i32_92 = arith.constant 256 : i32
    %c0_i32_93 = arith.constant 0 : i32
    %203 = arith.cmpi eq, %c256_i32_92, %c0_i32_93 : i32
    %c1_i32_94 = arith.constant 1 : i32
    %204 = arith.select %203, %c1_i32_94, %c256_i32_92 : i32
    %205 = arith.remsi %202, %204 : i32
    %c0_i32_95 = arith.constant 0 : i32
    %206 = arith.cmpi ne, %205, %c0_i32_95 : i32
    %c0_i32_96 = arith.constant 0 : i32
    %207 = arith.cmpi slt, %205, %c0_i32_96 : i32
    %c0_i32_97 = arith.constant 0 : i32
    %208 = arith.cmpi slt, %204, %c0_i32_97 : i32
    %209 = arith.xori %207, %208 : i1
    %210 = arith.andi %209, %206 : i1
    %211 = arith.addi %205, %204 : i32
    %212 = arith.select %210, %211, %205 : i32
    %213 = tpu.dynamic_rotate %39 by %212 dim 1 : vector<2x256xf32>, i32 -> vector<2x256xf32>
    %c0_i32_98 = arith.constant 0 : i32
    %214 = arith.subi %c0_i32_98, %200 : i32
    %215 = vector.broadcast %214 : i32 to vector<1x256xi32>
    %216 = arith.cmpi sge, %28, %215 : vector<1x256xi32>
    %c15_i32_99 = arith.constant 15 : i32
    %217 = arith.subi %c15_i32_99, %200 : i32
    %218 = vector.broadcast %217 : i32 to vector<1x256xi32>
    %219 = arith.cmpi sle, %28, %218 : vector<1x256xi32>
    %220 = arith.andi %216, %219 : vector<1x256xi1>
    %cst_100 = arith.constant 0.000000e+00 : f32
    %221 = vector.shape_cast %220 : vector<1x256xi1> to vector<1x256xi1>
    %222 = vector.broadcast %221 : vector<1x256xi1> to vector<2x256xi1>
    %223 = vector.broadcast %cst_100 : f32 to vector<2x256xf32>
    %224 = arith.select %222, %213, %223 : vector<2x256xi1>, vector<2x256xf32>
    %c7_i32_101 = arith.constant 7 : i32
    %225 = arith.muli %c5_i32, %c7_i32_101 : i32
    %c0_i32_102 = arith.constant 0 : i32
    %226 = arith.addi %225, %c0_i32_102 : i32
    %c0_103 = arith.constant 0 : index
    %227 = arith.index_cast %226 : i32 to index
    %228 = vector.load %arg4[%c0_103, %227] : memref<2x49xf32, #tpu.memory_space<vmem>>, vector<2x1xf32>
    %229 = vector.broadcast %228 : vector<2x1xf32> to vector<2x256xf32>
    %230 = arith.mulf %229, %224 : vector<2x256xf32>
    %231 = arith.addf %199, %230 : vector<2x256xf32>
    %c6_i32 = arith.constant 6 : i32
    %c3_i32_104 = arith.constant 3 : i32
    %232 = arith.subi %c6_i32, %c3_i32_104 : i32
    %c0_i32_105 = arith.constant 0 : i32
    %233 = arith.subi %c0_i32_105, %232 : i32
    %c16_i32_106 = arith.constant 16 : i32
    %234 = arith.muli %233, %c16_i32_106 : i32
    %c256_i32_107 = arith.constant 256 : i32
    %c0_i32_108 = arith.constant 0 : i32
    %235 = arith.cmpi eq, %c256_i32_107, %c0_i32_108 : i32
    %c1_i32_109 = arith.constant 1 : i32
    %236 = arith.select %235, %c1_i32_109, %c256_i32_107 : i32
    %237 = arith.remsi %234, %236 : i32
    %c0_i32_110 = arith.constant 0 : i32
    %238 = arith.cmpi ne, %237, %c0_i32_110 : i32
    %c0_i32_111 = arith.constant 0 : i32
    %239 = arith.cmpi slt, %237, %c0_i32_111 : i32
    %c0_i32_112 = arith.constant 0 : i32
    %240 = arith.cmpi slt, %236, %c0_i32_112 : i32
    %241 = arith.xori %239, %240 : i1
    %242 = arith.andi %241, %238 : i1
    %243 = arith.addi %237, %236 : i32
    %244 = arith.select %242, %243, %237 : i32
    %245 = tpu.dynamic_rotate %39 by %244 dim 1 : vector<2x256xf32>, i32 -> vector<2x256xf32>
    %c0_i32_113 = arith.constant 0 : i32
    %246 = arith.subi %c0_i32_113, %232 : i32
    %247 = vector.broadcast %246 : i32 to vector<1x256xi32>
    %248 = arith.cmpi sge, %28, %247 : vector<1x256xi32>
    %c15_i32_114 = arith.constant 15 : i32
    %249 = arith.subi %c15_i32_114, %232 : i32
    %250 = vector.broadcast %249 : i32 to vector<1x256xi32>
    %251 = arith.cmpi sle, %28, %250 : vector<1x256xi32>
    %252 = arith.andi %248, %251 : vector<1x256xi1>
    %cst_115 = arith.constant 0.000000e+00 : f32
    %253 = vector.shape_cast %252 : vector<1x256xi1> to vector<1x256xi1>
    %254 = vector.broadcast %253 : vector<1x256xi1> to vector<2x256xi1>
    %255 = vector.broadcast %cst_115 : f32 to vector<2x256xf32>
    %256 = arith.select %254, %245, %255 : vector<2x256xi1>, vector<2x256xf32>
    %c7_i32_116 = arith.constant 7 : i32
    %257 = arith.muli %c6_i32, %c7_i32_116 : i32
    %c0_i32_117 = arith.constant 0 : i32
    %258 = arith.addi %257, %c0_i32_117 : i32
    %c0_118 = arith.constant 0 : index
    %259 = arith.index_cast %258 : i32 to index
    %260 = vector.load %arg4[%c0_118, %259] : memref<2x49xf32, #tpu.memory_space<vmem>>, vector<2x1xf32>
    %261 = vector.broadcast %260 : vector<2x1xf32> to vector<2x256xf32>
    %262 = arith.mulf %261, %256 : vector<2x256xf32>
    %263 = arith.addf %231, %262 : vector<2x256xf32>
    %c7_i32_119 = arith.constant 7 : i32
    %c2_i32_120 = arith.constant 2 : i32
    %264 = tpu.dynamic_rotate %23 by %c2_i32_120 dim 1 : vector<2x256xf32>, i32 -> vector<2x256xf32>
    %c2_i32_121 = arith.constant 2 : i32
    %265 = vector.broadcast %c2_i32_121 : i32 to vector<1x256xi32>
    %266 = arith.cmpi sge, %26, %265 : vector<1x256xi32>
    %c17_i32 = arith.constant 17 : i32
    %267 = vector.broadcast %c17_i32 : i32 to vector<1x256xi32>
    %268 = arith.cmpi sle, %26, %267 : vector<1x256xi32>
    %269 = arith.andi %266, %268 : vector<1x256xi1>
    %cst_122 = arith.constant 0.000000e+00 : f32
    %270 = vector.shape_cast %269 : vector<1x256xi1> to vector<1x256xi1>
    %271 = vector.broadcast %270 : vector<1x256xi1> to vector<2x256xi1>
    %272 = vector.broadcast %cst_122 : f32 to vector<2x256xf32>
    %273 = arith.select %271, %264, %272 : vector<2x256xi1>, vector<2x256xf32>
    %c0_i32_123 = arith.constant 0 : i32
    %c3_i32_124 = arith.constant 3 : i32
    %274 = arith.subi %c0_i32_123, %c3_i32_124 : i32
    %c0_i32_125 = arith.constant 0 : i32
    %275 = arith.subi %c0_i32_125, %274 : i32
    %c16_i32_126 = arith.constant 16 : i32
    %276 = arith.muli %275, %c16_i32_126 : i32
    %c256_i32_127 = arith.constant 256 : i32
    %c0_i32_128 = arith.constant 0 : i32
    %277 = arith.cmpi eq, %c256_i32_127, %c0_i32_128 : i32
    %c1_i32_129 = arith.constant 1 : i32
    %278 = arith.select %277, %c1_i32_129, %c256_i32_127 : i32
    %279 = arith.remsi %276, %278 : i32
    %c0_i32_130 = arith.constant 0 : i32
    %280 = arith.cmpi ne, %279, %c0_i32_130 : i32
    %c0_i32_131 = arith.constant 0 : i32
    %281 = arith.cmpi slt, %279, %c0_i32_131 : i32
    %c0_i32_132 = arith.constant 0 : i32
    %282 = arith.cmpi slt, %278, %c0_i32_132 : i32
    %283 = arith.xori %281, %282 : i1
    %284 = arith.andi %283, %280 : i1
    %285 = arith.addi %279, %278 : i32
    %286 = arith.select %284, %285, %279 : i32
    %287 = tpu.dynamic_rotate %273 by %286 dim 1 : vector<2x256xf32>, i32 -> vector<2x256xf32>
    %c0_i32_133 = arith.constant 0 : i32
    %288 = arith.subi %c0_i32_133, %274 : i32
    %289 = vector.broadcast %288 : i32 to vector<1x256xi32>
    %290 = arith.cmpi sge, %28, %289 : vector<1x256xi32>
    %c15_i32_134 = arith.constant 15 : i32
    %291 = arith.subi %c15_i32_134, %274 : i32
    %292 = vector.broadcast %291 : i32 to vector<1x256xi32>
    %293 = arith.cmpi sle, %28, %292 : vector<1x256xi32>
    %294 = arith.andi %290, %293 : vector<1x256xi1>
    %cst_135 = arith.constant 0.000000e+00 : f32
    %295 = vector.shape_cast %294 : vector<1x256xi1> to vector<1x256xi1>
    %296 = vector.broadcast %295 : vector<1x256xi1> to vector<2x256xi1>
    %297 = vector.broadcast %cst_135 : f32 to vector<2x256xf32>
    %298 = arith.select %296, %287, %297 : vector<2x256xi1>, vector<2x256xf32>
    %c7_i32_136 = arith.constant 7 : i32
    %299 = arith.muli %c0_i32_123, %c7_i32_136 : i32
    %c1_i32_137 = arith.constant 1 : i32
    %300 = arith.addi %299, %c1_i32_137 : i32
    %c0_138 = arith.constant 0 : index
    %301 = arith.index_cast %300 : i32 to index
    %302 = vector.load %arg4[%c0_138, %301] : memref<2x49xf32, #tpu.memory_space<vmem>>, vector<2x1xf32>
    %303 = vector.broadcast %302 : vector<2x1xf32> to vector<2x256xf32>
    %304 = arith.mulf %303, %298 : vector<2x256xf32>
    %305 = arith.addf %263, %304 : vector<2x256xf32>
    %c1_i32_139 = arith.constant 1 : i32
    %c3_i32_140 = arith.constant 3 : i32
    %306 = arith.subi %c1_i32_139, %c3_i32_140 : i32
    %c0_i32_141 = arith.constant 0 : i32
    %307 = arith.subi %c0_i32_141, %306 : i32
    %c16_i32_142 = arith.constant 16 : i32
    %308 = arith.muli %307, %c16_i32_142 : i32
    %c256_i32_143 = arith.constant 256 : i32
    %c0_i32_144 = arith.constant 0 : i32
    %309 = arith.cmpi eq, %c256_i32_143, %c0_i32_144 : i32
    %c1_i32_145 = arith.constant 1 : i32
    %310 = arith.select %309, %c1_i32_145, %c256_i32_143 : i32
    %311 = arith.remsi %308, %310 : i32
    %c0_i32_146 = arith.constant 0 : i32
    %312 = arith.cmpi ne, %311, %c0_i32_146 : i32
    %c0_i32_147 = arith.constant 0 : i32
    %313 = arith.cmpi slt, %311, %c0_i32_147 : i32
    %c0_i32_148 = arith.constant 0 : i32
    %314 = arith.cmpi slt, %310, %c0_i32_148 : i32
    %315 = arith.xori %313, %314 : i1
    %316 = arith.andi %315, %312 : i1
    %317 = arith.addi %311, %310 : i32
    %318 = arith.select %316, %317, %311 : i32
    %319 = tpu.dynamic_rotate %273 by %318 dim 1 : vector<2x256xf32>, i32 -> vector<2x256xf32>
    %c0_i32_149 = arith.constant 0 : i32
    %320 = arith.subi %c0_i32_149, %306 : i32
    %321 = vector.broadcast %320 : i32 to vector<1x256xi32>
    %322 = arith.cmpi sge, %28, %321 : vector<1x256xi32>
    %c15_i32_150 = arith.constant 15 : i32
    %323 = arith.subi %c15_i32_150, %306 : i32
    %324 = vector.broadcast %323 : i32 to vector<1x256xi32>
    %325 = arith.cmpi sle, %28, %324 : vector<1x256xi32>
    %326 = arith.andi %322, %325 : vector<1x256xi1>
    %cst_151 = arith.constant 0.000000e+00 : f32
    %327 = vector.shape_cast %326 : vector<1x256xi1> to vector<1x256xi1>
    %328 = vector.broadcast %327 : vector<1x256xi1> to vector<2x256xi1>
    %329 = vector.broadcast %cst_151 : f32 to vector<2x256xf32>
    %330 = arith.select %328, %319, %329 : vector<2x256xi1>, vector<2x256xf32>
    %c7_i32_152 = arith.constant 7 : i32
    %331 = arith.muli %c1_i32_139, %c7_i32_152 : i32
    %c1_i32_153 = arith.constant 1 : i32
    %332 = arith.addi %331, %c1_i32_153 : i32
    %c0_154 = arith.constant 0 : index
    %333 = arith.index_cast %332 : i32 to index
    %334 = vector.load %arg4[%c0_154, %333] : memref<2x49xf32, #tpu.memory_space<vmem>>, vector<2x1xf32>
    %335 = vector.broadcast %334 : vector<2x1xf32> to vector<2x256xf32>
    %336 = arith.mulf %335, %330 : vector<2x256xf32>
    %337 = arith.addf %305, %336 : vector<2x256xf32>
    %c2_i32_155 = arith.constant 2 : i32
    %c3_i32_156 = arith.constant 3 : i32
    %338 = arith.subi %c2_i32_155, %c3_i32_156 : i32
    %c0_i32_157 = arith.constant 0 : i32
    %339 = arith.subi %c0_i32_157, %338 : i32
    %c16_i32_158 = arith.constant 16 : i32
    %340 = arith.muli %339, %c16_i32_158 : i32
    %c256_i32_159 = arith.constant 256 : i32
    %c0_i32_160 = arith.constant 0 : i32
    %341 = arith.cmpi eq, %c256_i32_159, %c0_i32_160 : i32
    %c1_i32_161 = arith.constant 1 : i32
    %342 = arith.select %341, %c1_i32_161, %c256_i32_159 : i32
    %343 = arith.remsi %340, %342 : i32
    %c0_i32_162 = arith.constant 0 : i32
    %344 = arith.cmpi ne, %343, %c0_i32_162 : i32
    %c0_i32_163 = arith.constant 0 : i32
    %345 = arith.cmpi slt, %343, %c0_i32_163 : i32
    %c0_i32_164 = arith.constant 0 : i32
    %346 = arith.cmpi slt, %342, %c0_i32_164 : i32
    %347 = arith.xori %345, %346 : i1
    %348 = arith.andi %347, %344 : i1
    %349 = arith.addi %343, %342 : i32
    %350 = arith.select %348, %349, %343 : i32
    %351 = tpu.dynamic_rotate %273 by %350 dim 1 : vector<2x256xf32>, i32 -> vector<2x256xf32>
    %c0_i32_165 = arith.constant 0 : i32
    %352 = arith.subi %c0_i32_165, %338 : i32
    %353 = vector.broadcast %352 : i32 to vector<1x256xi32>
    %354 = arith.cmpi sge, %28, %353 : vector<1x256xi32>
    %c15_i32_166 = arith.constant 15 : i32
    %355 = arith.subi %c15_i32_166, %338 : i32
    %356 = vector.broadcast %355 : i32 to vector<1x256xi32>
    %357 = arith.cmpi sle, %28, %356 : vector<1x256xi32>
    %358 = arith.andi %354, %357 : vector<1x256xi1>
    %cst_167 = arith.constant 0.000000e+00 : f32
    %359 = vector.shape_cast %358 : vector<1x256xi1> to vector<1x256xi1>
    %360 = vector.broadcast %359 : vector<1x256xi1> to vector<2x256xi1>
    %361 = vector.broadcast %cst_167 : f32 to vector<2x256xf32>
    %362 = arith.select %360, %351, %361 : vector<2x256xi1>, vector<2x256xf32>
    %c7_i32_168 = arith.constant 7 : i32
    %363 = arith.muli %c2_i32_155, %c7_i32_168 : i32
    %c1_i32_169 = arith.constant 1 : i32
    %364 = arith.addi %363, %c1_i32_169 : i32
    %c0_170 = arith.constant 0 : index
    %365 = arith.index_cast %364 : i32 to index
    %366 = vector.load %arg4[%c0_170, %365] : memref<2x49xf32, #tpu.memory_space<vmem>>, vector<2x1xf32>
    %367 = vector.broadcast %366 : vector<2x1xf32> to vector<2x256xf32>
    %368 = arith.mulf %367, %362 : vector<2x256xf32>
    %369 = arith.addf %337, %368 : vector<2x256xf32>
    %c3_i32_171 = arith.constant 3 : i32
    %c3_i32_172 = arith.constant 3 : i32
    %370 = arith.subi %c3_i32_171, %c3_i32_172 : i32
    %c0_i32_173 = arith.constant 0 : i32
    %371 = arith.subi %c0_i32_173, %370 : i32
    %c16_i32_174 = arith.constant 16 : i32
    %372 = arith.muli %371, %c16_i32_174 : i32
    %c256_i32_175 = arith.constant 256 : i32
    %c0_i32_176 = arith.constant 0 : i32
    %373 = arith.cmpi eq, %c256_i32_175, %c0_i32_176 : i32
    %c1_i32_177 = arith.constant 1 : i32
    %374 = arith.select %373, %c1_i32_177, %c256_i32_175 : i32
    %375 = arith.remsi %372, %374 : i32
    %c0_i32_178 = arith.constant 0 : i32
    %376 = arith.cmpi ne, %375, %c0_i32_178 : i32
    %c0_i32_179 = arith.constant 0 : i32
    %377 = arith.cmpi slt, %375, %c0_i32_179 : i32
    %c0_i32_180 = arith.constant 0 : i32
    %378 = arith.cmpi slt, %374, %c0_i32_180 : i32
    %379 = arith.xori %377, %378 : i1
    %380 = arith.andi %379, %376 : i1
    %381 = arith.addi %375, %374 : i32
    %382 = arith.select %380, %381, %375 : i32
    %383 = tpu.dynamic_rotate %273 by %382 dim 1 : vector<2x256xf32>, i32 -> vector<2x256xf32>
    %c0_i32_181 = arith.constant 0 : i32
    %384 = arith.subi %c0_i32_181, %370 : i32
    %385 = vector.broadcast %384 : i32 to vector<1x256xi32>
    %386 = arith.cmpi sge, %28, %385 : vector<1x256xi32>
    %c15_i32_182 = arith.constant 15 : i32
    %387 = arith.subi %c15_i32_182, %370 : i32
    %388 = vector.broadcast %387 : i32 to vector<1x256xi32>
    %389 = arith.cmpi sle, %28, %388 : vector<1x256xi32>
    %390 = arith.andi %386, %389 : vector<1x256xi1>
    %cst_183 = arith.constant 0.000000e+00 : f32
    %391 = vector.shape_cast %390 : vector<1x256xi1> to vector<1x256xi1>
    %392 = vector.broadcast %391 : vector<1x256xi1> to vector<2x256xi1>
    %393 = vector.broadcast %cst_183 : f32 to vector<2x256xf32>
    %394 = arith.select %392, %383, %393 : vector<2x256xi1>, vector<2x256xf32>
    %c7_i32_184 = arith.constant 7 : i32
    %395 = arith.muli %c3_i32_171, %c7_i32_184 : i32
    %c1_i32_185 = arith.constant 1 : i32
    %396 = arith.addi %395, %c1_i32_185 : i32
    %c0_186 = arith.constant 0 : index
    %397 = arith.index_cast %396 : i32 to index
    %398 = vector.load %arg4[%c0_186, %397] : memref<2x49xf32, #tpu.memory_space<vmem>>, vector<2x1xf32>
    %399 = vector.broadcast %398 : vector<2x1xf32> to vector<2x256xf32>
    %400 = arith.mulf %399, %394 : vector<2x256xf32>
    %401 = arith.addf %369, %400 : vector<2x256xf32>
    %c4_i32_187 = arith.constant 4 : i32
    %c3_i32_188 = arith.constant 3 : i32
    %402 = arith.subi %c4_i32_187, %c3_i32_188 : i32
    %c0_i32_189 = arith.constant 0 : i32
    %403 = arith.subi %c0_i32_189, %402 : i32
    %c16_i32_190 = arith.constant 16 : i32
    %404 = arith.muli %403, %c16_i32_190 : i32
    %c256_i32_191 = arith.constant 256 : i32
    %c0_i32_192 = arith.constant 0 : i32
    %405 = arith.cmpi eq, %c256_i32_191, %c0_i32_192 : i32
    %c1_i32_193 = arith.constant 1 : i32
    %406 = arith.select %405, %c1_i32_193, %c256_i32_191 : i32
    %407 = arith.remsi %404, %406 : i32
    %c0_i32_194 = arith.constant 0 : i32
    %408 = arith.cmpi ne, %407, %c0_i32_194 : i32
    %c0_i32_195 = arith.constant 0 : i32
    %409 = arith.cmpi slt, %407, %c0_i32_195 : i32
    %c0_i32_196 = arith.constant 0 : i32
    %410 = arith.cmpi slt, %406, %c0_i32_196 : i32
    %411 = arith.xori %409, %410 : i1
    %412 = arith.andi %411, %408 : i1
    %413 = arith.addi %407, %406 : i32
    %414 = arith.select %412, %413, %407 : i32
    %415 = tpu.dynamic_rotate %273 by %414 dim 1 : vector<2x256xf32>, i32 -> vector<2x256xf32>
    %c0_i32_197 = arith.constant 0 : i32
    %416 = arith.subi %c0_i32_197, %402 : i32
    %417 = vector.broadcast %416 : i32 to vector<1x256xi32>
    %418 = arith.cmpi sge, %28, %417 : vector<1x256xi32>
    %c15_i32_198 = arith.constant 15 : i32
    %419 = arith.subi %c15_i32_198, %402 : i32
    %420 = vector.broadcast %419 : i32 to vector<1x256xi32>
    %421 = arith.cmpi sle, %28, %420 : vector<1x256xi32>
    %422 = arith.andi %418, %421 : vector<1x256xi1>
    %cst_199 = arith.constant 0.000000e+00 : f32
    %423 = vector.shape_cast %422 : vector<1x256xi1> to vector<1x256xi1>
    %424 = vector.broadcast %423 : vector<1x256xi1> to vector<2x256xi1>
    %425 = vector.broadcast %cst_199 : f32 to vector<2x256xf32>
    %426 = arith.select %424, %415, %425 : vector<2x256xi1>, vector<2x256xf32>
    %c7_i32_200 = arith.constant 7 : i32
    %427 = arith.muli %c4_i32_187, %c7_i32_200 : i32
    %c1_i32_201 = arith.constant 1 : i32
    %428 = arith.addi %427, %c1_i32_201 : i32
    %c0_202 = arith.constant 0 : index
    %429 = arith.index_cast %428 : i32 to index
    %430 = vector.load %arg4[%c0_202, %429] : memref<2x49xf32, #tpu.memory_space<vmem>>, vector<2x1xf32>
    %431 = vector.broadcast %430 : vector<2x1xf32> to vector<2x256xf32>
    %432 = arith.mulf %431, %426 : vector<2x256xf32>
    %433 = arith.addf %401, %432 : vector<2x256xf32>
    %c5_i32_203 = arith.constant 5 : i32
    %c3_i32_204 = arith.constant 3 : i32
    %434 = arith.subi %c5_i32_203, %c3_i32_204 : i32
    %c0_i32_205 = arith.constant 0 : i32
    %435 = arith.subi %c0_i32_205, %434 : i32
    %c16_i32_206 = arith.constant 16 : i32
    %436 = arith.muli %435, %c16_i32_206 : i32
    %c256_i32_207 = arith.constant 256 : i32
    %c0_i32_208 = arith.constant 0 : i32
    %437 = arith.cmpi eq, %c256_i32_207, %c0_i32_208 : i32
    %c1_i32_209 = arith.constant 1 : i32
    %438 = arith.select %437, %c1_i32_209, %c256_i32_207 : i32
    %439 = arith.remsi %436, %438 : i32
    %c0_i32_210 = arith.constant 0 : i32
    %440 = arith.cmpi ne, %439, %c0_i32_210 : i32
    %c0_i32_211 = arith.constant 0 : i32
    %441 = arith.cmpi slt, %439, %c0_i32_211 : i32
    %c0_i32_212 = arith.constant 0 : i32
    %442 = arith.cmpi slt, %438, %c0_i32_212 : i32
    %443 = arith.xori %441, %442 : i1
    %444 = arith.andi %443, %440 : i1
    %445 = arith.addi %439, %438 : i32
    %446 = arith.select %444, %445, %439 : i32
    %447 = tpu.dynamic_rotate %273 by %446 dim 1 : vector<2x256xf32>, i32 -> vector<2x256xf32>
    %c0_i32_213 = arith.constant 0 : i32
    %448 = arith.subi %c0_i32_213, %434 : i32
    %449 = vector.broadcast %448 : i32 to vector<1x256xi32>
    %450 = arith.cmpi sge, %28, %449 : vector<1x256xi32>
    %c15_i32_214 = arith.constant 15 : i32
    %451 = arith.subi %c15_i32_214, %434 : i32
    %452 = vector.broadcast %451 : i32 to vector<1x256xi32>
    %453 = arith.cmpi sle, %28, %452 : vector<1x256xi32>
    %454 = arith.andi %450, %453 : vector<1x256xi1>
    %cst_215 = arith.constant 0.000000e+00 : f32
    %455 = vector.shape_cast %454 : vector<1x256xi1> to vector<1x256xi1>
    %456 = vector.broadcast %455 : vector<1x256xi1> to vector<2x256xi1>
    %457 = vector.broadcast %cst_215 : f32 to vector<2x256xf32>
    %458 = arith.select %456, %447, %457 : vector<2x256xi1>, vector<2x256xf32>
    %c7_i32_216 = arith.constant 7 : i32
    %459 = arith.muli %c5_i32_203, %c7_i32_216 : i32
    %c1_i32_217 = arith.constant 1 : i32
    %460 = arith.addi %459, %c1_i32_217 : i32
    %c0_218 = arith.constant 0 : index
    %461 = arith.index_cast %460 : i32 to index
    %462 = vector.load %arg4[%c0_218, %461] : memref<2x49xf32, #tpu.memory_space<vmem>>, vector<2x1xf32>
    %463 = vector.broadcast %462 : vector<2x1xf32> to vector<2x256xf32>
    %464 = arith.mulf %463, %458 : vector<2x256xf32>
    %465 = arith.addf %433, %464 : vector<2x256xf32>
    %c6_i32_219 = arith.constant 6 : i32
    %c3_i32_220 = arith.constant 3 : i32
    %466 = arith.subi %c6_i32_219, %c3_i32_220 : i32
    %c0_i32_221 = arith.constant 0 : i32
    %467 = arith.subi %c0_i32_221, %466 : i32
    %c16_i32_222 = arith.constant 16 : i32
    %468 = arith.muli %467, %c16_i32_222 : i32
    %c256_i32_223 = arith.constant 256 : i32
    %c0_i32_224 = arith.constant 0 : i32
    %469 = arith.cmpi eq, %c256_i32_223, %c0_i32_224 : i32
    %c1_i32_225 = arith.constant 1 : i32
    %470 = arith.select %469, %c1_i32_225, %c256_i32_223 : i32
    %471 = arith.remsi %468, %470 : i32
    %c0_i32_226 = arith.constant 0 : i32
    %472 = arith.cmpi ne, %471, %c0_i32_226 : i32
    %c0_i32_227 = arith.constant 0 : i32
    %473 = arith.cmpi slt, %471, %c0_i32_227 : i32
    %c0_i32_228 = arith.constant 0 : i32
    %474 = arith.cmpi slt, %470, %c0_i32_228 : i32
    %475 = arith.xori %473, %474 : i1
    %476 = arith.andi %475, %472 : i1
    %477 = arith.addi %471, %470 : i32
    %478 = arith.select %476, %477, %471 : i32
    %479 = tpu.dynamic_rotate %273 by %478 dim 1 : vector<2x256xf32>, i32 -> vector<2x256xf32>
    %c0_i32_229 = arith.constant 0 : i32
    %480 = arith.subi %c0_i32_229, %466 : i32
    %481 = vector.broadcast %480 : i32 to vector<1x256xi32>
    %482 = arith.cmpi sge, %28, %481 : vector<1x256xi32>
    %c15_i32_230 = arith.constant 15 : i32
    %483 = arith.subi %c15_i32_230, %466 : i32
    %484 = vector.broadcast %483 : i32 to vector<1x256xi32>
    %485 = arith.cmpi sle, %28, %484 : vector<1x256xi32>
    %486 = arith.andi %482, %485 : vector<1x256xi1>
    %cst_231 = arith.constant 0.000000e+00 : f32
    %487 = vector.shape_cast %486 : vector<1x256xi1> to vector<1x256xi1>
    %488 = vector.broadcast %487 : vector<1x256xi1> to vector<2x256xi1>
    %489 = vector.broadcast %cst_231 : f32 to vector<2x256xf32>
    %490 = arith.select %488, %479, %489 : vector<2x256xi1>, vector<2x256xf32>
    %c7_i32_232 = arith.constant 7 : i32
    %491 = arith.muli %c6_i32_219, %c7_i32_232 : i32
    %c1_i32_233 = arith.constant 1 : i32
    %492 = arith.addi %491, %c1_i32_233 : i32
    %c0_234 = arith.constant 0 : index
    %493 = arith.index_cast %492 : i32 to index
    %494 = vector.load %arg4[%c0_234, %493] : memref<2x49xf32, #tpu.memory_space<vmem>>, vector<2x1xf32>
    %495 = vector.broadcast %494 : vector<2x1xf32> to vector<2x256xf32>
    %496 = arith.mulf %495, %490 : vector<2x256xf32>
    %497 = arith.addf %465, %496 : vector<2x256xf32>
    %c7_i32_235 = arith.constant 7 : i32
    %c1_i32_236 = arith.constant 1 : i32
    %498 = tpu.dynamic_rotate %23 by %c1_i32_236 dim 1 : vector<2x256xf32>, i32 -> vector<2x256xf32>
    %c1_i32_237 = arith.constant 1 : i32
    %499 = vector.broadcast %c1_i32_237 : i32 to vector<1x256xi32>
    %500 = arith.cmpi sge, %26, %499 : vector<1x256xi32>
    %c16_i32_238 = arith.constant 16 : i32
    %501 = vector.broadcast %c16_i32_238 : i32 to vector<1x256xi32>
    %502 = arith.cmpi sle, %26, %501 : vector<1x256xi32>
    %503 = arith.andi %500, %502 : vector<1x256xi1>
    %cst_239 = arith.constant 0.000000e+00 : f32
    %504 = vector.shape_cast %503 : vector<1x256xi1> to vector<1x256xi1>
    %505 = vector.broadcast %504 : vector<1x256xi1> to vector<2x256xi1>
    %506 = vector.broadcast %cst_239 : f32 to vector<2x256xf32>
    %507 = arith.select %505, %498, %506 : vector<2x256xi1>, vector<2x256xf32>
    %c0_i32_240 = arith.constant 0 : i32
    %c3_i32_241 = arith.constant 3 : i32
    %508 = arith.subi %c0_i32_240, %c3_i32_241 : i32
    %c0_i32_242 = arith.constant 0 : i32
    %509 = arith.subi %c0_i32_242, %508 : i32
    %c16_i32_243 = arith.constant 16 : i32
    %510 = arith.muli %509, %c16_i32_243 : i32
    %c256_i32_244 = arith.constant 256 : i32
    %c0_i32_245 = arith.constant 0 : i32
    %511 = arith.cmpi eq, %c256_i32_244, %c0_i32_245 : i32
    %c1_i32_246 = arith.constant 1 : i32
    %512 = arith.select %511, %c1_i32_246, %c256_i32_244 : i32
    %513 = arith.remsi %510, %512 : i32
    %c0_i32_247 = arith.constant 0 : i32
    %514 = arith.cmpi ne, %513, %c0_i32_247 : i32
    %c0_i32_248 = arith.constant 0 : i32
    %515 = arith.cmpi slt, %513, %c0_i32_248 : i32
    %c0_i32_249 = arith.constant 0 : i32
    %516 = arith.cmpi slt, %512, %c0_i32_249 : i32
    %517 = arith.xori %515, %516 : i1
    %518 = arith.andi %517, %514 : i1
    %519 = arith.addi %513, %512 : i32
    %520 = arith.select %518, %519, %513 : i32
    %521 = tpu.dynamic_rotate %507 by %520 dim 1 : vector<2x256xf32>, i32 -> vector<2x256xf32>
    %c0_i32_250 = arith.constant 0 : i32
    %522 = arith.subi %c0_i32_250, %508 : i32
    %523 = vector.broadcast %522 : i32 to vector<1x256xi32>
    %524 = arith.cmpi sge, %28, %523 : vector<1x256xi32>
    %c15_i32_251 = arith.constant 15 : i32
    %525 = arith.subi %c15_i32_251, %508 : i32
    %526 = vector.broadcast %525 : i32 to vector<1x256xi32>
    %527 = arith.cmpi sle, %28, %526 : vector<1x256xi32>
    %528 = arith.andi %524, %527 : vector<1x256xi1>
    %cst_252 = arith.constant 0.000000e+00 : f32
    %529 = vector.shape_cast %528 : vector<1x256xi1> to vector<1x256xi1>
    %530 = vector.broadcast %529 : vector<1x256xi1> to vector<2x256xi1>
    %531 = vector.broadcast %cst_252 : f32 to vector<2x256xf32>
    %532 = arith.select %530, %521, %531 : vector<2x256xi1>, vector<2x256xf32>
    %c7_i32_253 = arith.constant 7 : i32
    %533 = arith.muli %c0_i32_240, %c7_i32_253 : i32
    %c2_i32_254 = arith.constant 2 : i32
    %534 = arith.addi %533, %c2_i32_254 : i32
    %c0_255 = arith.constant 0 : index
    %535 = arith.index_cast %534 : i32 to index
    %536 = vector.load %arg4[%c0_255, %535] : memref<2x49xf32, #tpu.memory_space<vmem>>, vector<2x1xf32>
    %537 = vector.broadcast %536 : vector<2x1xf32> to vector<2x256xf32>
    %538 = arith.mulf %537, %532 : vector<2x256xf32>
    %539 = arith.addf %497, %538 : vector<2x256xf32>
    %c1_i32_256 = arith.constant 1 : i32
    %c3_i32_257 = arith.constant 3 : i32
    %540 = arith.subi %c1_i32_256, %c3_i32_257 : i32
    %c0_i32_258 = arith.constant 0 : i32
    %541 = arith.subi %c0_i32_258, %540 : i32
    %c16_i32_259 = arith.constant 16 : i32
    %542 = arith.muli %541, %c16_i32_259 : i32
    %c256_i32_260 = arith.constant 256 : i32
    %c0_i32_261 = arith.constant 0 : i32
    %543 = arith.cmpi eq, %c256_i32_260, %c0_i32_261 : i32
    %c1_i32_262 = arith.constant 1 : i32
    %544 = arith.select %543, %c1_i32_262, %c256_i32_260 : i32
    %545 = arith.remsi %542, %544 : i32
    %c0_i32_263 = arith.constant 0 : i32
    %546 = arith.cmpi ne, %545, %c0_i32_263 : i32
    %c0_i32_264 = arith.constant 0 : i32
    %547 = arith.cmpi slt, %545, %c0_i32_264 : i32
    %c0_i32_265 = arith.constant 0 : i32
    %548 = arith.cmpi slt, %544, %c0_i32_265 : i32
    %549 = arith.xori %547, %548 : i1
    %550 = arith.andi %549, %546 : i1
    %551 = arith.addi %545, %544 : i32
    %552 = arith.select %550, %551, %545 : i32
    %553 = tpu.dynamic_rotate %507 by %552 dim 1 : vector<2x256xf32>, i32 -> vector<2x256xf32>
    %c0_i32_266 = arith.constant 0 : i32
    %554 = arith.subi %c0_i32_266, %540 : i32
    %555 = vector.broadcast %554 : i32 to vector<1x256xi32>
    %556 = arith.cmpi sge, %28, %555 : vector<1x256xi32>
    %c15_i32_267 = arith.constant 15 : i32
    %557 = arith.subi %c15_i32_267, %540 : i32
    %558 = vector.broadcast %557 : i32 to vector<1x256xi32>
    %559 = arith.cmpi sle, %28, %558 : vector<1x256xi32>
    %560 = arith.andi %556, %559 : vector<1x256xi1>
    %cst_268 = arith.constant 0.000000e+00 : f32
    %561 = vector.shape_cast %560 : vector<1x256xi1> to vector<1x256xi1>
    %562 = vector.broadcast %561 : vector<1x256xi1> to vector<2x256xi1>
    %563 = vector.broadcast %cst_268 : f32 to vector<2x256xf32>
    %564 = arith.select %562, %553, %563 : vector<2x256xi1>, vector<2x256xf32>
    %c7_i32_269 = arith.constant 7 : i32
    %565 = arith.muli %c1_i32_256, %c7_i32_269 : i32
    %c2_i32_270 = arith.constant 2 : i32
    %566 = arith.addi %565, %c2_i32_270 : i32
    %c0_271 = arith.constant 0 : index
    %567 = arith.index_cast %566 : i32 to index
    %568 = vector.load %arg4[%c0_271, %567] : memref<2x49xf32, #tpu.memory_space<vmem>>, vector<2x1xf32>
    %569 = vector.broadcast %568 : vector<2x1xf32> to vector<2x256xf32>
    %570 = arith.mulf %569, %564 : vector<2x256xf32>
    %571 = arith.addf %539, %570 : vector<2x256xf32>
    %c2_i32_272 = arith.constant 2 : i32
    %c3_i32_273 = arith.constant 3 : i32
    %572 = arith.subi %c2_i32_272, %c3_i32_273 : i32
    %c0_i32_274 = arith.constant 0 : i32
    %573 = arith.subi %c0_i32_274, %572 : i32
    %c16_i32_275 = arith.constant 16 : i32
    %574 = arith.muli %573, %c16_i32_275 : i32
    %c256_i32_276 = arith.constant 256 : i32
    %c0_i32_277 = arith.constant 0 : i32
    %575 = arith.cmpi eq, %c256_i32_276, %c0_i32_277 : i32
    %c1_i32_278 = arith.constant 1 : i32
    %576 = arith.select %575, %c1_i32_278, %c256_i32_276 : i32
    %577 = arith.remsi %574, %576 : i32
    %c0_i32_279 = arith.constant 0 : i32
    %578 = arith.cmpi ne, %577, %c0_i32_279 : i32
    %c0_i32_280 = arith.constant 0 : i32
    %579 = arith.cmpi slt, %577, %c0_i32_280 : i32
    %c0_i32_281 = arith.constant 0 : i32
    %580 = arith.cmpi slt, %576, %c0_i32_281 : i32
    %581 = arith.xori %579, %580 : i1
    %582 = arith.andi %581, %578 : i1
    %583 = arith.addi %577, %576 : i32
    %584 = arith.select %582, %583, %577 : i32
    %585 = tpu.dynamic_rotate %507 by %584 dim 1 : vector<2x256xf32>, i32 -> vector<2x256xf32>
    %c0_i32_282 = arith.constant 0 : i32
    %586 = arith.subi %c0_i32_282, %572 : i32
    %587 = vector.broadcast %586 : i32 to vector<1x256xi32>
    %588 = arith.cmpi sge, %28, %587 : vector<1x256xi32>
    %c15_i32_283 = arith.constant 15 : i32
    %589 = arith.subi %c15_i32_283, %572 : i32
    %590 = vector.broadcast %589 : i32 to vector<1x256xi32>
    %591 = arith.cmpi sle, %28, %590 : vector<1x256xi32>
    %592 = arith.andi %588, %591 : vector<1x256xi1>
    %cst_284 = arith.constant 0.000000e+00 : f32
    %593 = vector.shape_cast %592 : vector<1x256xi1> to vector<1x256xi1>
    %594 = vector.broadcast %593 : vector<1x256xi1> to vector<2x256xi1>
    %595 = vector.broadcast %cst_284 : f32 to vector<2x256xf32>
    %596 = arith.select %594, %585, %595 : vector<2x256xi1>, vector<2x256xf32>
    %c7_i32_285 = arith.constant 7 : i32
    %597 = arith.muli %c2_i32_272, %c7_i32_285 : i32
    %c2_i32_286 = arith.constant 2 : i32
    %598 = arith.addi %597, %c2_i32_286 : i32
    %c0_287 = arith.constant 0 : index
    %599 = arith.index_cast %598 : i32 to index
    %600 = vector.load %arg4[%c0_287, %599] : memref<2x49xf32, #tpu.memory_space<vmem>>, vector<2x1xf32>
    %601 = vector.broadcast %600 : vector<2x1xf32> to vector<2x256xf32>
    %602 = arith.mulf %601, %596 : vector<2x256xf32>
    %603 = arith.addf %571, %602 : vector<2x256xf32>
    %c3_i32_288 = arith.constant 3 : i32
    %c3_i32_289 = arith.constant 3 : i32
    %604 = arith.subi %c3_i32_288, %c3_i32_289 : i32
    %c0_i32_290 = arith.constant 0 : i32
    %605 = arith.subi %c0_i32_290, %604 : i32
    %c16_i32_291 = arith.constant 16 : i32
    %606 = arith.muli %605, %c16_i32_291 : i32
    %c256_i32_292 = arith.constant 256 : i32
    %c0_i32_293 = arith.constant 0 : i32
    %607 = arith.cmpi eq, %c256_i32_292, %c0_i32_293 : i32
    %c1_i32_294 = arith.constant 1 : i32
    %608 = arith.select %607, %c1_i32_294, %c256_i32_292 : i32
    %609 = arith.remsi %606, %608 : i32
    %c0_i32_295 = arith.constant 0 : i32
    %610 = arith.cmpi ne, %609, %c0_i32_295 : i32
    %c0_i32_296 = arith.constant 0 : i32
    %611 = arith.cmpi slt, %609, %c0_i32_296 : i32
    %c0_i32_297 = arith.constant 0 : i32
    %612 = arith.cmpi slt, %608, %c0_i32_297 : i32
    %613 = arith.xori %611, %612 : i1
    %614 = arith.andi %613, %610 : i1
    %615 = arith.addi %609, %608 : i32
    %616 = arith.select %614, %615, %609 : i32
    %617 = tpu.dynamic_rotate %507 by %616 dim 1 : vector<2x256xf32>, i32 -> vector<2x256xf32>
    %c0_i32_298 = arith.constant 0 : i32
    %618 = arith.subi %c0_i32_298, %604 : i32
    %619 = vector.broadcast %618 : i32 to vector<1x256xi32>
    %620 = arith.cmpi sge, %28, %619 : vector<1x256xi32>
    %c15_i32_299 = arith.constant 15 : i32
    %621 = arith.subi %c15_i32_299, %604 : i32
    %622 = vector.broadcast %621 : i32 to vector<1x256xi32>
    %623 = arith.cmpi sle, %28, %622 : vector<1x256xi32>
    %624 = arith.andi %620, %623 : vector<1x256xi1>
    %cst_300 = arith.constant 0.000000e+00 : f32
    %625 = vector.shape_cast %624 : vector<1x256xi1> to vector<1x256xi1>
    %626 = vector.broadcast %625 : vector<1x256xi1> to vector<2x256xi1>
    %627 = vector.broadcast %cst_300 : f32 to vector<2x256xf32>
    %628 = arith.select %626, %617, %627 : vector<2x256xi1>, vector<2x256xf32>
    %c7_i32_301 = arith.constant 7 : i32
    %629 = arith.muli %c3_i32_288, %c7_i32_301 : i32
    %c2_i32_302 = arith.constant 2 : i32
    %630 = arith.addi %629, %c2_i32_302 : i32
    %c0_303 = arith.constant 0 : index
    %631 = arith.index_cast %630 : i32 to index
    %632 = vector.load %arg4[%c0_303, %631] : memref<2x49xf32, #tpu.memory_space<vmem>>, vector<2x1xf32>
    %633 = vector.broadcast %632 : vector<2x1xf32> to vector<2x256xf32>
    %634 = arith.mulf %633, %628 : vector<2x256xf32>
    %635 = arith.addf %603, %634 : vector<2x256xf32>
    %c4_i32_304 = arith.constant 4 : i32
    %c3_i32_305 = arith.constant 3 : i32
    %636 = arith.subi %c4_i32_304, %c3_i32_305 : i32
    %c0_i32_306 = arith.constant 0 : i32
    %637 = arith.subi %c0_i32_306, %636 : i32
    %c16_i32_307 = arith.constant 16 : i32
    %638 = arith.muli %637, %c16_i32_307 : i32
    %c256_i32_308 = arith.constant 256 : i32
    %c0_i32_309 = arith.constant 0 : i32
    %639 = arith.cmpi eq, %c256_i32_308, %c0_i32_309 : i32
    %c1_i32_310 = arith.constant 1 : i32
    %640 = arith.select %639, %c1_i32_310, %c256_i32_308 : i32
    %641 = arith.remsi %638, %640 : i32
    %c0_i32_311 = arith.constant 0 : i32
    %642 = arith.cmpi ne, %641, %c0_i32_311 : i32
    %c0_i32_312 = arith.constant 0 : i32
    %643 = arith.cmpi slt, %641, %c0_i32_312 : i32
    %c0_i32_313 = arith.constant 0 : i32
    %644 = arith.cmpi slt, %640, %c0_i32_313 : i32
    %645 = arith.xori %643, %644 : i1
    %646 = arith.andi %645, %642 : i1
    %647 = arith.addi %641, %640 : i32
    %648 = arith.select %646, %647, %641 : i32
    %649 = tpu.dynamic_rotate %507 by %648 dim 1 : vector<2x256xf32>, i32 -> vector<2x256xf32>
    %c0_i32_314 = arith.constant 0 : i32
    %650 = arith.subi %c0_i32_314, %636 : i32
    %651 = vector.broadcast %650 : i32 to vector<1x256xi32>
    %652 = arith.cmpi sge, %28, %651 : vector<1x256xi32>
    %c15_i32_315 = arith.constant 15 : i32
    %653 = arith.subi %c15_i32_315, %636 : i32
    %654 = vector.broadcast %653 : i32 to vector<1x256xi32>
    %655 = arith.cmpi sle, %28, %654 : vector<1x256xi32>
    %656 = arith.andi %652, %655 : vector<1x256xi1>
    %cst_316 = arith.constant 0.000000e+00 : f32
    %657 = vector.shape_cast %656 : vector<1x256xi1> to vector<1x256xi1>
    %658 = vector.broadcast %657 : vector<1x256xi1> to vector<2x256xi1>
    %659 = vector.broadcast %cst_316 : f32 to vector<2x256xf32>
    %660 = arith.select %658, %649, %659 : vector<2x256xi1>, vector<2x256xf32>
    %c7_i32_317 = arith.constant 7 : i32
    %661 = arith.muli %c4_i32_304, %c7_i32_317 : i32
    %c2_i32_318 = arith.constant 2 : i32
    %662 = arith.addi %661, %c2_i32_318 : i32
    %c0_319 = arith.constant 0 : index
    %663 = arith.index_cast %662 : i32 to index
    %664 = vector.load %arg4[%c0_319, %663] : memref<2x49xf32, #tpu.memory_space<vmem>>, vector<2x1xf32>
    %665 = vector.broadcast %664 : vector<2x1xf32> to vector<2x256xf32>
    %666 = arith.mulf %665, %660 : vector<2x256xf32>
    %667 = arith.addf %635, %666 : vector<2x256xf32>
    %c5_i32_320 = arith.constant 5 : i32
    %c3_i32_321 = arith.constant 3 : i32
    %668 = arith.subi %c5_i32_320, %c3_i32_321 : i32
    %c0_i32_322 = arith.constant 0 : i32
    %669 = arith.subi %c0_i32_322, %668 : i32
    %c16_i32_323 = arith.constant 16 : i32
    %670 = arith.muli %669, %c16_i32_323 : i32
    %c256_i32_324 = arith.constant 256 : i32
    %c0_i32_325 = arith.constant 0 : i32
    %671 = arith.cmpi eq, %c256_i32_324, %c0_i32_325 : i32
    %c1_i32_326 = arith.constant 1 : i32
    %672 = arith.select %671, %c1_i32_326, %c256_i32_324 : i32
    %673 = arith.remsi %670, %672 : i32
    %c0_i32_327 = arith.constant 0 : i32
    %674 = arith.cmpi ne, %673, %c0_i32_327 : i32
    %c0_i32_328 = arith.constant 0 : i32
    %675 = arith.cmpi slt, %673, %c0_i32_328 : i32
    %c0_i32_329 = arith.constant 0 : i32
    %676 = arith.cmpi slt, %672, %c0_i32_329 : i32
    %677 = arith.xori %675, %676 : i1
    %678 = arith.andi %677, %674 : i1
    %679 = arith.addi %673, %672 : i32
    %680 = arith.select %678, %679, %673 : i32
    %681 = tpu.dynamic_rotate %507 by %680 dim 1 : vector<2x256xf32>, i32 -> vector<2x256xf32>
    %c0_i32_330 = arith.constant 0 : i32
    %682 = arith.subi %c0_i32_330, %668 : i32
    %683 = vector.broadcast %682 : i32 to vector<1x256xi32>
    %684 = arith.cmpi sge, %28, %683 : vector<1x256xi32>
    %c15_i32_331 = arith.constant 15 : i32
    %685 = arith.subi %c15_i32_331, %668 : i32
    %686 = vector.broadcast %685 : i32 to vector<1x256xi32>
    %687 = arith.cmpi sle, %28, %686 : vector<1x256xi32>
    %688 = arith.andi %684, %687 : vector<1x256xi1>
    %cst_332 = arith.constant 0.000000e+00 : f32
    %689 = vector.shape_cast %688 : vector<1x256xi1> to vector<1x256xi1>
    %690 = vector.broadcast %689 : vector<1x256xi1> to vector<2x256xi1>
    %691 = vector.broadcast %cst_332 : f32 to vector<2x256xf32>
    %692 = arith.select %690, %681, %691 : vector<2x256xi1>, vector<2x256xf32>
    %c7_i32_333 = arith.constant 7 : i32
    %693 = arith.muli %c5_i32_320, %c7_i32_333 : i32
    %c2_i32_334 = arith.constant 2 : i32
    %694 = arith.addi %693, %c2_i32_334 : i32
    %c0_335 = arith.constant 0 : index
    %695 = arith.index_cast %694 : i32 to index
    %696 = vector.load %arg4[%c0_335, %695] : memref<2x49xf32, #tpu.memory_space<vmem>>, vector<2x1xf32>
    %697 = vector.broadcast %696 : vector<2x1xf32> to vector<2x256xf32>
    %698 = arith.mulf %697, %692 : vector<2x256xf32>
    %699 = arith.addf %667, %698 : vector<2x256xf32>
    %c6_i32_336 = arith.constant 6 : i32
    %c3_i32_337 = arith.constant 3 : i32
    %700 = arith.subi %c6_i32_336, %c3_i32_337 : i32
    %c0_i32_338 = arith.constant 0 : i32
    %701 = arith.subi %c0_i32_338, %700 : i32
    %c16_i32_339 = arith.constant 16 : i32
    %702 = arith.muli %701, %c16_i32_339 : i32
    %c256_i32_340 = arith.constant 256 : i32
    %c0_i32_341 = arith.constant 0 : i32
    %703 = arith.cmpi eq, %c256_i32_340, %c0_i32_341 : i32
    %c1_i32_342 = arith.constant 1 : i32
    %704 = arith.select %703, %c1_i32_342, %c256_i32_340 : i32
    %705 = arith.remsi %702, %704 : i32
    %c0_i32_343 = arith.constant 0 : i32
    %706 = arith.cmpi ne, %705, %c0_i32_343 : i32
    %c0_i32_344 = arith.constant 0 : i32
    %707 = arith.cmpi slt, %705, %c0_i32_344 : i32
    %c0_i32_345 = arith.constant 0 : i32
    %708 = arith.cmpi slt, %704, %c0_i32_345 : i32
    %709 = arith.xori %707, %708 : i1
    %710 = arith.andi %709, %706 : i1
    %711 = arith.addi %705, %704 : i32
    %712 = arith.select %710, %711, %705 : i32
    %713 = tpu.dynamic_rotate %507 by %712 dim 1 : vector<2x256xf32>, i32 -> vector<2x256xf32>
    %c0_i32_346 = arith.constant 0 : i32
    %714 = arith.subi %c0_i32_346, %700 : i32
    %715 = vector.broadcast %714 : i32 to vector<1x256xi32>
    %716 = arith.cmpi sge, %28, %715 : vector<1x256xi32>
    %c15_i32_347 = arith.constant 15 : i32
    %717 = arith.subi %c15_i32_347, %700 : i32
    %718 = vector.broadcast %717 : i32 to vector<1x256xi32>
    %719 = arith.cmpi sle, %28, %718 : vector<1x256xi32>
    %720 = arith.andi %716, %719 : vector<1x256xi1>
    %cst_348 = arith.constant 0.000000e+00 : f32
    %721 = vector.shape_cast %720 : vector<1x256xi1> to vector<1x256xi1>
    %722 = vector.broadcast %721 : vector<1x256xi1> to vector<2x256xi1>
    %723 = vector.broadcast %cst_348 : f32 to vector<2x256xf32>
    %724 = arith.select %722, %713, %723 : vector<2x256xi1>, vector<2x256xf32>
    %c7_i32_349 = arith.constant 7 : i32
    %725 = arith.muli %c6_i32_336, %c7_i32_349 : i32
    %c2_i32_350 = arith.constant 2 : i32
    %726 = arith.addi %725, %c2_i32_350 : i32
    %c0_351 = arith.constant 0 : index
    %727 = arith.index_cast %726 : i32 to index
    %728 = vector.load %arg4[%c0_351, %727] : memref<2x49xf32, #tpu.memory_space<vmem>>, vector<2x1xf32>
    %729 = vector.broadcast %728 : vector<2x1xf32> to vector<2x256xf32>
    %730 = arith.mulf %729, %724 : vector<2x256xf32>
    %731 = arith.addf %699, %730 : vector<2x256xf32>
    %c7_i32_352 = arith.constant 7 : i32
    %c0_i32_353 = arith.constant 0 : i32
    %732 = tpu.dynamic_rotate %23 by %c0_i32_353 dim 1 : vector<2x256xf32>, i32 -> vector<2x256xf32>
    %c0_i32_354 = arith.constant 0 : i32
    %733 = vector.broadcast %c0_i32_354 : i32 to vector<1x256xi32>
    %734 = arith.cmpi sge, %26, %733 : vector<1x256xi32>
    %c15_i32_355 = arith.constant 15 : i32
    %735 = vector.broadcast %c15_i32_355 : i32 to vector<1x256xi32>
    %736 = arith.cmpi sle, %26, %735 : vector<1x256xi32>
    %737 = arith.andi %734, %736 : vector<1x256xi1>
    %cst_356 = arith.constant 0.000000e+00 : f32
    %738 = vector.shape_cast %737 : vector<1x256xi1> to vector<1x256xi1>
    %739 = vector.broadcast %738 : vector<1x256xi1> to vector<2x256xi1>
    %740 = vector.broadcast %cst_356 : f32 to vector<2x256xf32>
    %741 = arith.select %739, %732, %740 : vector<2x256xi1>, vector<2x256xf32>
    %c0_i32_357 = arith.constant 0 : i32
    %c3_i32_358 = arith.constant 3 : i32
    %742 = arith.subi %c0_i32_357, %c3_i32_358 : i32
    %c0_i32_359 = arith.constant 0 : i32
    %743 = arith.subi %c0_i32_359, %742 : i32
    %c16_i32_360 = arith.constant 16 : i32
    %744 = arith.muli %743, %c16_i32_360 : i32
    %c256_i32_361 = arith.constant 256 : i32
    %c0_i32_362 = arith.constant 0 : i32
    %745 = arith.cmpi eq, %c256_i32_361, %c0_i32_362 : i32
    %c1_i32_363 = arith.constant 1 : i32
    %746 = arith.select %745, %c1_i32_363, %c256_i32_361 : i32
    %747 = arith.remsi %744, %746 : i32
    %c0_i32_364 = arith.constant 0 : i32
    %748 = arith.cmpi ne, %747, %c0_i32_364 : i32
    %c0_i32_365 = arith.constant 0 : i32
    %749 = arith.cmpi slt, %747, %c0_i32_365 : i32
    %c0_i32_366 = arith.constant 0 : i32
    %750 = arith.cmpi slt, %746, %c0_i32_366 : i32
    %751 = arith.xori %749, %750 : i1
    %752 = arith.andi %751, %748 : i1
    %753 = arith.addi %747, %746 : i32
    %754 = arith.select %752, %753, %747 : i32
    %755 = tpu.dynamic_rotate %741 by %754 dim 1 : vector<2x256xf32>, i32 -> vector<2x256xf32>
    %c0_i32_367 = arith.constant 0 : i32
    %756 = arith.subi %c0_i32_367, %742 : i32
    %757 = vector.broadcast %756 : i32 to vector<1x256xi32>
    %758 = arith.cmpi sge, %28, %757 : vector<1x256xi32>
    %c15_i32_368 = arith.constant 15 : i32
    %759 = arith.subi %c15_i32_368, %742 : i32
    %760 = vector.broadcast %759 : i32 to vector<1x256xi32>
    %761 = arith.cmpi sle, %28, %760 : vector<1x256xi32>
    %762 = arith.andi %758, %761 : vector<1x256xi1>
    %cst_369 = arith.constant 0.000000e+00 : f32
    %763 = vector.shape_cast %762 : vector<1x256xi1> to vector<1x256xi1>
    %764 = vector.broadcast %763 : vector<1x256xi1> to vector<2x256xi1>
    %765 = vector.broadcast %cst_369 : f32 to vector<2x256xf32>
    %766 = arith.select %764, %755, %765 : vector<2x256xi1>, vector<2x256xf32>
    %c7_i32_370 = arith.constant 7 : i32
    %767 = arith.muli %c0_i32_357, %c7_i32_370 : i32
    %c3_i32_371 = arith.constant 3 : i32
    %768 = arith.addi %767, %c3_i32_371 : i32
    %c0_372 = arith.constant 0 : index
    %769 = arith.index_cast %768 : i32 to index
    %770 = vector.load %arg4[%c0_372, %769] : memref<2x49xf32, #tpu.memory_space<vmem>>, vector<2x1xf32>
    %771 = vector.broadcast %770 : vector<2x1xf32> to vector<2x256xf32>
    %772 = arith.mulf %771, %766 : vector<2x256xf32>
    %773 = arith.addf %731, %772 : vector<2x256xf32>
    %c1_i32_373 = arith.constant 1 : i32
    %c3_i32_374 = arith.constant 3 : i32
    %774 = arith.subi %c1_i32_373, %c3_i32_374 : i32
    %c0_i32_375 = arith.constant 0 : i32
    %775 = arith.subi %c0_i32_375, %774 : i32
    %c16_i32_376 = arith.constant 16 : i32
    %776 = arith.muli %775, %c16_i32_376 : i32
    %c256_i32_377 = arith.constant 256 : i32
    %c0_i32_378 = arith.constant 0 : i32
    %777 = arith.cmpi eq, %c256_i32_377, %c0_i32_378 : i32
    %c1_i32_379 = arith.constant 1 : i32
    %778 = arith.select %777, %c1_i32_379, %c256_i32_377 : i32
    %779 = arith.remsi %776, %778 : i32
    %c0_i32_380 = arith.constant 0 : i32
    %780 = arith.cmpi ne, %779, %c0_i32_380 : i32
    %c0_i32_381 = arith.constant 0 : i32
    %781 = arith.cmpi slt, %779, %c0_i32_381 : i32
    %c0_i32_382 = arith.constant 0 : i32
    %782 = arith.cmpi slt, %778, %c0_i32_382 : i32
    %783 = arith.xori %781, %782 : i1
    %784 = arith.andi %783, %780 : i1
    %785 = arith.addi %779, %778 : i32
    %786 = arith.select %784, %785, %779 : i32
    %787 = tpu.dynamic_rotate %741 by %786 dim 1 : vector<2x256xf32>, i32 -> vector<2x256xf32>
    %c0_i32_383 = arith.constant 0 : i32
    %788 = arith.subi %c0_i32_383, %774 : i32
    %789 = vector.broadcast %788 : i32 to vector<1x256xi32>
    %790 = arith.cmpi sge, %28, %789 : vector<1x256xi32>
    %c15_i32_384 = arith.constant 15 : i32
    %791 = arith.subi %c15_i32_384, %774 : i32
    %792 = vector.broadcast %791 : i32 to vector<1x256xi32>
    %793 = arith.cmpi sle, %28, %792 : vector<1x256xi32>
    %794 = arith.andi %790, %793 : vector<1x256xi1>
    %cst_385 = arith.constant 0.000000e+00 : f32
    %795 = vector.shape_cast %794 : vector<1x256xi1> to vector<1x256xi1>
    %796 = vector.broadcast %795 : vector<1x256xi1> to vector<2x256xi1>
    %797 = vector.broadcast %cst_385 : f32 to vector<2x256xf32>
    %798 = arith.select %796, %787, %797 : vector<2x256xi1>, vector<2x256xf32>
    %c7_i32_386 = arith.constant 7 : i32
    %799 = arith.muli %c1_i32_373, %c7_i32_386 : i32
    %c3_i32_387 = arith.constant 3 : i32
    %800 = arith.addi %799, %c3_i32_387 : i32
    %c0_388 = arith.constant 0 : index
    %801 = arith.index_cast %800 : i32 to index
    %802 = vector.load %arg4[%c0_388, %801] : memref<2x49xf32, #tpu.memory_space<vmem>>, vector<2x1xf32>
    %803 = vector.broadcast %802 : vector<2x1xf32> to vector<2x256xf32>
    %804 = arith.mulf %803, %798 : vector<2x256xf32>
    %805 = arith.addf %773, %804 : vector<2x256xf32>
    %c2_i32_389 = arith.constant 2 : i32
    %c3_i32_390 = arith.constant 3 : i32
    %806 = arith.subi %c2_i32_389, %c3_i32_390 : i32
    %c0_i32_391 = arith.constant 0 : i32
    %807 = arith.subi %c0_i32_391, %806 : i32
    %c16_i32_392 = arith.constant 16 : i32
    %808 = arith.muli %807, %c16_i32_392 : i32
    %c256_i32_393 = arith.constant 256 : i32
    %c0_i32_394 = arith.constant 0 : i32
    %809 = arith.cmpi eq, %c256_i32_393, %c0_i32_394 : i32
    %c1_i32_395 = arith.constant 1 : i32
    %810 = arith.select %809, %c1_i32_395, %c256_i32_393 : i32
    %811 = arith.remsi %808, %810 : i32
    %c0_i32_396 = arith.constant 0 : i32
    %812 = arith.cmpi ne, %811, %c0_i32_396 : i32
    %c0_i32_397 = arith.constant 0 : i32
    %813 = arith.cmpi slt, %811, %c0_i32_397 : i32
    %c0_i32_398 = arith.constant 0 : i32
    %814 = arith.cmpi slt, %810, %c0_i32_398 : i32
    %815 = arith.xori %813, %814 : i1
    %816 = arith.andi %815, %812 : i1
    %817 = arith.addi %811, %810 : i32
    %818 = arith.select %816, %817, %811 : i32
    %819 = tpu.dynamic_rotate %741 by %818 dim 1 : vector<2x256xf32>, i32 -> vector<2x256xf32>
    %c0_i32_399 = arith.constant 0 : i32
    %820 = arith.subi %c0_i32_399, %806 : i32
    %821 = vector.broadcast %820 : i32 to vector<1x256xi32>
    %822 = arith.cmpi sge, %28, %821 : vector<1x256xi32>
    %c15_i32_400 = arith.constant 15 : i32
    %823 = arith.subi %c15_i32_400, %806 : i32
    %824 = vector.broadcast %823 : i32 to vector<1x256xi32>
    %825 = arith.cmpi sle, %28, %824 : vector<1x256xi32>
    %826 = arith.andi %822, %825 : vector<1x256xi1>
    %cst_401 = arith.constant 0.000000e+00 : f32
    %827 = vector.shape_cast %826 : vector<1x256xi1> to vector<1x256xi1>
    %828 = vector.broadcast %827 : vector<1x256xi1> to vector<2x256xi1>
    %829 = vector.broadcast %cst_401 : f32 to vector<2x256xf32>
    %830 = arith.select %828, %819, %829 : vector<2x256xi1>, vector<2x256xf32>
    %c7_i32_402 = arith.constant 7 : i32
    %831 = arith.muli %c2_i32_389, %c7_i32_402 : i32
    %c3_i32_403 = arith.constant 3 : i32
    %832 = arith.addi %831, %c3_i32_403 : i32
    %c0_404 = arith.constant 0 : index
    %833 = arith.index_cast %832 : i32 to index
    %834 = vector.load %arg4[%c0_404, %833] : memref<2x49xf32, #tpu.memory_space<vmem>>, vector<2x1xf32>
    %835 = vector.broadcast %834 : vector<2x1xf32> to vector<2x256xf32>
    %836 = arith.mulf %835, %830 : vector<2x256xf32>
    %837 = arith.addf %805, %836 : vector<2x256xf32>
    %c3_i32_405 = arith.constant 3 : i32
    %c3_i32_406 = arith.constant 3 : i32
    %838 = arith.subi %c3_i32_405, %c3_i32_406 : i32
    %c0_i32_407 = arith.constant 0 : i32
    %839 = arith.subi %c0_i32_407, %838 : i32
    %c16_i32_408 = arith.constant 16 : i32
    %840 = arith.muli %839, %c16_i32_408 : i32
    %c256_i32_409 = arith.constant 256 : i32
    %c0_i32_410 = arith.constant 0 : i32
    %841 = arith.cmpi eq, %c256_i32_409, %c0_i32_410 : i32
    %c1_i32_411 = arith.constant 1 : i32
    %842 = arith.select %841, %c1_i32_411, %c256_i32_409 : i32
    %843 = arith.remsi %840, %842 : i32
    %c0_i32_412 = arith.constant 0 : i32
    %844 = arith.cmpi ne, %843, %c0_i32_412 : i32
    %c0_i32_413 = arith.constant 0 : i32
    %845 = arith.cmpi slt, %843, %c0_i32_413 : i32
    %c0_i32_414 = arith.constant 0 : i32
    %846 = arith.cmpi slt, %842, %c0_i32_414 : i32
    %847 = arith.xori %845, %846 : i1
    %848 = arith.andi %847, %844 : i1
    %849 = arith.addi %843, %842 : i32
    %850 = arith.select %848, %849, %843 : i32
    %851 = tpu.dynamic_rotate %741 by %850 dim 1 : vector<2x256xf32>, i32 -> vector<2x256xf32>
    %c0_i32_415 = arith.constant 0 : i32
    %852 = arith.subi %c0_i32_415, %838 : i32
    %853 = vector.broadcast %852 : i32 to vector<1x256xi32>
    %854 = arith.cmpi sge, %28, %853 : vector<1x256xi32>
    %c15_i32_416 = arith.constant 15 : i32
    %855 = arith.subi %c15_i32_416, %838 : i32
    %856 = vector.broadcast %855 : i32 to vector<1x256xi32>
    %857 = arith.cmpi sle, %28, %856 : vector<1x256xi32>
    %858 = arith.andi %854, %857 : vector<1x256xi1>
    %cst_417 = arith.constant 0.000000e+00 : f32
    %859 = vector.shape_cast %858 : vector<1x256xi1> to vector<1x256xi1>
    %860 = vector.broadcast %859 : vector<1x256xi1> to vector<2x256xi1>
    %861 = vector.broadcast %cst_417 : f32 to vector<2x256xf32>
    %862 = arith.select %860, %851, %861 : vector<2x256xi1>, vector<2x256xf32>
    %c7_i32_418 = arith.constant 7 : i32
    %863 = arith.muli %c3_i32_405, %c7_i32_418 : i32
    %c3_i32_419 = arith.constant 3 : i32
    %864 = arith.addi %863, %c3_i32_419 : i32
    %c0_420 = arith.constant 0 : index
    %865 = arith.index_cast %864 : i32 to index
    %866 = vector.load %arg4[%c0_420, %865] : memref<2x49xf32, #tpu.memory_space<vmem>>, vector<2x1xf32>
    %867 = vector.broadcast %866 : vector<2x1xf32> to vector<2x256xf32>
    %868 = arith.mulf %867, %862 : vector<2x256xf32>
    %869 = arith.addf %837, %868 : vector<2x256xf32>
    %c4_i32_421 = arith.constant 4 : i32
    %c3_i32_422 = arith.constant 3 : i32
    %870 = arith.subi %c4_i32_421, %c3_i32_422 : i32
    %c0_i32_423 = arith.constant 0 : i32
    %871 = arith.subi %c0_i32_423, %870 : i32
    %c16_i32_424 = arith.constant 16 : i32
    %872 = arith.muli %871, %c16_i32_424 : i32
    %c256_i32_425 = arith.constant 256 : i32
    %c0_i32_426 = arith.constant 0 : i32
    %873 = arith.cmpi eq, %c256_i32_425, %c0_i32_426 : i32
    %c1_i32_427 = arith.constant 1 : i32
    %874 = arith.select %873, %c1_i32_427, %c256_i32_425 : i32
    %875 = arith.remsi %872, %874 : i32
    %c0_i32_428 = arith.constant 0 : i32
    %876 = arith.cmpi ne, %875, %c0_i32_428 : i32
    %c0_i32_429 = arith.constant 0 : i32
    %877 = arith.cmpi slt, %875, %c0_i32_429 : i32
    %c0_i32_430 = arith.constant 0 : i32
    %878 = arith.cmpi slt, %874, %c0_i32_430 : i32
    %879 = arith.xori %877, %878 : i1
    %880 = arith.andi %879, %876 : i1
    %881 = arith.addi %875, %874 : i32
    %882 = arith.select %880, %881, %875 : i32
    %883 = tpu.dynamic_rotate %741 by %882 dim 1 : vector<2x256xf32>, i32 -> vector<2x256xf32>
    %c0_i32_431 = arith.constant 0 : i32
    %884 = arith.subi %c0_i32_431, %870 : i32
    %885 = vector.broadcast %884 : i32 to vector<1x256xi32>
    %886 = arith.cmpi sge, %28, %885 : vector<1x256xi32>
    %c15_i32_432 = arith.constant 15 : i32
    %887 = arith.subi %c15_i32_432, %870 : i32
    %888 = vector.broadcast %887 : i32 to vector<1x256xi32>
    %889 = arith.cmpi sle, %28, %888 : vector<1x256xi32>
    %890 = arith.andi %886, %889 : vector<1x256xi1>
    %cst_433 = arith.constant 0.000000e+00 : f32
    %891 = vector.shape_cast %890 : vector<1x256xi1> to vector<1x256xi1>
    %892 = vector.broadcast %891 : vector<1x256xi1> to vector<2x256xi1>
    %893 = vector.broadcast %cst_433 : f32 to vector<2x256xf32>
    %894 = arith.select %892, %883, %893 : vector<2x256xi1>, vector<2x256xf32>
    %c7_i32_434 = arith.constant 7 : i32
    %895 = arith.muli %c4_i32_421, %c7_i32_434 : i32
    %c3_i32_435 = arith.constant 3 : i32
    %896 = arith.addi %895, %c3_i32_435 : i32
    %c0_436 = arith.constant 0 : index
    %897 = arith.index_cast %896 : i32 to index
    %898 = vector.load %arg4[%c0_436, %897] : memref<2x49xf32, #tpu.memory_space<vmem>>, vector<2x1xf32>
    %899 = vector.broadcast %898 : vector<2x1xf32> to vector<2x256xf32>
    %900 = arith.mulf %899, %894 : vector<2x256xf32>
    %901 = arith.addf %869, %900 : vector<2x256xf32>
    %c5_i32_437 = arith.constant 5 : i32
    %c3_i32_438 = arith.constant 3 : i32
    %902 = arith.subi %c5_i32_437, %c3_i32_438 : i32
    %c0_i32_439 = arith.constant 0 : i32
    %903 = arith.subi %c0_i32_439, %902 : i32
    %c16_i32_440 = arith.constant 16 : i32
    %904 = arith.muli %903, %c16_i32_440 : i32
    %c256_i32_441 = arith.constant 256 : i32
    %c0_i32_442 = arith.constant 0 : i32
    %905 = arith.cmpi eq, %c256_i32_441, %c0_i32_442 : i32
    %c1_i32_443 = arith.constant 1 : i32
    %906 = arith.select %905, %c1_i32_443, %c256_i32_441 : i32
    %907 = arith.remsi %904, %906 : i32
    %c0_i32_444 = arith.constant 0 : i32
    %908 = arith.cmpi ne, %907, %c0_i32_444 : i32
    %c0_i32_445 = arith.constant 0 : i32
    %909 = arith.cmpi slt, %907, %c0_i32_445 : i32
    %c0_i32_446 = arith.constant 0 : i32
    %910 = arith.cmpi slt, %906, %c0_i32_446 : i32
    %911 = arith.xori %909, %910 : i1
    %912 = arith.andi %911, %908 : i1
    %913 = arith.addi %907, %906 : i32
    %914 = arith.select %912, %913, %907 : i32
    %915 = tpu.dynamic_rotate %741 by %914 dim 1 : vector<2x256xf32>, i32 -> vector<2x256xf32>
    %c0_i32_447 = arith.constant 0 : i32
    %916 = arith.subi %c0_i32_447, %902 : i32
    %917 = vector.broadcast %916 : i32 to vector<1x256xi32>
    %918 = arith.cmpi sge, %28, %917 : vector<1x256xi32>
    %c15_i32_448 = arith.constant 15 : i32
    %919 = arith.subi %c15_i32_448, %902 : i32
    %920 = vector.broadcast %919 : i32 to vector<1x256xi32>
    %921 = arith.cmpi sle, %28, %920 : vector<1x256xi32>
    %922 = arith.andi %918, %921 : vector<1x256xi1>
    %cst_449 = arith.constant 0.000000e+00 : f32
    %923 = vector.shape_cast %922 : vector<1x256xi1> to vector<1x256xi1>
    %924 = vector.broadcast %923 : vector<1x256xi1> to vector<2x256xi1>
    %925 = vector.broadcast %cst_449 : f32 to vector<2x256xf32>
    %926 = arith.select %924, %915, %925 : vector<2x256xi1>, vector<2x256xf32>
    %c7_i32_450 = arith.constant 7 : i32
    %927 = arith.muli %c5_i32_437, %c7_i32_450 : i32
    %c3_i32_451 = arith.constant 3 : i32
    %928 = arith.addi %927, %c3_i32_451 : i32
    %c0_452 = arith.constant 0 : index
    %929 = arith.index_cast %928 : i32 to index
    %930 = vector.load %arg4[%c0_452, %929] : memref<2x49xf32, #tpu.memory_space<vmem>>, vector<2x1xf32>
    %931 = vector.broadcast %930 : vector<2x1xf32> to vector<2x256xf32>
    %932 = arith.mulf %931, %926 : vector<2x256xf32>
    %933 = arith.addf %901, %932 : vector<2x256xf32>
    %c6_i32_453 = arith.constant 6 : i32
    %c3_i32_454 = arith.constant 3 : i32
    %934 = arith.subi %c6_i32_453, %c3_i32_454 : i32
    %c0_i32_455 = arith.constant 0 : i32
    %935 = arith.subi %c0_i32_455, %934 : i32
    %c16_i32_456 = arith.constant 16 : i32
    %936 = arith.muli %935, %c16_i32_456 : i32
    %c256_i32_457 = arith.constant 256 : i32
    %c0_i32_458 = arith.constant 0 : i32
    %937 = arith.cmpi eq, %c256_i32_457, %c0_i32_458 : i32
    %c1_i32_459 = arith.constant 1 : i32
    %938 = arith.select %937, %c1_i32_459, %c256_i32_457 : i32
    %939 = arith.remsi %936, %938 : i32
    %c0_i32_460 = arith.constant 0 : i32
    %940 = arith.cmpi ne, %939, %c0_i32_460 : i32
    %c0_i32_461 = arith.constant 0 : i32
    %941 = arith.cmpi slt, %939, %c0_i32_461 : i32
    %c0_i32_462 = arith.constant 0 : i32
    %942 = arith.cmpi slt, %938, %c0_i32_462 : i32
    %943 = arith.xori %941, %942 : i1
    %944 = arith.andi %943, %940 : i1
    %945 = arith.addi %939, %938 : i32
    %946 = arith.select %944, %945, %939 : i32
    %947 = tpu.dynamic_rotate %741 by %946 dim 1 : vector<2x256xf32>, i32 -> vector<2x256xf32>
    %c0_i32_463 = arith.constant 0 : i32
    %948 = arith.subi %c0_i32_463, %934 : i32
    %949 = vector.broadcast %948 : i32 to vector<1x256xi32>
    %950 = arith.cmpi sge, %28, %949 : vector<1x256xi32>
    %c15_i32_464 = arith.constant 15 : i32
    %951 = arith.subi %c15_i32_464, %934 : i32
    %952 = vector.broadcast %951 : i32 to vector<1x256xi32>
    %953 = arith.cmpi sle, %28, %952 : vector<1x256xi32>
    %954 = arith.andi %950, %953 : vector<1x256xi1>
    %cst_465 = arith.constant 0.000000e+00 : f32
    %955 = vector.shape_cast %954 : vector<1x256xi1> to vector<1x256xi1>
    %956 = vector.broadcast %955 : vector<1x256xi1> to vector<2x256xi1>
    %957 = vector.broadcast %cst_465 : f32 to vector<2x256xf32>
    %958 = arith.select %956, %947, %957 : vector<2x256xi1>, vector<2x256xf32>
    %c7_i32_466 = arith.constant 7 : i32
    %959 = arith.muli %c6_i32_453, %c7_i32_466 : i32
    %c3_i32_467 = arith.constant 3 : i32
    %960 = arith.addi %959, %c3_i32_467 : i32
    %c0_468 = arith.constant 0 : index
    %961 = arith.index_cast %960 : i32 to index
    %962 = vector.load %arg4[%c0_468, %961] : memref<2x49xf32, #tpu.memory_space<vmem>>, vector<2x1xf32>
    %963 = vector.broadcast %962 : vector<2x1xf32> to vector<2x256xf32>
    %964 = arith.mulf %963, %958 : vector<2x256xf32>
    %965 = arith.addf %933, %964 : vector<2x256xf32>
    %c7_i32_469 = arith.constant 7 : i32
    %c255_i32 = arith.constant 255 : i32
    %966 = tpu.dynamic_rotate %23 by %c255_i32 dim 1 : vector<2x256xf32>, i32 -> vector<2x256xf32>
    %c-1_i32 = arith.constant -1 : i32
    %967 = vector.broadcast %c-1_i32 : i32 to vector<1x256xi32>
    %968 = arith.cmpi sge, %26, %967 : vector<1x256xi32>
    %c14_i32 = arith.constant 14 : i32
    %969 = vector.broadcast %c14_i32 : i32 to vector<1x256xi32>
    %970 = arith.cmpi sle, %26, %969 : vector<1x256xi32>
    %971 = arith.andi %968, %970 : vector<1x256xi1>
    %cst_470 = arith.constant 0.000000e+00 : f32
    %972 = vector.shape_cast %971 : vector<1x256xi1> to vector<1x256xi1>
    %973 = vector.broadcast %972 : vector<1x256xi1> to vector<2x256xi1>
    %974 = vector.broadcast %cst_470 : f32 to vector<2x256xf32>
    %975 = arith.select %973, %966, %974 : vector<2x256xi1>, vector<2x256xf32>
    %c0_i32_471 = arith.constant 0 : i32
    %c3_i32_472 = arith.constant 3 : i32
    %976 = arith.subi %c0_i32_471, %c3_i32_472 : i32
    %c0_i32_473 = arith.constant 0 : i32
    %977 = arith.subi %c0_i32_473, %976 : i32
    %c16_i32_474 = arith.constant 16 : i32
    %978 = arith.muli %977, %c16_i32_474 : i32
    %c256_i32_475 = arith.constant 256 : i32
    %c0_i32_476 = arith.constant 0 : i32
    %979 = arith.cmpi eq, %c256_i32_475, %c0_i32_476 : i32
    %c1_i32_477 = arith.constant 1 : i32
    %980 = arith.select %979, %c1_i32_477, %c256_i32_475 : i32
    %981 = arith.remsi %978, %980 : i32
    %c0_i32_478 = arith.constant 0 : i32
    %982 = arith.cmpi ne, %981, %c0_i32_478 : i32
    %c0_i32_479 = arith.constant 0 : i32
    %983 = arith.cmpi slt, %981, %c0_i32_479 : i32
    %c0_i32_480 = arith.constant 0 : i32
    %984 = arith.cmpi slt, %980, %c0_i32_480 : i32
    %985 = arith.xori %983, %984 : i1
    %986 = arith.andi %985, %982 : i1
    %987 = arith.addi %981, %980 : i32
    %988 = arith.select %986, %987, %981 : i32
    %989 = tpu.dynamic_rotate %975 by %988 dim 1 : vector<2x256xf32>, i32 -> vector<2x256xf32>
    %c0_i32_481 = arith.constant 0 : i32
    %990 = arith.subi %c0_i32_481, %976 : i32
    %991 = vector.broadcast %990 : i32 to vector<1x256xi32>
    %992 = arith.cmpi sge, %28, %991 : vector<1x256xi32>
    %c15_i32_482 = arith.constant 15 : i32
    %993 = arith.subi %c15_i32_482, %976 : i32
    %994 = vector.broadcast %993 : i32 to vector<1x256xi32>
    %995 = arith.cmpi sle, %28, %994 : vector<1x256xi32>
    %996 = arith.andi %992, %995 : vector<1x256xi1>
    %cst_483 = arith.constant 0.000000e+00 : f32
    %997 = vector.shape_cast %996 : vector<1x256xi1> to vector<1x256xi1>
    %998 = vector.broadcast %997 : vector<1x256xi1> to vector<2x256xi1>
    %999 = vector.broadcast %cst_483 : f32 to vector<2x256xf32>
    %1000 = arith.select %998, %989, %999 : vector<2x256xi1>, vector<2x256xf32>
    %c7_i32_484 = arith.constant 7 : i32
    %1001 = arith.muli %c0_i32_471, %c7_i32_484 : i32
    %c4_i32_485 = arith.constant 4 : i32
    %1002 = arith.addi %1001, %c4_i32_485 : i32
    %c0_486 = arith.constant 0 : index
    %1003 = arith.index_cast %1002 : i32 to index
    %1004 = vector.load %arg4[%c0_486, %1003] : memref<2x49xf32, #tpu.memory_space<vmem>>, vector<2x1xf32>
    %1005 = vector.broadcast %1004 : vector<2x1xf32> to vector<2x256xf32>
    %1006 = arith.mulf %1005, %1000 : vector<2x256xf32>
    %1007 = arith.addf %965, %1006 : vector<2x256xf32>
    %c1_i32_487 = arith.constant 1 : i32
    %c3_i32_488 = arith.constant 3 : i32
    %1008 = arith.subi %c1_i32_487, %c3_i32_488 : i32
    %c0_i32_489 = arith.constant 0 : i32
    %1009 = arith.subi %c0_i32_489, %1008 : i32
    %c16_i32_490 = arith.constant 16 : i32
    %1010 = arith.muli %1009, %c16_i32_490 : i32
    %c256_i32_491 = arith.constant 256 : i32
    %c0_i32_492 = arith.constant 0 : i32
    %1011 = arith.cmpi eq, %c256_i32_491, %c0_i32_492 : i32
    %c1_i32_493 = arith.constant 1 : i32
    %1012 = arith.select %1011, %c1_i32_493, %c256_i32_491 : i32
    %1013 = arith.remsi %1010, %1012 : i32
    %c0_i32_494 = arith.constant 0 : i32
    %1014 = arith.cmpi ne, %1013, %c0_i32_494 : i32
    %c0_i32_495 = arith.constant 0 : i32
    %1015 = arith.cmpi slt, %1013, %c0_i32_495 : i32
    %c0_i32_496 = arith.constant 0 : i32
    %1016 = arith.cmpi slt, %1012, %c0_i32_496 : i32
    %1017 = arith.xori %1015, %1016 : i1
    %1018 = arith.andi %1017, %1014 : i1
    %1019 = arith.addi %1013, %1012 : i32
    %1020 = arith.select %1018, %1019, %1013 : i32
    %1021 = tpu.dynamic_rotate %975 by %1020 dim 1 : vector<2x256xf32>, i32 -> vector<2x256xf32>
    %c0_i32_497 = arith.constant 0 : i32
    %1022 = arith.subi %c0_i32_497, %1008 : i32
    %1023 = vector.broadcast %1022 : i32 to vector<1x256xi32>
    %1024 = arith.cmpi sge, %28, %1023 : vector<1x256xi32>
    %c15_i32_498 = arith.constant 15 : i32
    %1025 = arith.subi %c15_i32_498, %1008 : i32
    %1026 = vector.broadcast %1025 : i32 to vector<1x256xi32>
    %1027 = arith.cmpi sle, %28, %1026 : vector<1x256xi32>
    %1028 = arith.andi %1024, %1027 : vector<1x256xi1>
    %cst_499 = arith.constant 0.000000e+00 : f32
    %1029 = vector.shape_cast %1028 : vector<1x256xi1> to vector<1x256xi1>
    %1030 = vector.broadcast %1029 : vector<1x256xi1> to vector<2x256xi1>
    %1031 = vector.broadcast %cst_499 : f32 to vector<2x256xf32>
    %1032 = arith.select %1030, %1021, %1031 : vector<2x256xi1>, vector<2x256xf32>
    %c7_i32_500 = arith.constant 7 : i32
    %1033 = arith.muli %c1_i32_487, %c7_i32_500 : i32
    %c4_i32_501 = arith.constant 4 : i32
    %1034 = arith.addi %1033, %c4_i32_501 : i32
    %c0_502 = arith.constant 0 : index
    %1035 = arith.index_cast %1034 : i32 to index
    %1036 = vector.load %arg4[%c0_502, %1035] : memref<2x49xf32, #tpu.memory_space<vmem>>, vector<2x1xf32>
    %1037 = vector.broadcast %1036 : vector<2x1xf32> to vector<2x256xf32>
    %1038 = arith.mulf %1037, %1032 : vector<2x256xf32>
    %1039 = arith.addf %1007, %1038 : vector<2x256xf32>
    %c2_i32_503 = arith.constant 2 : i32
    %c3_i32_504 = arith.constant 3 : i32
    %1040 = arith.subi %c2_i32_503, %c3_i32_504 : i32
    %c0_i32_505 = arith.constant 0 : i32
    %1041 = arith.subi %c0_i32_505, %1040 : i32
    %c16_i32_506 = arith.constant 16 : i32
    %1042 = arith.muli %1041, %c16_i32_506 : i32
    %c256_i32_507 = arith.constant 256 : i32
    %c0_i32_508 = arith.constant 0 : i32
    %1043 = arith.cmpi eq, %c256_i32_507, %c0_i32_508 : i32
    %c1_i32_509 = arith.constant 1 : i32
    %1044 = arith.select %1043, %c1_i32_509, %c256_i32_507 : i32
    %1045 = arith.remsi %1042, %1044 : i32
    %c0_i32_510 = arith.constant 0 : i32
    %1046 = arith.cmpi ne, %1045, %c0_i32_510 : i32
    %c0_i32_511 = arith.constant 0 : i32
    %1047 = arith.cmpi slt, %1045, %c0_i32_511 : i32
    %c0_i32_512 = arith.constant 0 : i32
    %1048 = arith.cmpi slt, %1044, %c0_i32_512 : i32
    %1049 = arith.xori %1047, %1048 : i1
    %1050 = arith.andi %1049, %1046 : i1
    %1051 = arith.addi %1045, %1044 : i32
    %1052 = arith.select %1050, %1051, %1045 : i32
    %1053 = tpu.dynamic_rotate %975 by %1052 dim 1 : vector<2x256xf32>, i32 -> vector<2x256xf32>
    %c0_i32_513 = arith.constant 0 : i32
    %1054 = arith.subi %c0_i32_513, %1040 : i32
    %1055 = vector.broadcast %1054 : i32 to vector<1x256xi32>
    %1056 = arith.cmpi sge, %28, %1055 : vector<1x256xi32>
    %c15_i32_514 = arith.constant 15 : i32
    %1057 = arith.subi %c15_i32_514, %1040 : i32
    %1058 = vector.broadcast %1057 : i32 to vector<1x256xi32>
    %1059 = arith.cmpi sle, %28, %1058 : vector<1x256xi32>
    %1060 = arith.andi %1056, %1059 : vector<1x256xi1>
    %cst_515 = arith.constant 0.000000e+00 : f32
    %1061 = vector.shape_cast %1060 : vector<1x256xi1> to vector<1x256xi1>
    %1062 = vector.broadcast %1061 : vector<1x256xi1> to vector<2x256xi1>
    %1063 = vector.broadcast %cst_515 : f32 to vector<2x256xf32>
    %1064 = arith.select %1062, %1053, %1063 : vector<2x256xi1>, vector<2x256xf32>
    %c7_i32_516 = arith.constant 7 : i32
    %1065 = arith.muli %c2_i32_503, %c7_i32_516 : i32
    %c4_i32_517 = arith.constant 4 : i32
    %1066 = arith.addi %1065, %c4_i32_517 : i32
    %c0_518 = arith.constant 0 : index
    %1067 = arith.index_cast %1066 : i32 to index
    %1068 = vector.load %arg4[%c0_518, %1067] : memref<2x49xf32, #tpu.memory_space<vmem>>, vector<2x1xf32>
    %1069 = vector.broadcast %1068 : vector<2x1xf32> to vector<2x256xf32>
    %1070 = arith.mulf %1069, %1064 : vector<2x256xf32>
    %1071 = arith.addf %1039, %1070 : vector<2x256xf32>
    %c3_i32_519 = arith.constant 3 : i32
    %c3_i32_520 = arith.constant 3 : i32
    %1072 = arith.subi %c3_i32_519, %c3_i32_520 : i32
    %c0_i32_521 = arith.constant 0 : i32
    %1073 = arith.subi %c0_i32_521, %1072 : i32
    %c16_i32_522 = arith.constant 16 : i32
    %1074 = arith.muli %1073, %c16_i32_522 : i32
    %c256_i32_523 = arith.constant 256 : i32
    %c0_i32_524 = arith.constant 0 : i32
    %1075 = arith.cmpi eq, %c256_i32_523, %c0_i32_524 : i32
    %c1_i32_525 = arith.constant 1 : i32
    %1076 = arith.select %1075, %c1_i32_525, %c256_i32_523 : i32
    %1077 = arith.remsi %1074, %1076 : i32
    %c0_i32_526 = arith.constant 0 : i32
    %1078 = arith.cmpi ne, %1077, %c0_i32_526 : i32
    %c0_i32_527 = arith.constant 0 : i32
    %1079 = arith.cmpi slt, %1077, %c0_i32_527 : i32
    %c0_i32_528 = arith.constant 0 : i32
    %1080 = arith.cmpi slt, %1076, %c0_i32_528 : i32
    %1081 = arith.xori %1079, %1080 : i1
    %1082 = arith.andi %1081, %1078 : i1
    %1083 = arith.addi %1077, %1076 : i32
    %1084 = arith.select %1082, %1083, %1077 : i32
    %1085 = tpu.dynamic_rotate %975 by %1084 dim 1 : vector<2x256xf32>, i32 -> vector<2x256xf32>
    %c0_i32_529 = arith.constant 0 : i32
    %1086 = arith.subi %c0_i32_529, %1072 : i32
    %1087 = vector.broadcast %1086 : i32 to vector<1x256xi32>
    %1088 = arith.cmpi sge, %28, %1087 : vector<1x256xi32>
    %c15_i32_530 = arith.constant 15 : i32
    %1089 = arith.subi %c15_i32_530, %1072 : i32
    %1090 = vector.broadcast %1089 : i32 to vector<1x256xi32>
    %1091 = arith.cmpi sle, %28, %1090 : vector<1x256xi32>
    %1092 = arith.andi %1088, %1091 : vector<1x256xi1>
    %cst_531 = arith.constant 0.000000e+00 : f32
    %1093 = vector.shape_cast %1092 : vector<1x256xi1> to vector<1x256xi1>
    %1094 = vector.broadcast %1093 : vector<1x256xi1> to vector<2x256xi1>
    %1095 = vector.broadcast %cst_531 : f32 to vector<2x256xf32>
    %1096 = arith.select %1094, %1085, %1095 : vector<2x256xi1>, vector<2x256xf32>
    %c7_i32_532 = arith.constant 7 : i32
    %1097 = arith.muli %c3_i32_519, %c7_i32_532 : i32
    %c4_i32_533 = arith.constant 4 : i32
    %1098 = arith.addi %1097, %c4_i32_533 : i32
    %c0_534 = arith.constant 0 : index
    %1099 = arith.index_cast %1098 : i32 to index
    %1100 = vector.load %arg4[%c0_534, %1099] : memref<2x49xf32, #tpu.memory_space<vmem>>, vector<2x1xf32>
    %1101 = vector.broadcast %1100 : vector<2x1xf32> to vector<2x256xf32>
    %1102 = arith.mulf %1101, %1096 : vector<2x256xf32>
    %1103 = arith.addf %1071, %1102 : vector<2x256xf32>
    %c4_i32_535 = arith.constant 4 : i32
    %c3_i32_536 = arith.constant 3 : i32
    %1104 = arith.subi %c4_i32_535, %c3_i32_536 : i32
    %c0_i32_537 = arith.constant 0 : i32
    %1105 = arith.subi %c0_i32_537, %1104 : i32
    %c16_i32_538 = arith.constant 16 : i32
    %1106 = arith.muli %1105, %c16_i32_538 : i32
    %c256_i32_539 = arith.constant 256 : i32
    %c0_i32_540 = arith.constant 0 : i32
    %1107 = arith.cmpi eq, %c256_i32_539, %c0_i32_540 : i32
    %c1_i32_541 = arith.constant 1 : i32
    %1108 = arith.select %1107, %c1_i32_541, %c256_i32_539 : i32
    %1109 = arith.remsi %1106, %1108 : i32
    %c0_i32_542 = arith.constant 0 : i32
    %1110 = arith.cmpi ne, %1109, %c0_i32_542 : i32
    %c0_i32_543 = arith.constant 0 : i32
    %1111 = arith.cmpi slt, %1109, %c0_i32_543 : i32
    %c0_i32_544 = arith.constant 0 : i32
    %1112 = arith.cmpi slt, %1108, %c0_i32_544 : i32
    %1113 = arith.xori %1111, %1112 : i1
    %1114 = arith.andi %1113, %1110 : i1
    %1115 = arith.addi %1109, %1108 : i32
    %1116 = arith.select %1114, %1115, %1109 : i32
    %1117 = tpu.dynamic_rotate %975 by %1116 dim 1 : vector<2x256xf32>, i32 -> vector<2x256xf32>
    %c0_i32_545 = arith.constant 0 : i32
    %1118 = arith.subi %c0_i32_545, %1104 : i32
    %1119 = vector.broadcast %1118 : i32 to vector<1x256xi32>
    %1120 = arith.cmpi sge, %28, %1119 : vector<1x256xi32>
    %c15_i32_546 = arith.constant 15 : i32
    %1121 = arith.subi %c15_i32_546, %1104 : i32
    %1122 = vector.broadcast %1121 : i32 to vector<1x256xi32>
    %1123 = arith.cmpi sle, %28, %1122 : vector<1x256xi32>
    %1124 = arith.andi %1120, %1123 : vector<1x256xi1>
    %cst_547 = arith.constant 0.000000e+00 : f32
    %1125 = vector.shape_cast %1124 : vector<1x256xi1> to vector<1x256xi1>
    %1126 = vector.broadcast %1125 : vector<1x256xi1> to vector<2x256xi1>
    %1127 = vector.broadcast %cst_547 : f32 to vector<2x256xf32>
    %1128 = arith.select %1126, %1117, %1127 : vector<2x256xi1>, vector<2x256xf32>
    %c7_i32_548 = arith.constant 7 : i32
    %1129 = arith.muli %c4_i32_535, %c7_i32_548 : i32
    %c4_i32_549 = arith.constant 4 : i32
    %1130 = arith.addi %1129, %c4_i32_549 : i32
    %c0_550 = arith.constant 0 : index
    %1131 = arith.index_cast %1130 : i32 to index
    %1132 = vector.load %arg4[%c0_550, %1131] : memref<2x49xf32, #tpu.memory_space<vmem>>, vector<2x1xf32>
    %1133 = vector.broadcast %1132 : vector<2x1xf32> to vector<2x256xf32>
    %1134 = arith.mulf %1133, %1128 : vector<2x256xf32>
    %1135 = arith.addf %1103, %1134 : vector<2x256xf32>
    %c5_i32_551 = arith.constant 5 : i32
    %c3_i32_552 = arith.constant 3 : i32
    %1136 = arith.subi %c5_i32_551, %c3_i32_552 : i32
    %c0_i32_553 = arith.constant 0 : i32
    %1137 = arith.subi %c0_i32_553, %1136 : i32
    %c16_i32_554 = arith.constant 16 : i32
    %1138 = arith.muli %1137, %c16_i32_554 : i32
    %c256_i32_555 = arith.constant 256 : i32
    %c0_i32_556 = arith.constant 0 : i32
    %1139 = arith.cmpi eq, %c256_i32_555, %c0_i32_556 : i32
    %c1_i32_557 = arith.constant 1 : i32
    %1140 = arith.select %1139, %c1_i32_557, %c256_i32_555 : i32
    %1141 = arith.remsi %1138, %1140 : i32
    %c0_i32_558 = arith.constant 0 : i32
    %1142 = arith.cmpi ne, %1141, %c0_i32_558 : i32
    %c0_i32_559 = arith.constant 0 : i32
    %1143 = arith.cmpi slt, %1141, %c0_i32_559 : i32
    %c0_i32_560 = arith.constant 0 : i32
    %1144 = arith.cmpi slt, %1140, %c0_i32_560 : i32
    %1145 = arith.xori %1143, %1144 : i1
    %1146 = arith.andi %1145, %1142 : i1
    %1147 = arith.addi %1141, %1140 : i32
    %1148 = arith.select %1146, %1147, %1141 : i32
    %1149 = tpu.dynamic_rotate %975 by %1148 dim 1 : vector<2x256xf32>, i32 -> vector<2x256xf32>
    %c0_i32_561 = arith.constant 0 : i32
    %1150 = arith.subi %c0_i32_561, %1136 : i32
    %1151 = vector.broadcast %1150 : i32 to vector<1x256xi32>
    %1152 = arith.cmpi sge, %28, %1151 : vector<1x256xi32>
    %c15_i32_562 = arith.constant 15 : i32
    %1153 = arith.subi %c15_i32_562, %1136 : i32
    %1154 = vector.broadcast %1153 : i32 to vector<1x256xi32>
    %1155 = arith.cmpi sle, %28, %1154 : vector<1x256xi32>
    %1156 = arith.andi %1152, %1155 : vector<1x256xi1>
    %cst_563 = arith.constant 0.000000e+00 : f32
    %1157 = vector.shape_cast %1156 : vector<1x256xi1> to vector<1x256xi1>
    %1158 = vector.broadcast %1157 : vector<1x256xi1> to vector<2x256xi1>
    %1159 = vector.broadcast %cst_563 : f32 to vector<2x256xf32>
    %1160 = arith.select %1158, %1149, %1159 : vector<2x256xi1>, vector<2x256xf32>
    %c7_i32_564 = arith.constant 7 : i32
    %1161 = arith.muli %c5_i32_551, %c7_i32_564 : i32
    %c4_i32_565 = arith.constant 4 : i32
    %1162 = arith.addi %1161, %c4_i32_565 : i32
    %c0_566 = arith.constant 0 : index
    %1163 = arith.index_cast %1162 : i32 to index
    %1164 = vector.load %arg4[%c0_566, %1163] : memref<2x49xf32, #tpu.memory_space<vmem>>, vector<2x1xf32>
    %1165 = vector.broadcast %1164 : vector<2x1xf32> to vector<2x256xf32>
    %1166 = arith.mulf %1165, %1160 : vector<2x256xf32>
    %1167 = arith.addf %1135, %1166 : vector<2x256xf32>
    %c6_i32_567 = arith.constant 6 : i32
    %c3_i32_568 = arith.constant 3 : i32
    %1168 = arith.subi %c6_i32_567, %c3_i32_568 : i32
    %c0_i32_569 = arith.constant 0 : i32
    %1169 = arith.subi %c0_i32_569, %1168 : i32
    %c16_i32_570 = arith.constant 16 : i32
    %1170 = arith.muli %1169, %c16_i32_570 : i32
    %c256_i32_571 = arith.constant 256 : i32
    %c0_i32_572 = arith.constant 0 : i32
    %1171 = arith.cmpi eq, %c256_i32_571, %c0_i32_572 : i32
    %c1_i32_573 = arith.constant 1 : i32
    %1172 = arith.select %1171, %c1_i32_573, %c256_i32_571 : i32
    %1173 = arith.remsi %1170, %1172 : i32
    %c0_i32_574 = arith.constant 0 : i32
    %1174 = arith.cmpi ne, %1173, %c0_i32_574 : i32
    %c0_i32_575 = arith.constant 0 : i32
    %1175 = arith.cmpi slt, %1173, %c0_i32_575 : i32
    %c0_i32_576 = arith.constant 0 : i32
    %1176 = arith.cmpi slt, %1172, %c0_i32_576 : i32
    %1177 = arith.xori %1175, %1176 : i1
    %1178 = arith.andi %1177, %1174 : i1
    %1179 = arith.addi %1173, %1172 : i32
    %1180 = arith.select %1178, %1179, %1173 : i32
    %1181 = tpu.dynamic_rotate %975 by %1180 dim 1 : vector<2x256xf32>, i32 -> vector<2x256xf32>
    %c0_i32_577 = arith.constant 0 : i32
    %1182 = arith.subi %c0_i32_577, %1168 : i32
    %1183 = vector.broadcast %1182 : i32 to vector<1x256xi32>
    %1184 = arith.cmpi sge, %28, %1183 : vector<1x256xi32>
    %c15_i32_578 = arith.constant 15 : i32
    %1185 = arith.subi %c15_i32_578, %1168 : i32
    %1186 = vector.broadcast %1185 : i32 to vector<1x256xi32>
    %1187 = arith.cmpi sle, %28, %1186 : vector<1x256xi32>
    %1188 = arith.andi %1184, %1187 : vector<1x256xi1>
    %cst_579 = arith.constant 0.000000e+00 : f32
    %1189 = vector.shape_cast %1188 : vector<1x256xi1> to vector<1x256xi1>
    %1190 = vector.broadcast %1189 : vector<1x256xi1> to vector<2x256xi1>
    %1191 = vector.broadcast %cst_579 : f32 to vector<2x256xf32>
    %1192 = arith.select %1190, %1181, %1191 : vector<2x256xi1>, vector<2x256xf32>
    %c7_i32_580 = arith.constant 7 : i32
    %1193 = arith.muli %c6_i32_567, %c7_i32_580 : i32
    %c4_i32_581 = arith.constant 4 : i32
    %1194 = arith.addi %1193, %c4_i32_581 : i32
    %c0_582 = arith.constant 0 : index
    %1195 = arith.index_cast %1194 : i32 to index
    %1196 = vector.load %arg4[%c0_582, %1195] : memref<2x49xf32, #tpu.memory_space<vmem>>, vector<2x1xf32>
    %1197 = vector.broadcast %1196 : vector<2x1xf32> to vector<2x256xf32>
    %1198 = arith.mulf %1197, %1192 : vector<2x256xf32>
    %1199 = arith.addf %1167, %1198 : vector<2x256xf32>
    %c7_i32_583 = arith.constant 7 : i32
    %c254_i32 = arith.constant 254 : i32
    %1200 = tpu.dynamic_rotate %23 by %c254_i32 dim 1 : vector<2x256xf32>, i32 -> vector<2x256xf32>
    %c-2_i32 = arith.constant -2 : i32
    %1201 = vector.broadcast %c-2_i32 : i32 to vector<1x256xi32>
    %1202 = arith.cmpi sge, %26, %1201 : vector<1x256xi32>
    %c13_i32 = arith.constant 13 : i32
    %1203 = vector.broadcast %c13_i32 : i32 to vector<1x256xi32>
    %1204 = arith.cmpi sle, %26, %1203 : vector<1x256xi32>
    %1205 = arith.andi %1202, %1204 : vector<1x256xi1>
    %cst_584 = arith.constant 0.000000e+00 : f32
    %1206 = vector.shape_cast %1205 : vector<1x256xi1> to vector<1x256xi1>
    %1207 = vector.broadcast %1206 : vector<1x256xi1> to vector<2x256xi1>
    %1208 = vector.broadcast %cst_584 : f32 to vector<2x256xf32>
    %1209 = arith.select %1207, %1200, %1208 : vector<2x256xi1>, vector<2x256xf32>
    %c0_i32_585 = arith.constant 0 : i32
    %c3_i32_586 = arith.constant 3 : i32
    %1210 = arith.subi %c0_i32_585, %c3_i32_586 : i32
    %c0_i32_587 = arith.constant 0 : i32
    %1211 = arith.subi %c0_i32_587, %1210 : i32
    %c16_i32_588 = arith.constant 16 : i32
    %1212 = arith.muli %1211, %c16_i32_588 : i32
    %c256_i32_589 = arith.constant 256 : i32
    %c0_i32_590 = arith.constant 0 : i32
    %1213 = arith.cmpi eq, %c256_i32_589, %c0_i32_590 : i32
    %c1_i32_591 = arith.constant 1 : i32
    %1214 = arith.select %1213, %c1_i32_591, %c256_i32_589 : i32
    %1215 = arith.remsi %1212, %1214 : i32
    %c0_i32_592 = arith.constant 0 : i32
    %1216 = arith.cmpi ne, %1215, %c0_i32_592 : i32
    %c0_i32_593 = arith.constant 0 : i32
    %1217 = arith.cmpi slt, %1215, %c0_i32_593 : i32
    %c0_i32_594 = arith.constant 0 : i32
    %1218 = arith.cmpi slt, %1214, %c0_i32_594 : i32
    %1219 = arith.xori %1217, %1218 : i1
    %1220 = arith.andi %1219, %1216 : i1
    %1221 = arith.addi %1215, %1214 : i32
    %1222 = arith.select %1220, %1221, %1215 : i32
    %1223 = tpu.dynamic_rotate %1209 by %1222 dim 1 : vector<2x256xf32>, i32 -> vector<2x256xf32>
    %c0_i32_595 = arith.constant 0 : i32
    %1224 = arith.subi %c0_i32_595, %1210 : i32
    %1225 = vector.broadcast %1224 : i32 to vector<1x256xi32>
    %1226 = arith.cmpi sge, %28, %1225 : vector<1x256xi32>
    %c15_i32_596 = arith.constant 15 : i32
    %1227 = arith.subi %c15_i32_596, %1210 : i32
    %1228 = vector.broadcast %1227 : i32 to vector<1x256xi32>
    %1229 = arith.cmpi sle, %28, %1228 : vector<1x256xi32>
    %1230 = arith.andi %1226, %1229 : vector<1x256xi1>
    %cst_597 = arith.constant 0.000000e+00 : f32
    %1231 = vector.shape_cast %1230 : vector<1x256xi1> to vector<1x256xi1>
    %1232 = vector.broadcast %1231 : vector<1x256xi1> to vector<2x256xi1>
    %1233 = vector.broadcast %cst_597 : f32 to vector<2x256xf32>
    %1234 = arith.select %1232, %1223, %1233 : vector<2x256xi1>, vector<2x256xf32>
    %c7_i32_598 = arith.constant 7 : i32
    %1235 = arith.muli %c0_i32_585, %c7_i32_598 : i32
    %c5_i32_599 = arith.constant 5 : i32
    %1236 = arith.addi %1235, %c5_i32_599 : i32
    %c0_600 = arith.constant 0 : index
    %1237 = arith.index_cast %1236 : i32 to index
    %1238 = vector.load %arg4[%c0_600, %1237] : memref<2x49xf32, #tpu.memory_space<vmem>>, vector<2x1xf32>
    %1239 = vector.broadcast %1238 : vector<2x1xf32> to vector<2x256xf32>
    %1240 = arith.mulf %1239, %1234 : vector<2x256xf32>
    %1241 = arith.addf %1199, %1240 : vector<2x256xf32>
    %c1_i32_601 = arith.constant 1 : i32
    %c3_i32_602 = arith.constant 3 : i32
    %1242 = arith.subi %c1_i32_601, %c3_i32_602 : i32
    %c0_i32_603 = arith.constant 0 : i32
    %1243 = arith.subi %c0_i32_603, %1242 : i32
    %c16_i32_604 = arith.constant 16 : i32
    %1244 = arith.muli %1243, %c16_i32_604 : i32
    %c256_i32_605 = arith.constant 256 : i32
    %c0_i32_606 = arith.constant 0 : i32
    %1245 = arith.cmpi eq, %c256_i32_605, %c0_i32_606 : i32
    %c1_i32_607 = arith.constant 1 : i32
    %1246 = arith.select %1245, %c1_i32_607, %c256_i32_605 : i32
    %1247 = arith.remsi %1244, %1246 : i32
    %c0_i32_608 = arith.constant 0 : i32
    %1248 = arith.cmpi ne, %1247, %c0_i32_608 : i32
    %c0_i32_609 = arith.constant 0 : i32
    %1249 = arith.cmpi slt, %1247, %c0_i32_609 : i32
    %c0_i32_610 = arith.constant 0 : i32
    %1250 = arith.cmpi slt, %1246, %c0_i32_610 : i32
    %1251 = arith.xori %1249, %1250 : i1
    %1252 = arith.andi %1251, %1248 : i1
    %1253 = arith.addi %1247, %1246 : i32
    %1254 = arith.select %1252, %1253, %1247 : i32
    %1255 = tpu.dynamic_rotate %1209 by %1254 dim 1 : vector<2x256xf32>, i32 -> vector<2x256xf32>
    %c0_i32_611 = arith.constant 0 : i32
    %1256 = arith.subi %c0_i32_611, %1242 : i32
    %1257 = vector.broadcast %1256 : i32 to vector<1x256xi32>
    %1258 = arith.cmpi sge, %28, %1257 : vector<1x256xi32>
    %c15_i32_612 = arith.constant 15 : i32
    %1259 = arith.subi %c15_i32_612, %1242 : i32
    %1260 = vector.broadcast %1259 : i32 to vector<1x256xi32>
    %1261 = arith.cmpi sle, %28, %1260 : vector<1x256xi32>
    %1262 = arith.andi %1258, %1261 : vector<1x256xi1>
    %cst_613 = arith.constant 0.000000e+00 : f32
    %1263 = vector.shape_cast %1262 : vector<1x256xi1> to vector<1x256xi1>
    %1264 = vector.broadcast %1263 : vector<1x256xi1> to vector<2x256xi1>
    %1265 = vector.broadcast %cst_613 : f32 to vector<2x256xf32>
    %1266 = arith.select %1264, %1255, %1265 : vector<2x256xi1>, vector<2x256xf32>
    %c7_i32_614 = arith.constant 7 : i32
    %1267 = arith.muli %c1_i32_601, %c7_i32_614 : i32
    %c5_i32_615 = arith.constant 5 : i32
    %1268 = arith.addi %1267, %c5_i32_615 : i32
    %c0_616 = arith.constant 0 : index
    %1269 = arith.index_cast %1268 : i32 to index
    %1270 = vector.load %arg4[%c0_616, %1269] : memref<2x49xf32, #tpu.memory_space<vmem>>, vector<2x1xf32>
    %1271 = vector.broadcast %1270 : vector<2x1xf32> to vector<2x256xf32>
    %1272 = arith.mulf %1271, %1266 : vector<2x256xf32>
    %1273 = arith.addf %1241, %1272 : vector<2x256xf32>
    %c2_i32_617 = arith.constant 2 : i32
    %c3_i32_618 = arith.constant 3 : i32
    %1274 = arith.subi %c2_i32_617, %c3_i32_618 : i32
    %c0_i32_619 = arith.constant 0 : i32
    %1275 = arith.subi %c0_i32_619, %1274 : i32
    %c16_i32_620 = arith.constant 16 : i32
    %1276 = arith.muli %1275, %c16_i32_620 : i32
    %c256_i32_621 = arith.constant 256 : i32
    %c0_i32_622 = arith.constant 0 : i32
    %1277 = arith.cmpi eq, %c256_i32_621, %c0_i32_622 : i32
    %c1_i32_623 = arith.constant 1 : i32
    %1278 = arith.select %1277, %c1_i32_623, %c256_i32_621 : i32
    %1279 = arith.remsi %1276, %1278 : i32
    %c0_i32_624 = arith.constant 0 : i32
    %1280 = arith.cmpi ne, %1279, %c0_i32_624 : i32
    %c0_i32_625 = arith.constant 0 : i32
    %1281 = arith.cmpi slt, %1279, %c0_i32_625 : i32
    %c0_i32_626 = arith.constant 0 : i32
    %1282 = arith.cmpi slt, %1278, %c0_i32_626 : i32
    %1283 = arith.xori %1281, %1282 : i1
    %1284 = arith.andi %1283, %1280 : i1
    %1285 = arith.addi %1279, %1278 : i32
    %1286 = arith.select %1284, %1285, %1279 : i32
    %1287 = tpu.dynamic_rotate %1209 by %1286 dim 1 : vector<2x256xf32>, i32 -> vector<2x256xf32>
    %c0_i32_627 = arith.constant 0 : i32
    %1288 = arith.subi %c0_i32_627, %1274 : i32
    %1289 = vector.broadcast %1288 : i32 to vector<1x256xi32>
    %1290 = arith.cmpi sge, %28, %1289 : vector<1x256xi32>
    %c15_i32_628 = arith.constant 15 : i32
    %1291 = arith.subi %c15_i32_628, %1274 : i32
    %1292 = vector.broadcast %1291 : i32 to vector<1x256xi32>
    %1293 = arith.cmpi sle, %28, %1292 : vector<1x256xi32>
    %1294 = arith.andi %1290, %1293 : vector<1x256xi1>
    %cst_629 = arith.constant 0.000000e+00 : f32
    %1295 = vector.shape_cast %1294 : vector<1x256xi1> to vector<1x256xi1>
    %1296 = vector.broadcast %1295 : vector<1x256xi1> to vector<2x256xi1>
    %1297 = vector.broadcast %cst_629 : f32 to vector<2x256xf32>
    %1298 = arith.select %1296, %1287, %1297 : vector<2x256xi1>, vector<2x256xf32>
    %c7_i32_630 = arith.constant 7 : i32
    %1299 = arith.muli %c2_i32_617, %c7_i32_630 : i32
    %c5_i32_631 = arith.constant 5 : i32
    %1300 = arith.addi %1299, %c5_i32_631 : i32
    %c0_632 = arith.constant 0 : index
    %1301 = arith.index_cast %1300 : i32 to index
    %1302 = vector.load %arg4[%c0_632, %1301] : memref<2x49xf32, #tpu.memory_space<vmem>>, vector<2x1xf32>
    %1303 = vector.broadcast %1302 : vector<2x1xf32> to vector<2x256xf32>
    %1304 = arith.mulf %1303, %1298 : vector<2x256xf32>
    %1305 = arith.addf %1273, %1304 : vector<2x256xf32>
    %c3_i32_633 = arith.constant 3 : i32
    %c3_i32_634 = arith.constant 3 : i32
    %1306 = arith.subi %c3_i32_633, %c3_i32_634 : i32
    %c0_i32_635 = arith.constant 0 : i32
    %1307 = arith.subi %c0_i32_635, %1306 : i32
    %c16_i32_636 = arith.constant 16 : i32
    %1308 = arith.muli %1307, %c16_i32_636 : i32
    %c256_i32_637 = arith.constant 256 : i32
    %c0_i32_638 = arith.constant 0 : i32
    %1309 = arith.cmpi eq, %c256_i32_637, %c0_i32_638 : i32
    %c1_i32_639 = arith.constant 1 : i32
    %1310 = arith.select %1309, %c1_i32_639, %c256_i32_637 : i32
    %1311 = arith.remsi %1308, %1310 : i32
    %c0_i32_640 = arith.constant 0 : i32
    %1312 = arith.cmpi ne, %1311, %c0_i32_640 : i32
    %c0_i32_641 = arith.constant 0 : i32
    %1313 = arith.cmpi slt, %1311, %c0_i32_641 : i32
    %c0_i32_642 = arith.constant 0 : i32
    %1314 = arith.cmpi slt, %1310, %c0_i32_642 : i32
    %1315 = arith.xori %1313, %1314 : i1
    %1316 = arith.andi %1315, %1312 : i1
    %1317 = arith.addi %1311, %1310 : i32
    %1318 = arith.select %1316, %1317, %1311 : i32
    %1319 = tpu.dynamic_rotate %1209 by %1318 dim 1 : vector<2x256xf32>, i32 -> vector<2x256xf32>
    %c0_i32_643 = arith.constant 0 : i32
    %1320 = arith.subi %c0_i32_643, %1306 : i32
    %1321 = vector.broadcast %1320 : i32 to vector<1x256xi32>
    %1322 = arith.cmpi sge, %28, %1321 : vector<1x256xi32>
    %c15_i32_644 = arith.constant 15 : i32
    %1323 = arith.subi %c15_i32_644, %1306 : i32
    %1324 = vector.broadcast %1323 : i32 to vector<1x256xi32>
    %1325 = arith.cmpi sle, %28, %1324 : vector<1x256xi32>
    %1326 = arith.andi %1322, %1325 : vector<1x256xi1>
    %cst_645 = arith.constant 0.000000e+00 : f32
    %1327 = vector.shape_cast %1326 : vector<1x256xi1> to vector<1x256xi1>
    %1328 = vector.broadcast %1327 : vector<1x256xi1> to vector<2x256xi1>
    %1329 = vector.broadcast %cst_645 : f32 to vector<2x256xf32>
    %1330 = arith.select %1328, %1319, %1329 : vector<2x256xi1>, vector<2x256xf32>
    %c7_i32_646 = arith.constant 7 : i32
    %1331 = arith.muli %c3_i32_633, %c7_i32_646 : i32
    %c5_i32_647 = arith.constant 5 : i32
    %1332 = arith.addi %1331, %c5_i32_647 : i32
    %c0_648 = arith.constant 0 : index
    %1333 = arith.index_cast %1332 : i32 to index
    %1334 = vector.load %arg4[%c0_648, %1333] : memref<2x49xf32, #tpu.memory_space<vmem>>, vector<2x1xf32>
    %1335 = vector.broadcast %1334 : vector<2x1xf32> to vector<2x256xf32>
    %1336 = arith.mulf %1335, %1330 : vector<2x256xf32>
    %1337 = arith.addf %1305, %1336 : vector<2x256xf32>
    %c4_i32_649 = arith.constant 4 : i32
    %c3_i32_650 = arith.constant 3 : i32
    %1338 = arith.subi %c4_i32_649, %c3_i32_650 : i32
    %c0_i32_651 = arith.constant 0 : i32
    %1339 = arith.subi %c0_i32_651, %1338 : i32
    %c16_i32_652 = arith.constant 16 : i32
    %1340 = arith.muli %1339, %c16_i32_652 : i32
    %c256_i32_653 = arith.constant 256 : i32
    %c0_i32_654 = arith.constant 0 : i32
    %1341 = arith.cmpi eq, %c256_i32_653, %c0_i32_654 : i32
    %c1_i32_655 = arith.constant 1 : i32
    %1342 = arith.select %1341, %c1_i32_655, %c256_i32_653 : i32
    %1343 = arith.remsi %1340, %1342 : i32
    %c0_i32_656 = arith.constant 0 : i32
    %1344 = arith.cmpi ne, %1343, %c0_i32_656 : i32
    %c0_i32_657 = arith.constant 0 : i32
    %1345 = arith.cmpi slt, %1343, %c0_i32_657 : i32
    %c0_i32_658 = arith.constant 0 : i32
    %1346 = arith.cmpi slt, %1342, %c0_i32_658 : i32
    %1347 = arith.xori %1345, %1346 : i1
    %1348 = arith.andi %1347, %1344 : i1
    %1349 = arith.addi %1343, %1342 : i32
    %1350 = arith.select %1348, %1349, %1343 : i32
    %1351 = tpu.dynamic_rotate %1209 by %1350 dim 1 : vector<2x256xf32>, i32 -> vector<2x256xf32>
    %c0_i32_659 = arith.constant 0 : i32
    %1352 = arith.subi %c0_i32_659, %1338 : i32
    %1353 = vector.broadcast %1352 : i32 to vector<1x256xi32>
    %1354 = arith.cmpi sge, %28, %1353 : vector<1x256xi32>
    %c15_i32_660 = arith.constant 15 : i32
    %1355 = arith.subi %c15_i32_660, %1338 : i32
    %1356 = vector.broadcast %1355 : i32 to vector<1x256xi32>
    %1357 = arith.cmpi sle, %28, %1356 : vector<1x256xi32>
    %1358 = arith.andi %1354, %1357 : vector<1x256xi1>
    %cst_661 = arith.constant 0.000000e+00 : f32
    %1359 = vector.shape_cast %1358 : vector<1x256xi1> to vector<1x256xi1>
    %1360 = vector.broadcast %1359 : vector<1x256xi1> to vector<2x256xi1>
    %1361 = vector.broadcast %cst_661 : f32 to vector<2x256xf32>
    %1362 = arith.select %1360, %1351, %1361 : vector<2x256xi1>, vector<2x256xf32>
    %c7_i32_662 = arith.constant 7 : i32
    %1363 = arith.muli %c4_i32_649, %c7_i32_662 : i32
    %c5_i32_663 = arith.constant 5 : i32
    %1364 = arith.addi %1363, %c5_i32_663 : i32
    %c0_664 = arith.constant 0 : index
    %1365 = arith.index_cast %1364 : i32 to index
    %1366 = vector.load %arg4[%c0_664, %1365] : memref<2x49xf32, #tpu.memory_space<vmem>>, vector<2x1xf32>
    %1367 = vector.broadcast %1366 : vector<2x1xf32> to vector<2x256xf32>
    %1368 = arith.mulf %1367, %1362 : vector<2x256xf32>
    %1369 = arith.addf %1337, %1368 : vector<2x256xf32>
    %c5_i32_665 = arith.constant 5 : i32
    %c3_i32_666 = arith.constant 3 : i32
    %1370 = arith.subi %c5_i32_665, %c3_i32_666 : i32
    %c0_i32_667 = arith.constant 0 : i32
    %1371 = arith.subi %c0_i32_667, %1370 : i32
    %c16_i32_668 = arith.constant 16 : i32
    %1372 = arith.muli %1371, %c16_i32_668 : i32
    %c256_i32_669 = arith.constant 256 : i32
    %c0_i32_670 = arith.constant 0 : i32
    %1373 = arith.cmpi eq, %c256_i32_669, %c0_i32_670 : i32
    %c1_i32_671 = arith.constant 1 : i32
    %1374 = arith.select %1373, %c1_i32_671, %c256_i32_669 : i32
    %1375 = arith.remsi %1372, %1374 : i32
    %c0_i32_672 = arith.constant 0 : i32
    %1376 = arith.cmpi ne, %1375, %c0_i32_672 : i32
    %c0_i32_673 = arith.constant 0 : i32
    %1377 = arith.cmpi slt, %1375, %c0_i32_673 : i32
    %c0_i32_674 = arith.constant 0 : i32
    %1378 = arith.cmpi slt, %1374, %c0_i32_674 : i32
    %1379 = arith.xori %1377, %1378 : i1
    %1380 = arith.andi %1379, %1376 : i1
    %1381 = arith.addi %1375, %1374 : i32
    %1382 = arith.select %1380, %1381, %1375 : i32
    %1383 = tpu.dynamic_rotate %1209 by %1382 dim 1 : vector<2x256xf32>, i32 -> vector<2x256xf32>
    %c0_i32_675 = arith.constant 0 : i32
    %1384 = arith.subi %c0_i32_675, %1370 : i32
    %1385 = vector.broadcast %1384 : i32 to vector<1x256xi32>
    %1386 = arith.cmpi sge, %28, %1385 : vector<1x256xi32>
    %c15_i32_676 = arith.constant 15 : i32
    %1387 = arith.subi %c15_i32_676, %1370 : i32
    %1388 = vector.broadcast %1387 : i32 to vector<1x256xi32>
    %1389 = arith.cmpi sle, %28, %1388 : vector<1x256xi32>
    %1390 = arith.andi %1386, %1389 : vector<1x256xi1>
    %cst_677 = arith.constant 0.000000e+00 : f32
    %1391 = vector.shape_cast %1390 : vector<1x256xi1> to vector<1x256xi1>
    %1392 = vector.broadcast %1391 : vector<1x256xi1> to vector<2x256xi1>
    %1393 = vector.broadcast %cst_677 : f32 to vector<2x256xf32>
    %1394 = arith.select %1392, %1383, %1393 : vector<2x256xi1>, vector<2x256xf32>
    %c7_i32_678 = arith.constant 7 : i32
    %1395 = arith.muli %c5_i32_665, %c7_i32_678 : i32
    %c5_i32_679 = arith.constant 5 : i32
    %1396 = arith.addi %1395, %c5_i32_679 : i32
    %c0_680 = arith.constant 0 : index
    %1397 = arith.index_cast %1396 : i32 to index
    %1398 = vector.load %arg4[%c0_680, %1397] : memref<2x49xf32, #tpu.memory_space<vmem>>, vector<2x1xf32>
    %1399 = vector.broadcast %1398 : vector<2x1xf32> to vector<2x256xf32>
    %1400 = arith.mulf %1399, %1394 : vector<2x256xf32>
    %1401 = arith.addf %1369, %1400 : vector<2x256xf32>
    %c6_i32_681 = arith.constant 6 : i32
    %c3_i32_682 = arith.constant 3 : i32
    %1402 = arith.subi %c6_i32_681, %c3_i32_682 : i32
    %c0_i32_683 = arith.constant 0 : i32
    %1403 = arith.subi %c0_i32_683, %1402 : i32
    %c16_i32_684 = arith.constant 16 : i32
    %1404 = arith.muli %1403, %c16_i32_684 : i32
    %c256_i32_685 = arith.constant 256 : i32
    %c0_i32_686 = arith.constant 0 : i32
    %1405 = arith.cmpi eq, %c256_i32_685, %c0_i32_686 : i32
    %c1_i32_687 = arith.constant 1 : i32
    %1406 = arith.select %1405, %c1_i32_687, %c256_i32_685 : i32
    %1407 = arith.remsi %1404, %1406 : i32
    %c0_i32_688 = arith.constant 0 : i32
    %1408 = arith.cmpi ne, %1407, %c0_i32_688 : i32
    %c0_i32_689 = arith.constant 0 : i32
    %1409 = arith.cmpi slt, %1407, %c0_i32_689 : i32
    %c0_i32_690 = arith.constant 0 : i32
    %1410 = arith.cmpi slt, %1406, %c0_i32_690 : i32
    %1411 = arith.xori %1409, %1410 : i1
    %1412 = arith.andi %1411, %1408 : i1
    %1413 = arith.addi %1407, %1406 : i32
    %1414 = arith.select %1412, %1413, %1407 : i32
    %1415 = tpu.dynamic_rotate %1209 by %1414 dim 1 : vector<2x256xf32>, i32 -> vector<2x256xf32>
    %c0_i32_691 = arith.constant 0 : i32
    %1416 = arith.subi %c0_i32_691, %1402 : i32
    %1417 = vector.broadcast %1416 : i32 to vector<1x256xi32>
    %1418 = arith.cmpi sge, %28, %1417 : vector<1x256xi32>
    %c15_i32_692 = arith.constant 15 : i32
    %1419 = arith.subi %c15_i32_692, %1402 : i32
    %1420 = vector.broadcast %1419 : i32 to vector<1x256xi32>
    %1421 = arith.cmpi sle, %28, %1420 : vector<1x256xi32>
    %1422 = arith.andi %1418, %1421 : vector<1x256xi1>
    %cst_693 = arith.constant 0.000000e+00 : f32
    %1423 = vector.shape_cast %1422 : vector<1x256xi1> to vector<1x256xi1>
    %1424 = vector.broadcast %1423 : vector<1x256xi1> to vector<2x256xi1>
    %1425 = vector.broadcast %cst_693 : f32 to vector<2x256xf32>
    %1426 = arith.select %1424, %1415, %1425 : vector<2x256xi1>, vector<2x256xf32>
    %c7_i32_694 = arith.constant 7 : i32
    %1427 = arith.muli %c6_i32_681, %c7_i32_694 : i32
    %c5_i32_695 = arith.constant 5 : i32
    %1428 = arith.addi %1427, %c5_i32_695 : i32
    %c0_696 = arith.constant 0 : index
    %1429 = arith.index_cast %1428 : i32 to index
    %1430 = vector.load %arg4[%c0_696, %1429] : memref<2x49xf32, #tpu.memory_space<vmem>>, vector<2x1xf32>
    %1431 = vector.broadcast %1430 : vector<2x1xf32> to vector<2x256xf32>
    %1432 = arith.mulf %1431, %1426 : vector<2x256xf32>
    %1433 = arith.addf %1401, %1432 : vector<2x256xf32>
    %c7_i32_697 = arith.constant 7 : i32
    %c253_i32 = arith.constant 253 : i32
    %1434 = tpu.dynamic_rotate %23 by %c253_i32 dim 1 : vector<2x256xf32>, i32 -> vector<2x256xf32>
    %c-3_i32 = arith.constant -3 : i32
    %1435 = vector.broadcast %c-3_i32 : i32 to vector<1x256xi32>
    %1436 = arith.cmpi sge, %26, %1435 : vector<1x256xi32>
    %c12_i32 = arith.constant 12 : i32
    %1437 = vector.broadcast %c12_i32 : i32 to vector<1x256xi32>
    %1438 = arith.cmpi sle, %26, %1437 : vector<1x256xi32>
    %1439 = arith.andi %1436, %1438 : vector<1x256xi1>
    %cst_698 = arith.constant 0.000000e+00 : f32
    %1440 = vector.shape_cast %1439 : vector<1x256xi1> to vector<1x256xi1>
    %1441 = vector.broadcast %1440 : vector<1x256xi1> to vector<2x256xi1>
    %1442 = vector.broadcast %cst_698 : f32 to vector<2x256xf32>
    %1443 = arith.select %1441, %1434, %1442 : vector<2x256xi1>, vector<2x256xf32>
    %c0_i32_699 = arith.constant 0 : i32
    %c3_i32_700 = arith.constant 3 : i32
    %1444 = arith.subi %c0_i32_699, %c3_i32_700 : i32
    %c0_i32_701 = arith.constant 0 : i32
    %1445 = arith.subi %c0_i32_701, %1444 : i32
    %c16_i32_702 = arith.constant 16 : i32
    %1446 = arith.muli %1445, %c16_i32_702 : i32
    %c256_i32_703 = arith.constant 256 : i32
    %c0_i32_704 = arith.constant 0 : i32
    %1447 = arith.cmpi eq, %c256_i32_703, %c0_i32_704 : i32
    %c1_i32_705 = arith.constant 1 : i32
    %1448 = arith.select %1447, %c1_i32_705, %c256_i32_703 : i32
    %1449 = arith.remsi %1446, %1448 : i32
    %c0_i32_706 = arith.constant 0 : i32
    %1450 = arith.cmpi ne, %1449, %c0_i32_706 : i32
    %c0_i32_707 = arith.constant 0 : i32
    %1451 = arith.cmpi slt, %1449, %c0_i32_707 : i32
    %c0_i32_708 = arith.constant 0 : i32
    %1452 = arith.cmpi slt, %1448, %c0_i32_708 : i32
    %1453 = arith.xori %1451, %1452 : i1
    %1454 = arith.andi %1453, %1450 : i1
    %1455 = arith.addi %1449, %1448 : i32
    %1456 = arith.select %1454, %1455, %1449 : i32
    %1457 = tpu.dynamic_rotate %1443 by %1456 dim 1 : vector<2x256xf32>, i32 -> vector<2x256xf32>
    %c0_i32_709 = arith.constant 0 : i32
    %1458 = arith.subi %c0_i32_709, %1444 : i32
    %1459 = vector.broadcast %1458 : i32 to vector<1x256xi32>
    %1460 = arith.cmpi sge, %28, %1459 : vector<1x256xi32>
    %c15_i32_710 = arith.constant 15 : i32
    %1461 = arith.subi %c15_i32_710, %1444 : i32
    %1462 = vector.broadcast %1461 : i32 to vector<1x256xi32>
    %1463 = arith.cmpi sle, %28, %1462 : vector<1x256xi32>
    %1464 = arith.andi %1460, %1463 : vector<1x256xi1>
    %cst_711 = arith.constant 0.000000e+00 : f32
    %1465 = vector.shape_cast %1464 : vector<1x256xi1> to vector<1x256xi1>
    %1466 = vector.broadcast %1465 : vector<1x256xi1> to vector<2x256xi1>
    %1467 = vector.broadcast %cst_711 : f32 to vector<2x256xf32>
    %1468 = arith.select %1466, %1457, %1467 : vector<2x256xi1>, vector<2x256xf32>
    %c7_i32_712 = arith.constant 7 : i32
    %1469 = arith.muli %c0_i32_699, %c7_i32_712 : i32
    %c6_i32_713 = arith.constant 6 : i32
    %1470 = arith.addi %1469, %c6_i32_713 : i32
    %c0_714 = arith.constant 0 : index
    %1471 = arith.index_cast %1470 : i32 to index
    %1472 = vector.load %arg4[%c0_714, %1471] : memref<2x49xf32, #tpu.memory_space<vmem>>, vector<2x1xf32>
    %1473 = vector.broadcast %1472 : vector<2x1xf32> to vector<2x256xf32>
    %1474 = arith.mulf %1473, %1468 : vector<2x256xf32>
    %1475 = arith.addf %1433, %1474 : vector<2x256xf32>
    %c1_i32_715 = arith.constant 1 : i32
    %c3_i32_716 = arith.constant 3 : i32
    %1476 = arith.subi %c1_i32_715, %c3_i32_716 : i32
    %c0_i32_717 = arith.constant 0 : i32
    %1477 = arith.subi %c0_i32_717, %1476 : i32
    %c16_i32_718 = arith.constant 16 : i32
    %1478 = arith.muli %1477, %c16_i32_718 : i32
    %c256_i32_719 = arith.constant 256 : i32
    %c0_i32_720 = arith.constant 0 : i32
    %1479 = arith.cmpi eq, %c256_i32_719, %c0_i32_720 : i32
    %c1_i32_721 = arith.constant 1 : i32
    %1480 = arith.select %1479, %c1_i32_721, %c256_i32_719 : i32
    %1481 = arith.remsi %1478, %1480 : i32
    %c0_i32_722 = arith.constant 0 : i32
    %1482 = arith.cmpi ne, %1481, %c0_i32_722 : i32
    %c0_i32_723 = arith.constant 0 : i32
    %1483 = arith.cmpi slt, %1481, %c0_i32_723 : i32
    %c0_i32_724 = arith.constant 0 : i32
    %1484 = arith.cmpi slt, %1480, %c0_i32_724 : i32
    %1485 = arith.xori %1483, %1484 : i1
    %1486 = arith.andi %1485, %1482 : i1
    %1487 = arith.addi %1481, %1480 : i32
    %1488 = arith.select %1486, %1487, %1481 : i32
    %1489 = tpu.dynamic_rotate %1443 by %1488 dim 1 : vector<2x256xf32>, i32 -> vector<2x256xf32>
    %c0_i32_725 = arith.constant 0 : i32
    %1490 = arith.subi %c0_i32_725, %1476 : i32
    %1491 = vector.broadcast %1490 : i32 to vector<1x256xi32>
    %1492 = arith.cmpi sge, %28, %1491 : vector<1x256xi32>
    %c15_i32_726 = arith.constant 15 : i32
    %1493 = arith.subi %c15_i32_726, %1476 : i32
    %1494 = vector.broadcast %1493 : i32 to vector<1x256xi32>
    %1495 = arith.cmpi sle, %28, %1494 : vector<1x256xi32>
    %1496 = arith.andi %1492, %1495 : vector<1x256xi1>
    %cst_727 = arith.constant 0.000000e+00 : f32
    %1497 = vector.shape_cast %1496 : vector<1x256xi1> to vector<1x256xi1>
    %1498 = vector.broadcast %1497 : vector<1x256xi1> to vector<2x256xi1>
    %1499 = vector.broadcast %cst_727 : f32 to vector<2x256xf32>
    %1500 = arith.select %1498, %1489, %1499 : vector<2x256xi1>, vector<2x256xf32>
    %c7_i32_728 = arith.constant 7 : i32
    %1501 = arith.muli %c1_i32_715, %c7_i32_728 : i32
    %c6_i32_729 = arith.constant 6 : i32
    %1502 = arith.addi %1501, %c6_i32_729 : i32
    %c0_730 = arith.constant 0 : index
    %1503 = arith.index_cast %1502 : i32 to index
    %1504 = vector.load %arg4[%c0_730, %1503] : memref<2x49xf32, #tpu.memory_space<vmem>>, vector<2x1xf32>
    %1505 = vector.broadcast %1504 : vector<2x1xf32> to vector<2x256xf32>
    %1506 = arith.mulf %1505, %1500 : vector<2x256xf32>
    %1507 = arith.addf %1475, %1506 : vector<2x256xf32>
    %c2_i32_731 = arith.constant 2 : i32
    %c3_i32_732 = arith.constant 3 : i32
    %1508 = arith.subi %c2_i32_731, %c3_i32_732 : i32
    %c0_i32_733 = arith.constant 0 : i32
    %1509 = arith.subi %c0_i32_733, %1508 : i32
    %c16_i32_734 = arith.constant 16 : i32
    %1510 = arith.muli %1509, %c16_i32_734 : i32
    %c256_i32_735 = arith.constant 256 : i32
    %c0_i32_736 = arith.constant 0 : i32
    %1511 = arith.cmpi eq, %c256_i32_735, %c0_i32_736 : i32
    %c1_i32_737 = arith.constant 1 : i32
    %1512 = arith.select %1511, %c1_i32_737, %c256_i32_735 : i32
    %1513 = arith.remsi %1510, %1512 : i32
    %c0_i32_738 = arith.constant 0 : i32
    %1514 = arith.cmpi ne, %1513, %c0_i32_738 : i32
    %c0_i32_739 = arith.constant 0 : i32
    %1515 = arith.cmpi slt, %1513, %c0_i32_739 : i32
    %c0_i32_740 = arith.constant 0 : i32
    %1516 = arith.cmpi slt, %1512, %c0_i32_740 : i32
    %1517 = arith.xori %1515, %1516 : i1
    %1518 = arith.andi %1517, %1514 : i1
    %1519 = arith.addi %1513, %1512 : i32
    %1520 = arith.select %1518, %1519, %1513 : i32
    %1521 = tpu.dynamic_rotate %1443 by %1520 dim 1 : vector<2x256xf32>, i32 -> vector<2x256xf32>
    %c0_i32_741 = arith.constant 0 : i32
    %1522 = arith.subi %c0_i32_741, %1508 : i32
    %1523 = vector.broadcast %1522 : i32 to vector<1x256xi32>
    %1524 = arith.cmpi sge, %28, %1523 : vector<1x256xi32>
    %c15_i32_742 = arith.constant 15 : i32
    %1525 = arith.subi %c15_i32_742, %1508 : i32
    %1526 = vector.broadcast %1525 : i32 to vector<1x256xi32>
    %1527 = arith.cmpi sle, %28, %1526 : vector<1x256xi32>
    %1528 = arith.andi %1524, %1527 : vector<1x256xi1>
    %cst_743 = arith.constant 0.000000e+00 : f32
    %1529 = vector.shape_cast %1528 : vector<1x256xi1> to vector<1x256xi1>
    %1530 = vector.broadcast %1529 : vector<1x256xi1> to vector<2x256xi1>
    %1531 = vector.broadcast %cst_743 : f32 to vector<2x256xf32>
    %1532 = arith.select %1530, %1521, %1531 : vector<2x256xi1>, vector<2x256xf32>
    %c7_i32_744 = arith.constant 7 : i32
    %1533 = arith.muli %c2_i32_731, %c7_i32_744 : i32
    %c6_i32_745 = arith.constant 6 : i32
    %1534 = arith.addi %1533, %c6_i32_745 : i32
    %c0_746 = arith.constant 0 : index
    %1535 = arith.index_cast %1534 : i32 to index
    %1536 = vector.load %arg4[%c0_746, %1535] : memref<2x49xf32, #tpu.memory_space<vmem>>, vector<2x1xf32>
    %1537 = vector.broadcast %1536 : vector<2x1xf32> to vector<2x256xf32>
    %1538 = arith.mulf %1537, %1532 : vector<2x256xf32>
    %1539 = arith.addf %1507, %1538 : vector<2x256xf32>
    %c3_i32_747 = arith.constant 3 : i32
    %c3_i32_748 = arith.constant 3 : i32
    %1540 = arith.subi %c3_i32_747, %c3_i32_748 : i32
    %c0_i32_749 = arith.constant 0 : i32
    %1541 = arith.subi %c0_i32_749, %1540 : i32
    %c16_i32_750 = arith.constant 16 : i32
    %1542 = arith.muli %1541, %c16_i32_750 : i32
    %c256_i32_751 = arith.constant 256 : i32
    %c0_i32_752 = arith.constant 0 : i32
    %1543 = arith.cmpi eq, %c256_i32_751, %c0_i32_752 : i32
    %c1_i32_753 = arith.constant 1 : i32
    %1544 = arith.select %1543, %c1_i32_753, %c256_i32_751 : i32
    %1545 = arith.remsi %1542, %1544 : i32
    %c0_i32_754 = arith.constant 0 : i32
    %1546 = arith.cmpi ne, %1545, %c0_i32_754 : i32
    %c0_i32_755 = arith.constant 0 : i32
    %1547 = arith.cmpi slt, %1545, %c0_i32_755 : i32
    %c0_i32_756 = arith.constant 0 : i32
    %1548 = arith.cmpi slt, %1544, %c0_i32_756 : i32
    %1549 = arith.xori %1547, %1548 : i1
    %1550 = arith.andi %1549, %1546 : i1
    %1551 = arith.addi %1545, %1544 : i32
    %1552 = arith.select %1550, %1551, %1545 : i32
    %1553 = tpu.dynamic_rotate %1443 by %1552 dim 1 : vector<2x256xf32>, i32 -> vector<2x256xf32>
    %c0_i32_757 = arith.constant 0 : i32
    %1554 = arith.subi %c0_i32_757, %1540 : i32
    %1555 = vector.broadcast %1554 : i32 to vector<1x256xi32>
    %1556 = arith.cmpi sge, %28, %1555 : vector<1x256xi32>
    %c15_i32_758 = arith.constant 15 : i32
    %1557 = arith.subi %c15_i32_758, %1540 : i32
    %1558 = vector.broadcast %1557 : i32 to vector<1x256xi32>
    %1559 = arith.cmpi sle, %28, %1558 : vector<1x256xi32>
    %1560 = arith.andi %1556, %1559 : vector<1x256xi1>
    %cst_759 = arith.constant 0.000000e+00 : f32
    %1561 = vector.shape_cast %1560 : vector<1x256xi1> to vector<1x256xi1>
    %1562 = vector.broadcast %1561 : vector<1x256xi1> to vector<2x256xi1>
    %1563 = vector.broadcast %cst_759 : f32 to vector<2x256xf32>
    %1564 = arith.select %1562, %1553, %1563 : vector<2x256xi1>, vector<2x256xf32>
    %c7_i32_760 = arith.constant 7 : i32
    %1565 = arith.muli %c3_i32_747, %c7_i32_760 : i32
    %c6_i32_761 = arith.constant 6 : i32
    %1566 = arith.addi %1565, %c6_i32_761 : i32
    %c0_762 = arith.constant 0 : index
    %1567 = arith.index_cast %1566 : i32 to index
    %1568 = vector.load %arg4[%c0_762, %1567] : memref<2x49xf32, #tpu.memory_space<vmem>>, vector<2x1xf32>
    %1569 = vector.broadcast %1568 : vector<2x1xf32> to vector<2x256xf32>
    %1570 = arith.mulf %1569, %1564 : vector<2x256xf32>
    %1571 = arith.addf %1539, %1570 : vector<2x256xf32>
    %c4_i32_763 = arith.constant 4 : i32
    %c3_i32_764 = arith.constant 3 : i32
    %1572 = arith.subi %c4_i32_763, %c3_i32_764 : i32
    %c0_i32_765 = arith.constant 0 : i32
    %1573 = arith.subi %c0_i32_765, %1572 : i32
    %c16_i32_766 = arith.constant 16 : i32
    %1574 = arith.muli %1573, %c16_i32_766 : i32
    %c256_i32_767 = arith.constant 256 : i32
    %c0_i32_768 = arith.constant 0 : i32
    %1575 = arith.cmpi eq, %c256_i32_767, %c0_i32_768 : i32
    %c1_i32_769 = arith.constant 1 : i32
    %1576 = arith.select %1575, %c1_i32_769, %c256_i32_767 : i32
    %1577 = arith.remsi %1574, %1576 : i32
    %c0_i32_770 = arith.constant 0 : i32
    %1578 = arith.cmpi ne, %1577, %c0_i32_770 : i32
    %c0_i32_771 = arith.constant 0 : i32
    %1579 = arith.cmpi slt, %1577, %c0_i32_771 : i32
    %c0_i32_772 = arith.constant 0 : i32
    %1580 = arith.cmpi slt, %1576, %c0_i32_772 : i32
    %1581 = arith.xori %1579, %1580 : i1
    %1582 = arith.andi %1581, %1578 : i1
    %1583 = arith.addi %1577, %1576 : i32
    %1584 = arith.select %1582, %1583, %1577 : i32
    %1585 = tpu.dynamic_rotate %1443 by %1584 dim 1 : vector<2x256xf32>, i32 -> vector<2x256xf32>
    %c0_i32_773 = arith.constant 0 : i32
    %1586 = arith.subi %c0_i32_773, %1572 : i32
    %1587 = vector.broadcast %1586 : i32 to vector<1x256xi32>
    %1588 = arith.cmpi sge, %28, %1587 : vector<1x256xi32>
    %c15_i32_774 = arith.constant 15 : i32
    %1589 = arith.subi %c15_i32_774, %1572 : i32
    %1590 = vector.broadcast %1589 : i32 to vector<1x256xi32>
    %1591 = arith.cmpi sle, %28, %1590 : vector<1x256xi32>
    %1592 = arith.andi %1588, %1591 : vector<1x256xi1>
    %cst_775 = arith.constant 0.000000e+00 : f32
    %1593 = vector.shape_cast %1592 : vector<1x256xi1> to vector<1x256xi1>
    %1594 = vector.broadcast %1593 : vector<1x256xi1> to vector<2x256xi1>
    %1595 = vector.broadcast %cst_775 : f32 to vector<2x256xf32>
    %1596 = arith.select %1594, %1585, %1595 : vector<2x256xi1>, vector<2x256xf32>
    %c7_i32_776 = arith.constant 7 : i32
    %1597 = arith.muli %c4_i32_763, %c7_i32_776 : i32
    %c6_i32_777 = arith.constant 6 : i32
    %1598 = arith.addi %1597, %c6_i32_777 : i32
    %c0_778 = arith.constant 0 : index
    %1599 = arith.index_cast %1598 : i32 to index
    %1600 = vector.load %arg4[%c0_778, %1599] : memref<2x49xf32, #tpu.memory_space<vmem>>, vector<2x1xf32>
    %1601 = vector.broadcast %1600 : vector<2x1xf32> to vector<2x256xf32>
    %1602 = arith.mulf %1601, %1596 : vector<2x256xf32>
    %1603 = arith.addf %1571, %1602 : vector<2x256xf32>
    %c5_i32_779 = arith.constant 5 : i32
    %c3_i32_780 = arith.constant 3 : i32
    %1604 = arith.subi %c5_i32_779, %c3_i32_780 : i32
    %c0_i32_781 = arith.constant 0 : i32
    %1605 = arith.subi %c0_i32_781, %1604 : i32
    %c16_i32_782 = arith.constant 16 : i32
    %1606 = arith.muli %1605, %c16_i32_782 : i32
    %c256_i32_783 = arith.constant 256 : i32
    %c0_i32_784 = arith.constant 0 : i32
    %1607 = arith.cmpi eq, %c256_i32_783, %c0_i32_784 : i32
    %c1_i32_785 = arith.constant 1 : i32
    %1608 = arith.select %1607, %c1_i32_785, %c256_i32_783 : i32
    %1609 = arith.remsi %1606, %1608 : i32
    %c0_i32_786 = arith.constant 0 : i32
    %1610 = arith.cmpi ne, %1609, %c0_i32_786 : i32
    %c0_i32_787 = arith.constant 0 : i32
    %1611 = arith.cmpi slt, %1609, %c0_i32_787 : i32
    %c0_i32_788 = arith.constant 0 : i32
    %1612 = arith.cmpi slt, %1608, %c0_i32_788 : i32
    %1613 = arith.xori %1611, %1612 : i1
    %1614 = arith.andi %1613, %1610 : i1
    %1615 = arith.addi %1609, %1608 : i32
    %1616 = arith.select %1614, %1615, %1609 : i32
    %1617 = tpu.dynamic_rotate %1443 by %1616 dim 1 : vector<2x256xf32>, i32 -> vector<2x256xf32>
    %c0_i32_789 = arith.constant 0 : i32
    %1618 = arith.subi %c0_i32_789, %1604 : i32
    %1619 = vector.broadcast %1618 : i32 to vector<1x256xi32>
    %1620 = arith.cmpi sge, %28, %1619 : vector<1x256xi32>
    %c15_i32_790 = arith.constant 15 : i32
    %1621 = arith.subi %c15_i32_790, %1604 : i32
    %1622 = vector.broadcast %1621 : i32 to vector<1x256xi32>
    %1623 = arith.cmpi sle, %28, %1622 : vector<1x256xi32>
    %1624 = arith.andi %1620, %1623 : vector<1x256xi1>
    %cst_791 = arith.constant 0.000000e+00 : f32
    %1625 = vector.shape_cast %1624 : vector<1x256xi1> to vector<1x256xi1>
    %1626 = vector.broadcast %1625 : vector<1x256xi1> to vector<2x256xi1>
    %1627 = vector.broadcast %cst_791 : f32 to vector<2x256xf32>
    %1628 = arith.select %1626, %1617, %1627 : vector<2x256xi1>, vector<2x256xf32>
    %c7_i32_792 = arith.constant 7 : i32
    %1629 = arith.muli %c5_i32_779, %c7_i32_792 : i32
    %c6_i32_793 = arith.constant 6 : i32
    %1630 = arith.addi %1629, %c6_i32_793 : i32
    %c0_794 = arith.constant 0 : index
    %1631 = arith.index_cast %1630 : i32 to index
    %1632 = vector.load %arg4[%c0_794, %1631] : memref<2x49xf32, #tpu.memory_space<vmem>>, vector<2x1xf32>
    %1633 = vector.broadcast %1632 : vector<2x1xf32> to vector<2x256xf32>
    %1634 = arith.mulf %1633, %1628 : vector<2x256xf32>
    %1635 = arith.addf %1603, %1634 : vector<2x256xf32>
    %c6_i32_795 = arith.constant 6 : i32
    %c3_i32_796 = arith.constant 3 : i32
    %1636 = arith.subi %c6_i32_795, %c3_i32_796 : i32
    %c0_i32_797 = arith.constant 0 : i32
    %1637 = arith.subi %c0_i32_797, %1636 : i32
    %c16_i32_798 = arith.constant 16 : i32
    %1638 = arith.muli %1637, %c16_i32_798 : i32
    %c256_i32_799 = arith.constant 256 : i32
    %c0_i32_800 = arith.constant 0 : i32
    %1639 = arith.cmpi eq, %c256_i32_799, %c0_i32_800 : i32
    %c1_i32_801 = arith.constant 1 : i32
    %1640 = arith.select %1639, %c1_i32_801, %c256_i32_799 : i32
    %1641 = arith.remsi %1638, %1640 : i32
    %c0_i32_802 = arith.constant 0 : i32
    %1642 = arith.cmpi ne, %1641, %c0_i32_802 : i32
    %c0_i32_803 = arith.constant 0 : i32
    %1643 = arith.cmpi slt, %1641, %c0_i32_803 : i32
    %c0_i32_804 = arith.constant 0 : i32
    %1644 = arith.cmpi slt, %1640, %c0_i32_804 : i32
    %1645 = arith.xori %1643, %1644 : i1
    %1646 = arith.andi %1645, %1642 : i1
    %1647 = arith.addi %1641, %1640 : i32
    %1648 = arith.select %1646, %1647, %1641 : i32
    %1649 = tpu.dynamic_rotate %1443 by %1648 dim 1 : vector<2x256xf32>, i32 -> vector<2x256xf32>
    %c0_i32_805 = arith.constant 0 : i32
    %1650 = arith.subi %c0_i32_805, %1636 : i32
    %1651 = vector.broadcast %1650 : i32 to vector<1x256xi32>
    %1652 = arith.cmpi sge, %28, %1651 : vector<1x256xi32>
    %c15_i32_806 = arith.constant 15 : i32
    %1653 = arith.subi %c15_i32_806, %1636 : i32
    %1654 = vector.broadcast %1653 : i32 to vector<1x256xi32>
    %1655 = arith.cmpi sle, %28, %1654 : vector<1x256xi32>
    %1656 = arith.andi %1652, %1655 : vector<1x256xi1>
    %cst_807 = arith.constant 0.000000e+00 : f32
    %1657 = vector.shape_cast %1656 : vector<1x256xi1> to vector<1x256xi1>
    %1658 = vector.broadcast %1657 : vector<1x256xi1> to vector<2x256xi1>
    %1659 = vector.broadcast %cst_807 : f32 to vector<2x256xf32>
    %1660 = arith.select %1658, %1649, %1659 : vector<2x256xi1>, vector<2x256xf32>
    %c7_i32_808 = arith.constant 7 : i32
    %1661 = arith.muli %c6_i32_795, %c7_i32_808 : i32
    %c6_i32_809 = arith.constant 6 : i32
    %1662 = arith.addi %1661, %c6_i32_809 : i32
    %c0_810 = arith.constant 0 : index
    %1663 = arith.index_cast %1662 : i32 to index
    %1664 = vector.load %arg4[%c0_810, %1663] : memref<2x49xf32, #tpu.memory_space<vmem>>, vector<2x1xf32>
    %1665 = vector.broadcast %1664 : vector<2x1xf32> to vector<2x256xf32>
    %1666 = arith.mulf %1665, %1660 : vector<2x256xf32>
    %1667 = arith.addf %1635, %1666 : vector<2x256xf32>
    %c7_i32_811 = arith.constant 7 : i32
    %cst_812 = arith.constant dense<0.000000e+00> : vector<256xf32>
    %1668 = vector.multi_reduction <add>, %1667, %cst_812 [0] : vector<2x256xf32> to vector<256xf32>
    %1669 = vector.shape_cast %1668 : vector<256xf32> to vector<1x256xf32>
    %1670 = arith.negf %1669 : vector<1x256xf32>
    %1671 = math.exp %1670 : vector<1x256xf32>
    %cst_813 = arith.constant 1.000000e+00 : f32
    %1672 = vector.broadcast %cst_813 : f32 to vector<1x256xf32>
    %1673 = arith.addf %1672, %1671 : vector<1x256xf32>
    %1674 = arith.divf %1672, %1673 : vector<1x256xf32>
    %1675 = vector.broadcast %1674 : vector<1x256xf32> to vector<8x256xf32>
    %1676 = arith.mulf %16, %1675 : vector<8x256xf32>
    %c0_814 = arith.constant 0 : index
    %c0_815 = arith.constant 0 : index
    %c0_816 = arith.constant 0 : index
    %1677 = vector.load %arg5[%c0_814, %c0_815, %c0_816] : memref<1x8x256xf32, #tpu.memory_space<vmem>>, vector<1x8x256xf32>
    %1678 = vector.shape_cast %1677 : vector<1x8x256xf32> to vector<8x256xf32>
    %1679 = vector.shape_cast %1676 : vector<8x256xf32> to vector<1x8x256xf32>
    tpu.vector_store %arg5[%c0_814, %c0_815, %c0_816], %1679 {strides = array<i32>} : memref<1x8x256xf32, #tpu.memory_space<vmem>>, vector<1x8x256xf32>,
    return
  }
  func.func @transform_0(%arg0: i32) -> (i32, i32, i32) {
    %c0_i32 = arith.constant 0 : i32
    %c0_i32_0 = arith.constant 0 : i32
    %c0_i32_1 = arith.constant 0 : i32
    return %arg0, %c0_i32, %c0_i32_0 : i32, i32, i32
  }
  func.func @transform_1(%arg0: i32) -> (i32, i32) {
    %c0_i32 = arith.constant 0 : i32
    %c0_i32_0 = arith.constant 0 : i32
    %c0_i32_1 = arith.constant 0 : i32
    return %c0_i32, %c0_i32_0 : i32, i32
  }
  func.func @transform_2(%arg0: i32) -> (i32, i32) {
    %c0_i32 = arith.constant 0 : i32
    %c0_i32_0 = arith.constant 0 : i32
    %c0_i32_1 = arith.constant 0 : i32
    return %c0_i32, %c0_i32_0 : i32, i32
  }
  func.func @transform_3(%arg0: i32) -> (i32, i32) {
    %c0_i32 = arith.constant 0 : i32
    %c0_i32_0 = arith.constant 0 : i32
    %c0_i32_1 = arith.constant 0 : i32
    return %c0_i32, %c0_i32_0 : i32, i32
  }
  func.func @transform_4(%arg0: i32) -> (i32, i32, i32) {
    %c0_i32 = arith.constant 0 : i32
    %c0_i32_0 = arith.constant 0 : i32
    %c0_i32_1 = arith.constant 0 : i32
    return %arg0, %c0_i32, %c0_i32_0 : i32, i32, i32
  }
}

</mosaic_0001>

<llo_original>
// kernel: tpu_custom_call.1
$region0: #{tpu_custom_call.1}
  #allocation0 [shape = 'u32[]', space=smem, size = 0x4, offset = 0x4, fixed_abs, tag = 'smem constant byte address 0x4 - core index']
  #allocation1 [shape = 'u32[144,128]{1,0:T(1,128)}', space=vmem, size = 0x12000, scoped, tag = 'internal scratch']
  %s0 = inlined_call_operand.hbm [shape: f32[2,8,256], index: 0, kind: input, shape index: {}]
  %s1 = inlined_call_operand.vmem [shape: f32[8,8], index: 1, kind: input, shape index: {}]
  %s2 = inlined_call_operand.vmem [shape: f32[8,1], index: 2, kind: input, shape index: {}]
  %s3 = inlined_call_operand.vmem [shape: f32[2,49], index: 3, kind: input, shape index: {}]
  %s4 = inlined_call_operand.hbm [shape: f32[2,8,256], index: 4, kind: output, shape index: {}]
  %s5 = sld [smem:[#allocation0]]
  $region53: #{tpu_custom_call.1} parent=0
    _
  %s7 = ssub.s32 1, %s5
  %s8 = scalar_select 0, %s7, %s5
  $region1: #{tpu_custom_call.1} parent=0
    #allocation2 [shape = 'u8[16384]{0}', space=vmem, size = 0x4000, scoped, tag = 'input window, operand 0']
    #allocation3 [shape = 's32[2]{0}', space=sflag, size = 0x8, scoped, tag = 'scoped memory for tpu_custom_call.1']
    #allocation4 [shape = 's32[2]{0}', space=sflag, size = 0x8, scoped, tag = 'scoped memory for tpu_custom_call.1']
    #allocation5 [shape = 'u8[16384]{0}', space=vmem, size = 0x4000, scoped, tag = 'output window, operand 0']
    %9 = vsyncpa [#allocation3], 0
    %s10 = scalar_lea.sflag [#allocation3], 1
    %11 = vsyncpa %s10, 0
    %12 = vsyncpa [#allocation4], 0
    %s13 = scalar_lea.sflag [#allocation4], 1
    %14 = vsyncpa %s13, 0
    loop: start=0, step=1, limit=4
    $region2: #{tpu_custom_call.1} parent=1 // loop_pre_header
      _
    $region3: #{tpu_custom_call.1} parent=1 // loop_header
      %s16 = sphi 0, %s20
      %p17 = scmp.ge.s32.totalorder %s16, 4
      %s26 = sphi 0, %s28
      %s29 = sphi 0, %s26
      %s30 = sphi 0, %s29
      %s46 = sphi 0, %s30
      %s50 = sphi 0, %s50
      %s52 = sphi 0, %s50
      %s53 = sphi 0, %s52
      %s67 = sphi 0, %s53
      %s71 = sphi 0, %s71
      %s73 = sphi 0, %s71
      %s74 = sphi 0, %s73
      %s88 = sphi 0, %s74
      %s92 = sphi 0, %s92
      %s94 = sphi 0, %s92
      %s95 = sphi 0, %s94
      %s109 = sphi 0, %s95
      %s115 = sphi 0, %s117
      %s118 = sphi 0, %s115
      %s119 = sphi 0, %s118
      %s135 = sphi 0, %s119
    $region4: #{tpu_custom_call.1} parent=1 // loop_header_branch
      %19 = sbr.rel (%p17) target = $region8
    $region5: #{tpu_custom_call.1} parent=1 // loop_body
      %s21 = ssub.s32 %s16, 1
      %s22 = ssub.s32 %s16, 2
      %s23 = sadd.s32 %s16, 1
      %s24 = ssub.s32 %s16, %s23
      %p25 = scmp.eq.s32.totalorder %s24, 0
      %s27 = sadd.s32 %s26, 1
      %s28 = scalar_select %p25, %s26, %s27
      %p31 = pneg %p25
      %p32 = scmp.eq.s32.totalorder %s16, 1
      %p33 = por %p31, %p32
      %p34 = scmp.ne.s32.totalorder %s26, %s29
      %p35 = scmp.eq.s32.totalorder %s16, 0
      %p36 = por %p34, %p35
      %p37 = scmp.ne.s32.totalorder %s26, %s29
      %p38 = scmp.eq.s32.totalorder %s21, 1
      %p39 = por %p37, %p38
      %p40 = scmp.ne.s32.totalorder %s29, %s30
      %p41 = scmp.eq.s32.totalorder %s21, 0
      %p42 = por %p40, %p41
      %p43 = scmp.ne.s32.totalorder %s29, %s30
      %p44 = scmp.eq.s32.totalorder %s22, 1
      %p45 = por %p43, %p44
      %p47 = scmp.ne.s32.totalorder %s30, %s46
      %p48 = scmp.eq.s32.totalorder %s22, 0
      %p49 = por %p47, %p48
      %s51 = sadd.s32 %s50, 1
      %p54 = scmp.eq.s32.totalorder %s16, 1
      %p55 = scmp.ne.s32.totalorder %s50, %s52
      %p56 = scmp.eq.s32.totalorder %s16, 0
      %p57 = por %p55, %p56
      %p58 = scmp.ne.s32.totalorder %s50, %s52
      %p59 = scmp.eq.s32.totalorder %s21, 1
      %p60 = por %p58, %p59
      %p61 = scmp.ne.s32.totalorder %s52, %s53
      %p62 = scmp.eq.s32.totalorder %s21, 0
      %p63 = por %p61, %p62
      %p64 = scmp.ne.s32.totalorder %s52, %s53
      %p65 = scmp.eq.s32.totalorder %s22, 1
      %p66 = por %p64, %p65
      %p68 = scmp.ne.s32.totalorder %s53, %s67
      %p69 = scmp.eq.s32.totalorder %s22, 0
      %p70 = por %p68, %p69
      %s72 = sadd.s32 %s71, 1
      %p75 = scmp.eq.s32.totalorder %s16, 1
      %p76 = scmp.ne.s32.totalorder %s71, %s73
      %p77 = scmp.eq.s32.totalorder %s16, 0
      %p78 = por %p76, %p77
      %p79 = scmp.ne.s32.totalorder %s71, %s73
      %p80 = scmp.eq.s32.totalorder %s21, 1
      %p81 = por %p79, %p80
      %p82 = scmp.ne.s32.totalorder %s73, %s74
      %p83 = scmp.eq.s32.totalorder %s21, 0
      %p84 = por %p82, %p83
      %p85 = scmp.ne.s32.totalorder %s73, %s74
      %p86 = scmp.eq.s32.totalorder %s22, 1
      %p87 = por %p85, %p86
      %p89 = scmp.ne.s32.totalorder %s74, %s88
      %p90 = scmp.eq.s32.totalorder %s22, 0
      %p91 = por %p89, %p90
      %s93 = sadd.s32 %s92, 1
      %p96 = scmp.eq.s32.totalorder %s16, 1
      %p97 = scmp.ne.s32.totalorder %s92, %s94
      %p98 = scmp.eq.s32.totalorder %s16, 0
      %p99 = por %p97, %p98
      %p100 = scmp.ne.s32.totalorder %s92, %s94
      %p101 = scmp.eq.s32.totalorder %s21, 1
      %p102 = por %p100, %p101
      %p103 = scmp.ne.s32.totalorder %s94, %s95
      %p104 = scmp.eq.s32.totalorder %s21, 0
      %p105 = por %p103, %p104
      %p106 = scmp.ne.s32.totalorder %s94, %s95
      %p107 = scmp.eq.s32.totalorder %s22, 1
      %p108 = por %p106, %p107
      %p110 = scmp.ne.s32.totalorder %s95, %s109
      %p111 = scmp.eq.s32.totalorder %s22, 0
      %p112 = por %p110, %p111
      %s113 = ssub.s32 %s16, %s23
      %p114 = scmp.eq.s32.totalorder %s113, 0
      %s116 = sadd.s32 %s115, 1
      %s117 = scalar_select %p114, %s115, %s116
      %p120 = pneg %p114
      %p121 = scmp.eq.s32.totalorder %s16, 1
      %p122 = por %p120, %p121
      %p123 = scmp.ne.s32.totalorder %s115, %s118
      %p124 = scmp.eq.s32.totalorder %s16, 0
      %p125 = por %p123, %p124
      %p126 = scmp.ne.s32.totalorder %s115, %s118
      %p127 = scmp.eq.s32.totalorder %s21, 1
      %p128 = por %p126, %p127
      %p129 = scmp.ne.s32.totalorder %s118, %s119
      %p130 = scmp.eq.s32.totalorder %s21, 0
      %p131 = por %p129, %p130
      %p132 = scmp.ne.s32.totalorder %s118, %s119
      %p133 = scmp.eq.s32.totalorder %s22, 1
      %p134 = por %p132, %p133
      %p136 = scmp.ne.s32.totalorder %s119, %s135
      %p137 = scmp.eq.s32.totalorder %s22, 0
      %p138 = por %p136, %p137
      %p139 = scmp.le.s32.totalorder 1, %s16
      %p140 = scmp.lt.s32.totalorder %s16, 3
      %p141 = pnand %p139, %p140
      %p142 = pneg %p141
      // Predicated region
      $region9: #{tpu_custom_call.1} parent=5 // pred_check
        _
      $region10: #{tpu_custom_call.1} parent=5 // pred_check_branch
        %144 = sbr.rel (%p141) target = $region12
      $region11: #{tpu_custom_call.1} parent=5 // pred_region
        %s145 = ssub.s32 %s16, 1
        // Predicated region
        $region13: #{tpu_custom_call.1} parent=11 // pred_check
          %p146 = pneg %p63
        $region14: #{tpu_custom_call.1} parent=11 // pred_check_branch
          %148 = sbr.rel (%p146) target = $region16
        $region15: #{tpu_custom_call.1} parent=11 // pred_region
          _
        $region16: #{tpu_custom_call.1} parent=11 // pred_fallthru
          _
        // Predicated region
        $region17: #{tpu_custom_call.1} parent=11 // pred_check
          %p149 = pneg %p84
        $region18: #{tpu_custom_call.1} parent=11 // pred_check_branch
          %151 = sbr.rel (%p149) target = $region20
        $region19: #{tpu_custom_call.1} parent=11 // pred_region
          _
        $region20: #{tpu_custom_call.1} parent=11 // pred_fallthru
          _
        // Predicated region
        $region21: #{tpu_custom_call.1} parent=11 // pred_check
          %p152 = pneg %p105
        $region22: #{tpu_custom_call.1} parent=11 // pred_check_branch
          %154 = sbr.rel (%p152) target = $region24
        $region23: #{tpu_custom_call.1} parent=11 // pred_region
          _
        $region24: #{tpu_custom_call.1} parent=11 // pred_fallthru
          _
      $region12: #{tpu_custom_call.1} parent=5 // pred_fallthru
        _
      %p155 = scmp.lt.s32.totalorder %s16, 2
      // Predicated region
      $region25: #{tpu_custom_call.1} parent=5 // pred_check
        %p156 = pneg %p155
      $region26: #{tpu_custom_call.1} parent=5 // pred_check_branch
        %158 = sbr.rel (%p156) target = $region28
      $region27: #{tpu_custom_call.1} parent=5 // pred_region
        // Predicated region
        $region29: #{tpu_custom_call.1} parent=27 // pred_check
          %p159 = pneg %p36
        $region30: #{tpu_custom_call.1} parent=27 // pred_check_branch
          %161 = sbr.rel (%p159) target = $region32
        $region31: #{tpu_custom_call.1} parent=27 // pred_region
          %s162 = sand.u32 %s26, 1
          %s163 = scalar_lea.sflag [#allocation3], %s162
          %s164 = sand.u32 %s26, 1
          %s165 = smul.addr %s164, 16
          %s166 = scalar_lea.vmem [#allocation2], %s165
          %s168 = ssub.s32 256, 256
          %169 = vsyncadd %s163, %s168
          %s170 = smul.addr %s16, 2
          %s171 = smul.addr %s170, 128
          %s172 = scalar_lea.hbm %s0, %s171
          %s174 = sshll.u32 %s166, 4
          %s175 = int_to_ptr.vmem [resolvable:$true] %s174
          %177 = dma.hbm_to_vmem [thread:$0]  %s172, 256, %s175, %s163
        $region32: #{tpu_custom_call.1} parent=27 // pred_fallthru
          _
      $region28: #{tpu_custom_call.1} parent=5 // pred_fallthru
        _
      %p178 = scmp.le.s32.totalorder 1, %s16
      %p179 = scmp.lt.s32.totalorder %s16, 3
      %p180 = pnand %p178, %p179
      %p181 = pneg %p180
      // Predicated region
      $region33: #{tpu_custom_call.1} parent=5 // pred_check
        _
      $region34: #{tpu_custom_call.1} parent=5 // pred_check_branch
        %183 = sbr.rel (%p180) target = $region36
      $region35: #{tpu_custom_call.1} parent=5 // pred_region
        %s184 = ssub.s32 %s16, 1
        %s185 = sand.u32 %s29, 1
        %s186 = scalar_lea.sflag [#allocation3], %s185
        %s187 = sand.u32 %s29, 1
        %s188 = smul.addr %s187, 16
        %s189 = scalar_lea.vmem [#allocation2], %s188
        // Predicated region
        $region37: #{tpu_custom_call.1} parent=35 // pred_check
          %p190 = pneg %p42
        $region38: #{tpu_custom_call.1} parent=35 // pred_check_branch
          %192 = sbr.rel (%p190) target = $region40
        $region39: #{tpu_custom_call.1} parent=35 // pred_region
          %193 = dma.done %s186, 256
        $region40: #{tpu_custom_call.1} parent=35 // pred_fallthru
          _
        %s194 = sand.u32 %s29, 1
        %s195 = scalar_lea.sflag [#allocation3], %s194
        %s196 = sand.u32 %s29, 1
        %s197 = smul.addr %s196, 16
        %s198 = scalar_lea.vmem [#allocation2], %s197
        %p199 = pneg %p42
        %p200 = pneg %p39
        %p201 = pneg %p63
        %p202 = pneg %p60
        %p203 = pneg %p84
        %p204 = pneg %p81
        %p205 = pneg %p105
        %p206 = pneg %p102
        %p207 = pneg %p131
        %p208 = pneg %p128
        %s209 = sand.u32 %s118, 1
        %s210 = scalar_lea.sflag [#allocation4], %s209
        %s211 = sand.u32 %s118, 1
        %s212 = smul.addr %s211, 16
        %s213 = scalar_lea.vmem [#allocation5], %s212
        %v214 = vld [vmem:[%s189] sm:$0xff]
        %v215 = vld [vmem:[%s189 + $0x8] sm:$0xff]
        %v216 = vadd.f32 %v214, %v215
        %217 = vadd.xlane.f32.xlu0 %v216
        %v218 = vpop.xlane.xlu0 %217
        %v219 = vrcp.pop 256.0
        %v220 = vmul.f32 %v218, %v219
        %v221 = vld [vmem:[%s1] sm:$0xff]
        %v222 = vld [vmem:[%s2] sm:$0xff]
        %vm223 = vcmask 64512
        %v225 = vsel %vm223, %v221, 0
        %227 = vmatprep.subr.mxu0 0.0
        %228 = vmatpush1.msra.mxu0 %v220
        %229 = vmatprep.subr.mxu0 0.0
        %230 = vmatpush1.msra.mxu0 0.0
        %231 = vmatprep.subr.mxu0 0.0
        %232 = vmatpush1.msra.mxu0 0.0
        %233 = vmatprep.subr.mxu0 0.0
        %234 = vmatpush1.msra.mxu0 0.0
        %235 = vmatprep.subr.mxu0 0.0
        %236 = vmatpush1.msra.mxu0 0.0
        %237 = vmatprep.subr.mxu0 0.0
        %238 = vmatpush1.msra.mxu0 0.0
        %239 = vmatprep.subr.mxu0 0.0
        %240 = vmatpush1.msra.mxu0 0.0
        %241 = vmatprep.subr.mxu0 0.0
        %242 = vmatpush1.msra.mxu0 0.0
        %243 = vmatprep.subr.mxu0 0.0
        %244 = vmatpush1.msra.mxu0 0.0
        %245 = vmatprep.subr.mxu0 0.0
        %246 = vmatpush1.msra.mxu0 0.0
        %247 = vmatprep.subr.mxu0 0.0
        %248 = vmatpush1.msra.mxu0 0.0
        %249 = vmatprep.subr.mxu0 0.0
        %250 = vmatpush1.msra.mxu0 0.0
        %251 = vmatprep.subr.mxu0 0.0
        %252 = vmatpush1.msra.mxu0 0.0
        %253 = vmatprep.subr.mxu0 0.0
        %254 = vmatpush1.msra.mxu0 0.0
        %255 = vmatprep.subr.mxu0 0.0
        %256 = vmatpush1.msra.mxu0 0.0
        %257 = vmatprep.subr.mxu0 0.0
        %258 = vmatpush1.msra.mxu0 0.0
        %259 = vmatprep.subr.mxu0 0.0
        %260 = vmatpush1.msra.mxu0 0.0
        %261 = vmatprep.subr.mxu0 0.0
        %262 = vmatpush1.msra.mxu0 0.0
        %263 = vmatprep.subr.mxu0 0.0
        %264 = vmatpush1.msra.mxu0 0.0
        %265 = vmatprep.subr.mxu0 0.0
        %266 = vmatpush1.msra.mxu0 0.0
        %267 = vmatprep.subr.mxu0 0.0
        %268 = vmatpush1.msra.mxu0 0.0
        %269 = vmatprep.subr.mxu0 0.0
        %270 = vmatpush1.msra.mxu0 0.0
        %271 = vmatprep.subr.mxu0 0.0
        %272 = vmatpush1.msra.mxu0 0.0
        %273 = vmatprep.subr.mxu0 0.0
        %274 = vmatpush1.msra.mxu0 0.0
        %275 = vmatprep.subr.mxu0 0.0
        %276 = vmatpush1.msra.mxu0 0.0
        %277 = vmatprep.subr.mxu0 0.0
        %278 = vmatpush1.msra.mxu0 0.0
        %279 = vmatprep.subr.mxu0 0.0
        %280 = vmatpush1.msra.mxu0 0.0
        %281 = vmatprep.subr.mxu0 0.0
        %282 = vmatpush1.msra.mxu0 0.0
        %283 = vmatprep.subr.mxu0 0.0
        %284 = vmatpush1.msra.mxu0 0.0
        %285 = vmatprep.subr.mxu0 0.0
        %286 = vmatpush1.msra.mxu0 0.0
        %287 = vmatprep.subr.mxu0 0.0
        %288 = vmatpush1.msra.mxu0 0.0
        %289 = vmatprep.subr.mxu0 0.0
        %290 = vmatpush1.msra.mxu0 0.0
        %291 = vmatprep.mubr.f32.mxu0 0.0
        %292 = vmatmul.mubr.f32.gmra.mrb[0].mxu0 %v225
        %v293 = vpop.f32.mrb[0].mxu0
        %v294 = vadd.f32 %v222, %v293
        %v295 = vpop.f32.mrb[0].mxu0
        %296 = vdwg.mxu0
        %v297 = vxor.u32 %v294, 2147483648
        %v298 = vmul.f32 %v297, 1.442695
        %v299 = vpow.pop %v298
        %v300 = vadd.f32 %v299, 1.0
        %v301 = vrcp.pop %v300
        %v302 = vmul.f32 1.0, %v301
        %304 = vset.pattern.permute.xlu0 0
        %305 = vperm.xlu0 %304, %v302
        %v306 = vpop.permute.xlu0 %305
        %v308 = vmul.f32 %v214, %v306
        %v309 = vmul.f32 %v215, %v306
        %v310 = vrot.slane %v308, 4
        %v311 = vadd.f32 %v308, %v310
        %v312 = vrot.slane %v311, 2
        %v313 = vadd.f32 %v311, %v312
        %v314 = vrot.slane %v313, 1
        %v315 = vadd.f32 %v313, %v314
        %v316 = vrot.slane %v309, 4
        %v317 = vadd.f32 %v309, %v316
        %v318 = vrot.slane %v317, 2
        %v319 = vadd.f32 %v317, %v318
        %v320 = vrot.slane %v319, 1
        %v321 = vadd.f32 %v319, %v320
        %v322 = vrcp.pop 8.0
        %v323 = vmul.f32 %v315, %v322
        %v324 = vmul.f32 %v321, %v322
        %v325 = vrot.slane %v308, 4
        %v326 = vmax.f32 %v308, %v325
        %v327 = vrot.slane %v326, 2
        %v328 = vmax.f32 %v326, %v327
        %v329 = vrot.slane %v328, 1
        %v330 = vmax.f32 %v328, %v329
        %v331 = vrot.slane %v309, 4
        %v332 = vmax.f32 %v309, %v331
        %v333 = vrot.slane %v332, 2
        %v334 = vmax.f32 %v332, %v333
        %v335 = vrot.slane %v334, 1
        %v336 = vmax.f32 %v334, %v335
        %vm337 = vcmask 1040384
        %v338 = vsel %vm337, %v323, %v330
        %v339 = vsel %vm337, %v324, %v336
        %v340 = vlaneseq
        %v341 = vand.u32 %v340, 127
        %v342 = vadd.s32 %v341, 128
        %v343 = vand.u32 %v341, 15
        %v344 = vand.u32 %v342, 15
        %v345 = vshra.s32 %v341, 4
        %v346 = vshra.s32 %v342, 4
        %347 = vrot.lane.b32.xlu0 %v338, 3
        %v348 = vpop.permute.xlu0 %347
        %349 = vrot.lane.b32.xlu0 %v339, 3
        %v350 = vpop.permute.xlu0 %349
        %vm351 = vcmp.lt.s32.totalorder %v341, 3
        %v352 = vsel %vm351, %v348, %v350
        %v353 = vsel %vm351, %v350, %v348
        %vm354 = vcmp.ge.s32.totalorder %v343, 3
        %vm355 = vcmp.ge.s32.totalorder %v344, 3
        %vm356 = vcmp.le.s32.totalorder %v343, 18
        %vm357 = vcmp.le.s32.totalorder %v344, 18
        %vm358 = vmand %vm354, %vm356
        %vm359 = vmand %vm355, %vm357
        %v360 = vsel %vm358, 1, 0
        %v361 = vsel %vm359, 1, 0
        %vm362 = vcmp.eq.s32.totalorder %v360, 1
        %vm363 = vcmp.eq.s32.totalorder %v361, 1
        %v364 = vsel %vm362, %v353, 0.0
        %v365 = vsel %vm363, %v352, 0.0
        %366 = vrot.lane.b32.xlu0 %v364, 48
        %v367 = vpop.permute.xlu0 %366
        %368 = vrot.lane.b32.xlu0 %v365, 48
        %v369 = vpop.permute.xlu0 %368
        %vm370 = vcmp.lt.s32.totalorder %v341, 48
        %v371 = vsel %vm370, %v367, %v369
        %v372 = vsel %vm370, %v369, %v367
        %vm373 = vcmp.ge.s32.totalorder %v345, 3
        %vm374 = vcmp.ge.s32.totalorder %v346, 3
        %vm375 = vcmp.le.s32.totalorder %v345, 18
        %vm376 = vcmp.le.s32.totalorder %v346, 18
        %vm377 = vmand %vm373, %vm375
        %vm378 = vmand %vm374, %vm376
        %v379 = vsel %vm377, 1, 0
        %v380 = vsel %vm378, 1, 0
        %vm381 = vcmp.eq.s32.totalorder %v379, 1
        %vm382 = vcmp.eq.s32.totalorder %v380, 1
        %v383 = vsel %vm381, %v372, 0.0
        %v384 = vsel %vm382, %v371, 0.0
        %v385 = vld [vmem:[%s3] sm:$0x3]
        %387 = vset.pattern.permute.xlu0 0
        %388 = vperm.xlu0 %387, %v385
        %v389 = vpop.permute.xlu0 %388
        %v391 = vmul.f32 %v389, %v383
        %v392 = vmul.f32 %v389, %v384
        %v393 = vadd.f32 %v391, 0.0
        %v394 = vadd.f32 %v392, 0.0
        %395 = vrot.lane.b32.xlu0 %v364, 32
        %v396 = vpop.permute.xlu0 %395
        %397 = vrot.lane.b32.xlu0 %v365, 32
        %v398 = vpop.permute.xlu0 %397
        %vm399 = vcmp.lt.s32.totalorder %v341, 32
        %v400 = vsel %vm399, %v396, %v398
        %v401 = vsel %vm399, %v398, %v396
        %vm402 = vcmp.ge.s32.totalorder %v345, 2
        %vm403 = vcmp.ge.s32.totalorder %v346, 2
        %vm404 = vcmp.le.s32.totalorder %v345, 17
        %vm405 = vcmp.le.s32.totalorder %v346, 17
        %vm406 = vmand %vm402, %vm404
        %vm407 = vmand %vm403, %vm405
        %v408 = vsel %vm406, 1, 0
        %v409 = vsel %vm407, 1, 0
        %vm410 = vcmp.eq.s32.totalorder %v408, 1
        %vm411 = vcmp.eq.s32.totalorder %v409, 1
        %v412 = vsel %vm410, %v401, 0.0
        %v413 = vsel %vm411, %v400, 0.0
        %414 = vset.pattern.permute.xlu0 7
        %415 = vperm.xlu0 %414, %v385
        %v416 = vpop.permute.xlu0 %415
        %v418 = vmul.f32 %v416, %v412
        %v419 = vmul.f32 %v416, %v413
        %v420 = vadd.f32 %v393, %v418
        %v421 = vadd.f32 %v394, %v419
        %422 = vrot.lane.b32.xlu0 %v364, 16
        %v423 = vpop.permute.xlu0 %422
        %424 = vrot.lane.b32.xlu0 %v365, 16
        %v425 = vpop.permute.xlu0 %424
        %vm426 = vcmp.lt.s32.totalorder %v341, 16
        %v427 = vsel %vm426, %v423, %v425
        %v428 = vsel %vm426, %v425, %v423
        %vm429 = vcmp.ge.s32.totalorder %v345, 1
        %vm430 = vcmp.ge.s32.totalorder %v346, 1
        %vm431 = vcmp.le.s32.totalorder %v345, 16
        %vm432 = vcmp.le.s32.totalorder %v346, 16
        %vm433 = vmand %vm429, %vm431
        %vm434 = vmand %vm430, %vm432
        %v435 = vsel %vm433, 1, 0
        %v436 = vsel %vm434, 1, 0
        %vm437 = vcmp.eq.s32.totalorder %v435, 1
        %vm438 = vcmp.eq.s32.totalorder %v436, 1
        %v439 = vsel %vm437, %v428, 0.0
        %v440 = vsel %vm438, %v427, 0.0
        %441 = vset.pattern.permute.xlu0 14
        %442 = vperm.xlu0 %441, %v385
        %v443 = vpop.permute.xlu0 %442
        %v445 = vmul.f32 %v443, %v439
        %v446 = vmul.f32 %v443, %v440
        %v447 = vadd.f32 %v420, %v445
        %v448 = vadd.f32 %v421, %v446
        %vm449 = vcmp.ge.s32.totalorder %v345, 0
        %vm450 = vcmp.ge.s32.totalorder %v346, 0
        %vm451 = vcmp.le.s32.totalorder %v345, 15
        %vm452 = vcmp.le.s32.totalorder %v346, 15
        %vm453 = vmand %vm449, %vm451
        %vm454 = vmand %vm450, %vm452
        %v455 = vsel %vm453, 1, 0
        %v456 = vsel %vm454, 1, 0
        %vm457 = vcmp.eq.s32.totalorder %v455, 1
        %vm458 = vcmp.eq.s32.totalorder %v456, 1
        %v459 = vsel %vm457, %v364, 0.0
        %v460 = vsel %vm458, %v365, 0.0
        %461 = vset.pattern.permute.xlu0 21
        %462 = vperm.xlu0 %461, %v385
        %v463 = vpop.permute.xlu0 %462
        %v465 = vmul.f32 %v463, %v459
        %v466 = vmul.f32 %v463, %v460
        %v467 = vadd.f32 %v447, %v465
        %v468 = vadd.f32 %v448, %v466
        %469 = vrot.lane.b32.xlu0 %v364, 112
        %v470 = vpop.permute.xlu0 %469
        %471 = vrot.lane.b32.xlu0 %v365, 112
        %v472 = vpop.permute.xlu0 %471
        %vm473 = vcmp.lt.s32.totalorder %v341, 112
        %v474 = vsel %vm473, %v470, %v472
        %v475 = vsel %vm473, %v472, %v470
        %vm476 = vcmp.ge.s32.totalorder %v345, 4294967295
        %vm477 = vcmp.ge.s32.totalorder %v346, 4294967295
        %vm478 = vcmp.le.s32.totalorder %v345, 14
        %vm479 = vcmp.le.s32.totalorder %v346, 14
        %vm480 = vmand %vm476, %vm478
        %vm481 = vmand %vm477, %vm479
        %v482 = vsel %vm480, 1, 0
        %v483 = vsel %vm481, 1, 0
        %vm484 = vcmp.eq.s32.totalorder %v482, 1
        %vm485 = vcmp.eq.s32.totalorder %v483, 1
        %v486 = vsel %vm484, %v474, 0.0
        %v487 = vsel %vm485, %v475, 0.0
        %488 = vset.pattern.permute.xlu0 28
        %489 = vperm.xlu0 %488, %v385
        %v490 = vpop.permute.xlu0 %489
        %v492 = vmul.f32 %v490, %v486
        %v493 = vmul.f32 %v490, %v487
        %v494 = vadd.f32 %v467, %v492
        %v495 = vadd.f32 %v468, %v493
        %496 = vrot.lane.b32.xlu0 %v364, 96
        %v497 = vpop.permute.xlu0 %496
        %498 = vrot.lane.b32.xlu0 %v365, 96
        %v499 = vpop.permute.xlu0 %498
        %vm500 = vcmp.lt.s32.totalorder %v341, 96
        %v501 = vsel %vm500, %v497, %v499
        %v502 = vsel %vm500, %v499, %v497
        %vm503 = vcmp.ge.s32.totalorder %v345, 4294967294
        %vm504 = vcmp.ge.s32.totalorder %v346, 4294967294
        %vm505 = vcmp.le.s32.totalorder %v345, 13
        %vm506 = vcmp.le.s32.totalorder %v346, 13
        %vm507 = vmand %vm503, %vm505
        %vm508 = vmand %vm504, %vm506
        %v509 = vsel %vm507, 1, 0
        %v510 = vsel %vm508, 1, 0
        %vm511 = vcmp.eq.s32.totalorder %v509, 1
        %vm512 = vcmp.eq.s32.totalorder %v510, 1
        %v513 = vsel %vm511, %v501, 0.0
        %v514 = vsel %vm512, %v502, 0.0
        %515 = vset.pattern.permute.xlu0 35
        %516 = vperm.xlu0 %515, %v385
        %v517 = vpop.permute.xlu0 %516
        %v519 = vmul.f32 %v517, %v513
        %v520 = vmul.f32 %v517, %v514
        %v521 = vadd.f32 %v494, %v519
        %v522 = vadd.f32 %v495, %v520
        %523 = vrot.lane.b32.xlu0 %v364, 80
        %v524 = vpop.permute.xlu0 %523
        %525 = vrot.lane.b32.xlu0 %v365, 80
        %v526 = vpop.permute.xlu0 %525
        %vm527 = vcmp.lt.s32.totalorder %v341, 80
        %v528 = vsel %vm527, %v524, %v526
        %v529 = vsel %vm527, %v526, %v524
        %vm530 = vcmp.ge.s32.totalorder %v345, 4294967293
        %vm531 = vcmp.ge.s32.totalorder %v346, 4294967293
        %vm532 = vcmp.le.s32.totalorder %v345, 12
        %vm533 = vcmp.le.s32.totalorder %v346, 12
        %vm534 = vmand %vm530, %vm532
        %vm535 = vmand %vm531, %vm533
        %v536 = vsel %vm534, 1, 0
        %v537 = vsel %vm535, 1, 0
        %vm538 = vcmp.eq.s32.totalorder %v536, 1
        %vm539 = vcmp.eq.s32.totalorder %v537, 1
        %v540 = vsel %vm538, %v528, 0.0
        %v541 = vsel %vm539, %v529, 0.0
        %542 = vset.pattern.permute.xlu0 42
        %543 = vperm.xlu0 %542, %v385
        %v544 = vpop.permute.xlu0 %543
        %v546 = vmul.f32 %v544, %v540
        %v547 = vmul.f32 %v544, %v541
        %v548 = vadd.f32 %v521, %v546
        %v549 = vadd.f32 %v522, %v547
        %550 = vrot.lane.b32.xlu0 %v338, 2
        %v551 = vpop.permute.xlu0 %550
        %552 = vrot.lane.b32.xlu0 %v339, 2
        %v553 = vpop.permute.xlu0 %552
        %vm554 = vcmp.lt.s32.totalorder %v341, 2
        %v555 = vsel %vm554, %v551, %v553
        %v556 = vsel %vm554, %v553, %v551
        %vm557 = vcmp.ge.s32.totalorder %v343, 2
        %vm558 = vcmp.ge.s32.totalorder %v344, 2
        %vm559 = vcmp.le.s32.totalorder %v343, 17
        %vm560 = vcmp.le.s32.totalorder %v344, 17
        %vm561 = vmand %vm557, %vm559
        %vm562 = vmand %vm558, %vm560
        %v563 = vsel %vm561, 1, 0
        %v564 = vsel %vm562, 1, 0
        %vm565 = vcmp.eq.s32.totalorder %v563, 1
        %vm566 = vcmp.eq.s32.totalorder %v564, 1
        %v567 = vsel %vm565, %v556, 0.0
        %v568 = vsel %vm566, %v555, 0.0
        %569 = vrot.lane.b32.xlu0 %v567, 48
        %v570 = vpop.permute.xlu0 %569
        %571 = vrot.lane.b32.xlu0 %v568, 48
        %v572 = vpop.permute.xlu0 %571
        %v573 = vsel %vm370, %v570, %v572
        %v574 = vsel %vm370, %v572, %v570
        %v575 = vsel %vm381, %v574, 0.0
        %v576 = vsel %vm382, %v573, 0.0
        %577 = vset.pattern.permute.xlu0 1
        %578 = vperm.xlu0 %577, %v385
        %v579 = vpop.permute.xlu0 %578
        %v581 = vmul.f32 %v579, %v575
        %v582 = vmul.f32 %v579, %v576
        %v583 = vadd.f32 %v548, %v581
        %v584 = vadd.f32 %v549, %v582
        %585 = vrot.lane.b32.xlu0 %v567, 32
        %v586 = vpop.permute.xlu0 %585
        %587 = vrot.lane.b32.xlu0 %v568, 32
        %v588 = vpop.permute.xlu0 %587
        %v589 = vsel %vm399, %v586, %v588
        %v590 = vsel %vm399, %v588, %v586
        %v591 = vsel %vm410, %v590, 0.0
        %v592 = vsel %vm411, %v589, 0.0
        %593 = vset.pattern.permute.xlu0 8
        %594 = vperm.xlu0 %593, %v385
        %v595 = vpop.permute.xlu0 %594
        %v597 = vmul.f32 %v595, %v591
        %v598 = vmul.f32 %v595, %v592
        %v599 = vadd.f32 %v583, %v597
        %v600 = vadd.f32 %v584, %v598
        %601 = vrot.lane.b32.xlu0 %v567, 16
        %v602 = vpop.permute.xlu0 %601
        %603 = vrot.lane.b32.xlu0 %v568, 16
        %v604 = vpop.permute.xlu0 %603
        %v605 = vsel %vm426, %v602, %v604
        %v606 = vsel %vm426, %v604, %v602
        %v607 = vsel %vm437, %v606, 0.0
        %v608 = vsel %vm438, %v605, 0.0
        %609 = vset.pattern.permute.xlu0 15
        %610 = vperm.xlu0 %609, %v385
        %v611 = vpop.permute.xlu0 %610
        %v613 = vmul.f32 %v611, %v607
        %v614 = vmul.f32 %v611, %v608
        %v615 = vadd.f32 %v599, %v613
        %v616 = vadd.f32 %v600, %v614
        %v617 = vsel %vm457, %v567, 0.0
        %v618 = vsel %vm458, %v568, 0.0
        %619 = vset.pattern.permute.xlu0 22
        %620 = vperm.xlu0 %619, %v385
        %v621 = vpop.permute.xlu0 %620
        %v623 = vmul.f32 %v621, %v617
        %v624 = vmul.f32 %v621, %v618
        %v625 = vadd.f32 %v615, %v623
        %v626 = vadd.f32 %v616, %v624
        %627 = vrot.lane.b32.xlu0 %v567, 112
        %v628 = vpop.permute.xlu0 %627
        %629 = vrot.lane.b32.xlu0 %v568, 112
        %v630 = vpop.permute.xlu0 %629
        %v631 = vsel %vm473, %v628, %v630
        %v632 = vsel %vm473, %v630, %v628
        %v633 = vsel %vm484, %v631, 0.0
        %v634 = vsel %vm485, %v632, 0.0
        %635 = vset.pattern.permute.xlu0 29
        %636 = vperm.xlu0 %635, %v385
        %v637 = vpop.permute.xlu0 %636
        %v639 = vmul.f32 %v637, %v633
        %v640 = vmul.f32 %v637, %v634
        %v641 = vadd.f32 %v625, %v639
        %v642 = vadd.f32 %v626, %v640
        %643 = vrot.lane.b32.xlu0 %v567, 96
        %v644 = vpop.permute.xlu0 %643
        %645 = vrot.lane.b32.xlu0 %v568, 96
        %v646 = vpop.permute.xlu0 %645
        %v647 = vsel %vm500, %v644, %v646
        %v648 = vsel %vm500, %v646, %v644
        %v649 = vsel %vm511, %v647, 0.0
        %v650 = vsel %vm512, %v648, 0.0
        %651 = vset.pattern.permute.xlu0 36
        %652 = vperm.xlu0 %651, %v385
        %v653 = vpop.permute.xlu0 %652
        %v655 = vmul.f32 %v653, %v649
        %v656 = vmul.f32 %v653, %v650
        %v657 = vadd.f32 %v641, %v655
        %v658 = vadd.f32 %v642, %v656
        %659 = vrot.lane.b32.xlu0 %v567, 80
        %v660 = vpop.permute.xlu0 %659
        %661 = vrot.lane.b32.xlu0 %v568, 80
        %v662 = vpop.permute.xlu0 %661
        %v663 = vsel %vm527, %v660, %v662
        %v664 = vsel %vm527, %v662, %v660
        %v665 = vsel %vm538, %v663, 0.0
        %v666 = vsel %vm539, %v664, 0.0
        %667 = vset.pattern.permute.xlu0 43
        %668 = vperm.xlu0 %667, %v385
        %v669 = vpop.permute.xlu0 %668
        %v671 = vmul.f32 %v669, %v665
        %v672 = vmul.f32 %v669, %v666
        %v673 = vadd.f32 %v657, %v671
        %v674 = vadd.f32 %v658, %v672
        %675 = vrot.lane.b32.xlu0 %v338, 1
        %v676 = vpop.permute.xlu0 %675
        %677 = vrot.lane.b32.xlu0 %v339, 1
        %v678 = vpop.permute.xlu0 %677
        %vm679 = vcmp.lt.s32.totalorder %v341, 1
        %v680 = vsel %vm679, %v676, %v678
        %v681 = vsel %vm679, %v678, %v676
        %vm682 = vcmp.ge.s32.totalorder %v343, 1
        %vm683 = vcmp.ge.s32.totalorder %v344, 1
        %vm684 = vcmp.le.s32.totalorder %v343, 16
        %vm685 = vcmp.le.s32.totalorder %v344, 16
        %vm686 = vmand %vm682, %vm684
        %vm687 = vmand %vm683, %vm685
        %v688 = vsel %vm686, 1, 0
        %v689 = vsel %vm687, 1, 0
        %vm690 = vcmp.eq.s32.totalorder %v688, 1
        %vm691 = vcmp.eq.s32.totalorder %v689, 1
        %v692 = vsel %vm690, %v681, 0.0
        %v693 = vsel %vm691, %v680, 0.0
        %694 = vrot.lane.b32.xlu0 %v692, 48
        %v695 = vpop.permute.xlu0 %694
        %696 = vrot.lane.b32.xlu0 %v693, 48
        %v697 = vpop.permute.xlu0 %696
        %v698 = vsel %vm370, %v695, %v697
        %v699 = vsel %vm370, %v697, %v695
        %v700 = vsel %vm381, %v699, 0.0
        %v701 = vsel %vm382, %v698, 0.0
        %702 = vset.pattern.permute.xlu0 2
        %703 = vperm.xlu0 %702, %v385
        %v704 = vpop.permute.xlu0 %703
        %v706 = vmul.f32 %v704, %v700
        %v707 = vmul.f32 %v704, %v701
        %v708 = vadd.f32 %v673, %v706
        %v709 = vadd.f32 %v674, %v707
        %710 = vrot.lane.b32.xlu0 %v692, 32
        %v711 = vpop.permute.xlu0 %710
        %712 = vrot.lane.b32.xlu0 %v693, 32
        %v713 = vpop.permute.xlu0 %712
        %v714 = vsel %vm399, %v711, %v713
        %v715 = vsel %vm399, %v713, %v711
        %v716 = vsel %vm410, %v715, 0.0
        %v717 = vsel %vm411, %v714, 0.0
        %718 = vset.pattern.permute.xlu0 9
        %719 = vperm.xlu0 %718, %v385
        %v720 = vpop.permute.xlu0 %719
        %v722 = vmul.f32 %v720, %v716
        %v723 = vmul.f32 %v720, %v717
        %v724 = vadd.f32 %v708, %v722
        %v725 = vadd.f32 %v709, %v723
        %726 = vrot.lane.b32.xlu0 %v692, 16
        %v727 = vpop.permute.xlu0 %726
        %728 = vrot.lane.b32.xlu0 %v693, 16
        %v729 = vpop.permute.xlu0 %728
        %v730 = vsel %vm426, %v727, %v729
        %v731 = vsel %vm426, %v729, %v727
        %v732 = vsel %vm437, %v731, 0.0
        %v733 = vsel %vm438, %v730, 0.0
        %734 = vset.pattern.permute.xlu0 16
        %735 = vperm.xlu0 %734, %v385
        %v736 = vpop.permute.xlu0 %735
        %v738 = vmul.f32 %v736, %v732
        %v739 = vmul.f32 %v736, %v733
        %v740 = vadd.f32 %v724, %v738
        %v741 = vadd.f32 %v725, %v739
        %v742 = vsel %vm457, %v692, 0.0
        %v743 = vsel %vm458, %v693, 0.0
        %744 = vset.pattern.permute.xlu0 23
        %745 = vperm.xlu0 %744, %v385
        %v746 = vpop.permute.xlu0 %745
        %v748 = vmul.f32 %v746, %v742
        %v749 = vmul.f32 %v746, %v743
        %v750 = vadd.f32 %v740, %v748
        %v751 = vadd.f32 %v741, %v749
        %752 = vrot.lane.b32.xlu0 %v692, 112
        %v753 = vpop.permute.xlu0 %752
        %754 = vrot.lane.b32.xlu0 %v693, 112
        %v755 = vpop.permute.xlu0 %754
        %v756 = vsel %vm473, %v753, %v755
        %v757 = vsel %vm473, %v755, %v753
        %v758 = vsel %vm484, %v756, 0.0
        %v759 = vsel %vm485, %v757, 0.0
        %760 = vset.pattern.permute.xlu0 30
        %761 = vperm.xlu0 %760, %v385
        %v762 = vpop.permute.xlu0 %761
        %v764 = vmul.f32 %v762, %v758
        %v765 = vmul.f32 %v762, %v759
        %v766 = vadd.f32 %v750, %v764
        %v767 = vadd.f32 %v751, %v765
        %768 = vrot.lane.b32.xlu0 %v692, 96
        %v769 = vpop.permute.xlu0 %768
        %770 = vrot.lane.b32.xlu0 %v693, 96
        %v771 = vpop.permute.xlu0 %770
        %v772 = vsel %vm500, %v769, %v771
        %v773 = vsel %vm500, %v771, %v769
        %v774 = vsel %vm511, %v772, 0.0
        %v775 = vsel %vm512, %v773, 0.0
        %776 = vset.pattern.permute.xlu0 37
        %777 = vperm.xlu0 %776, %v385
        %v778 = vpop.permute.xlu0 %777
        %v780 = vmul.f32 %v778, %v774
        %v781 = vmul.f32 %v778, %v775
        %v782 = vadd.f32 %v766, %v780
        %v783 = vadd.f32 %v767, %v781
        %784 = vrot.lane.b32.xlu0 %v692, 80
        %v785 = vpop.permute.xlu0 %784
        %786 = vrot.lane.b32.xlu0 %v693, 80
        %v787 = vpop.permute.xlu0 %786
        %v788 = vsel %vm527, %v785, %v787
        %v789 = vsel %vm527, %v787, %v785
        %v790 = vsel %vm538, %v788, 0.0
        %v791 = vsel %vm539, %v789, 0.0
        %792 = vset.pattern.permute.xlu0 44
        %793 = vperm.xlu0 %792, %v385
        %v794 = vpop.permute.xlu0 %793
        %v796 = vmul.f32 %v794, %v790
        %v797 = vmul.f32 %v794, %v791
        %v798 = vadd.f32 %v782, %v796
        %v799 = vadd.f32 %v783, %v797
        %vm800 = vcmp.ge.s32.totalorder %v343, 0
        %vm801 = vcmp.ge.s32.totalorder %v344, 0
        %vm802 = vcmp.le.s32.totalorder %v343, 15
        %vm803 = vcmp.le.s32.totalorder %v344, 15
        %vm804 = vmand %vm800, %vm802
        %vm805 = vmand %vm801, %vm803
        %v806 = vsel %vm804, 1, 0
        %v807 = vsel %vm805, 1, 0
        %vm808 = vcmp.eq.s32.totalorder %v806, 1
        %vm809 = vcmp.eq.s32.totalorder %v807, 1
        %v810 = vsel %vm808, %v338, 0.0
        %v811 = vsel %vm809, %v339, 0.0
        %812 = vrot.lane.b32.xlu0 %v810, 48
        %v813 = vpop.permute.xlu0 %812
        %814 = vrot.lane.b32.xlu0 %v811, 48
        %v815 = vpop.permute.xlu0 %814
        %v816 = vsel %vm370, %v813, %v815
        %v817 = vsel %vm370, %v815, %v813
        %v818 = vsel %vm381, %v817, 0.0
        %v819 = vsel %vm382, %v816, 0.0
        %820 = vset.pattern.permute.xlu0 3
        %821 = vperm.xlu0 %820, %v385
        %v822 = vpop.permute.xlu0 %821
        %v824 = vmul.f32 %v822, %v818
        %v825 = vmul.f32 %v822, %v819
        %v826 = vadd.f32 %v798, %v824
        %v827 = vadd.f32 %v799, %v825
        %828 = vrot.lane.b32.xlu0 %v810, 32
        %v829 = vpop.permute.xlu0 %828
        %830 = vrot.lane.b32.xlu0 %v811, 32
        %v831 = vpop.permute.xlu0 %830
        %v832 = vsel %vm399, %v829, %v831
        %v833 = vsel %vm399, %v831, %v829
        %v834 = vsel %vm410, %v833, 0.0
        %v835 = vsel %vm411, %v832, 0.0
        %836 = vset.pattern.permute.xlu0 10
        %837 = vperm.xlu0 %836, %v385
        %v838 = vpop.permute.xlu0 %837
        %v840 = vmul.f32 %v838, %v834
        %v841 = vmul.f32 %v838, %v835
        %v842 = vadd.f32 %v826, %v840
        %v843 = vadd.f32 %v827, %v841
        %844 = vrot.lane.b32.xlu0 %v810, 16
        %v845 = vpop.permute.xlu0 %844
        %846 = vrot.lane.b32.xlu0 %v811, 16
        %v847 = vpop.permute.xlu0 %846
        %v848 = vsel %vm426, %v845, %v847
        %v849 = vsel %vm426, %v847, %v845
        %v850 = vsel %vm437, %v849, 0.0
        %v851 = vsel %vm438, %v848, 0.0
        %852 = vset.pattern.permute.xlu0 17
        %853 = vperm.xlu0 %852, %v385
        %v854 = vpop.permute.xlu0 %853
        %v856 = vmul.f32 %v854, %v850
        %v857 = vmul.f32 %v854, %v851
        %v858 = vadd.f32 %v842, %v856
        %v859 = vadd.f32 %v843, %v857
        %v860 = vsel %vm457, %v810, 0.0
        %v861 = vsel %vm458, %v811, 0.0
        %862 = vset.pattern.permute.xlu0 24
        %863 = vperm.xlu0 %862, %v385
        %v864 = vpop.permute.xlu0 %863
        %v866 = vmul.f32 %v864, %v860
        %v867 = vmul.f32 %v864, %v861
        %v868 = vadd.f32 %v858, %v866
        %v869 = vadd.f32 %v859, %v867
        %870 = vrot.lane.b32.xlu0 %v810, 112
        %v871 = vpop.permute.xlu0 %870
        %872 = vrot.lane.b32.xlu0 %v811, 112
        %v873 = vpop.permute.xlu0 %872
        %v874 = vsel %vm473, %v871, %v873
        %v875 = vsel %vm473, %v873, %v871
        %v876 = vsel %vm484, %v874, 0.0
        %v877 = vsel %vm485, %v875, 0.0
        %878 = vset.pattern.permute.xlu0 31
        %879 = vperm.xlu0 %878, %v385
        %v880 = vpop.permute.xlu0 %879
        %v882 = vmul.f32 %v880, %v876
        %v883 = vmul.f32 %v880, %v877
        %v884 = vadd.f32 %v868, %v882
        %v885 = vadd.f32 %v869, %v883
        %886 = vrot.lane.b32.xlu0 %v810, 96
        %v887 = vpop.permute.xlu0 %886
        %888 = vrot.lane.b32.xlu0 %v811, 96
        %v889 = vpop.permute.xlu0 %888
        %v890 = vsel %vm500, %v887, %v889
        %v891 = vsel %vm500, %v889, %v887
        %v892 = vsel %vm511, %v890, 0.0
        %v893 = vsel %vm512, %v891, 0.0
        %894 = vset.pattern.permute.xlu0 38
        %895 = vperm.xlu0 %894, %v385
        %v896 = vpop.permute.xlu0 %895
        %v898 = vmul.f32 %v896, %v892
        %v899 = vmul.f32 %v896, %v893
        %v900 = vadd.f32 %v884, %v898
        %v901 = vadd.f32 %v885, %v899
        %902 = vrot.lane.b32.xlu0 %v810, 80
        %v903 = vpop.permute.xlu0 %902
        %904 = vrot.lane.b32.xlu0 %v811, 80
        %v905 = vpop.permute.xlu0 %904
        %v906 = vsel %vm527, %v903, %v905
        %v907 = vsel %vm527, %v905, %v903
        %v908 = vsel %vm538, %v906, 0.0
        %v909 = vsel %vm539, %v907, 0.0
        %910 = vset.pattern.permute.xlu0 45
        %911 = vperm.xlu0 %910, %v385
        %v912 = vpop.permute.xlu0 %911
        %v914 = vmul.f32 %v912, %v908
        %v915 = vmul.f32 %v912, %v909
        %v916 = vadd.f32 %v900, %v914
        %v917 = vadd.f32 %v901, %v915
        %918 = vrot.lane.b32.xlu0 %v338, 127
        %v919 = vpop.permute.xlu0 %918
        %920 = vrot.lane.b32.xlu0 %v339, 127
        %v921 = vpop.permute.xlu0 %920
        %vm922 = vcmp.lt.s32.totalorder %v341, 127
        %v923 = vsel %vm922, %v919, %v921
        %v924 = vsel %vm922, %v921, %v919
        %vm925 = vcmp.ge.s32.totalorder %v343, 4294967295
        %vm926 = vcmp.ge.s32.totalorder %v344, 4294967295
        %vm927 = vcmp.le.s32.totalorder %v343, 14
        %vm928 = vcmp.le.s32.totalorder %v344, 14
        %vm929 = vmand %vm925, %vm927
        %vm930 = vmand %vm926, %vm928
        %v931 = vsel %vm929, 1, 0
        %v932 = vsel %vm930, 1, 0
        %vm933 = vcmp.eq.s32.totalorder %v931, 1
        %vm934 = vcmp.eq.s32.totalorder %v932, 1
        %v935 = vsel %vm933, %v923, 0.0
        %v936 = vsel %vm934, %v924, 0.0
        %937 = vrot.lane.b32.xlu0 %v935, 48
        %v938 = vpop.permute.xlu0 %937
        %939 = vrot.lane.b32.xlu0 %v936, 48
        %v940 = vpop.permute.xlu0 %939
        %v941 = vsel %vm370, %v938, %v940
        %v942 = vsel %vm370, %v940, %v938
        %v943 = vsel %vm381, %v942, 0.0
        %v944 = vsel %vm382, %v941, 0.0
        %945 = vset.pattern.permute.xlu0 4
        %946 = vperm.xlu0 %945, %v385
        %v947 = vpop.permute.xlu0 %946
        %v949 = vmul.f32 %v947, %v943
        %v950 = vmul.f32 %v947, %v944
        %v951 = vadd.f32 %v916, %v949
        %v952 = vadd.f32 %v917, %v950
        %953 = vrot.lane.b32.xlu0 %v935, 32
        %v954 = vpop.permute.xlu0 %953
        %955 = vrot.lane.b32.xlu0 %v936, 32
        %v956 = vpop.permute.xlu0 %955
        %v957 = vsel %vm399, %v954, %v956
        %v958 = vsel %vm399, %v956, %v954
        %v959 = vsel %vm410, %v958, 0.0
        %v960 = vsel %vm411, %v957, 0.0
        %961 = vset.pattern.permute.xlu0 11
        %962 = vperm.xlu0 %961, %v385
        %v963 = vpop.permute.xlu0 %962
        %v965 = vmul.f32 %v963, %v959
        %v966 = vmul.f32 %v963, %v960
        %v967 = vadd.f32 %v951, %v965
        %v968 = vadd.f32 %v952, %v966
        %969 = vrot.lane.b32.xlu0 %v935, 16
        %v970 = vpop.permute.xlu0 %969
        %971 = vrot.lane.b32.xlu0 %v936, 16
        %v972 = vpop.permute.xlu0 %971
        %v973 = vsel %vm426, %v970, %v972
        %v974 = vsel %vm426, %v972, %v970
        %v975 = vsel %vm437, %v974, 0.0
        %v976 = vsel %vm438, %v973, 0.0
        %977 = vset.pattern.permute.xlu0 18
        %978 = vperm.xlu0 %977, %v385
        %v979 = vpop.permute.xlu0 %978
        %v981 = vmul.f32 %v979, %v975
        %v982 = vmul.f32 %v979, %v976
        %v983 = vadd.f32 %v967, %v981
        %v984 = vadd.f32 %v968, %v982
        %v985 = vsel %vm457, %v935, 0.0
        %v986 = vsel %vm458, %v936, 0.0
        %987 = vset.pattern.permute.xlu0 25
        %988 = vperm.xlu0 %987, %v385
        %v989 = vpop.permute.xlu0 %988
        %v991 = vmul.f32 %v989, %v985
        %v992 = vmul.f32 %v989, %v986
        %v993 = vadd.f32 %v983, %v991
        %v994 = vadd.f32 %v984, %v992
        %995 = vrot.lane.b32.xlu0 %v935, 112
        %v996 = vpop.permute.xlu0 %995
        %997 = vrot.lane.b32.xlu0 %v936, 112
        %v998 = vpop.permute.xlu0 %997
        %v999 = vsel %vm473, %v996, %v998
        %v1000 = vsel %vm473, %v998, %v996
        %v1001 = vsel %vm484, %v999, 0.0
        %v1002 = vsel %vm485, %v1000, 0.0
        %1003 = vset.pattern.permute.xlu0 32
        %1004 = vperm.xlu0 %1003, %v385
        %v1005 = vpop.permute.xlu0 %1004
        %v1007 = vmul.f32 %v1005, %v1001
        %v1008 = vmul.f32 %v1005, %v1002
        %v1009 = vadd.f32 %v993, %v1007
        %v1010 = vadd.f32 %v994, %v1008
        %1011 = vrot.lane.b32.xlu0 %v935, 96
        %v1012 = vpop.permute.xlu0 %1011
        %1013 = vrot.lane.b32.xlu0 %v936, 96
        %v1014 = vpop.permute.xlu0 %1013
        %v1015 = vsel %vm500, %v1012, %v1014
        %v1016 = vsel %vm500, %v1014, %v1012
        %v1017 = vsel %vm511, %v1015, 0.0
        %v1018 = vsel %vm512, %v1016, 0.0
        %1019 = vset.pattern.permute.xlu0 39
        %1020 = vperm.xlu0 %1019, %v385
        %v1021 = vpop.permute.xlu0 %1020
        %v1023 = vmul.f32 %v1021, %v1017
        %v1024 = vmul.f32 %v1021, %v1018
        %v1025 = vadd.f32 %v1009, %v1023
        %v1026 = vadd.f32 %v1010, %v1024
        %1027 = vrot.lane.b32.xlu0 %v935, 80
        %v1028 = vpop.permute.xlu0 %1027
        %1029 = vrot.lane.b32.xlu0 %v936, 80
        %v1030 = vpop.permute.xlu0 %1029
        %v1031 = vsel %vm527, %v1028, %v1030
        %v1032 = vsel %vm527, %v1030, %v1028
        %v1033 = vsel %vm538, %v1031, 0.0
        %v1034 = vsel %vm539, %v1032, 0.0
        %1035 = vset.pattern.permute.xlu0 46
        %1036 = vperm.xlu0 %1035, %v385
        %v1037 = vpop.permute.xlu0 %1036
        %v1039 = vmul.f32 %v1037, %v1033
        %v1040 = vmul.f32 %v1037, %v1034
        %v1041 = vadd.f32 %v1025, %v1039
        %v1042 = vadd.f32 %v1026, %v1040
        %1043 = vrot.lane.b32.xlu0 %v338, 126
        %v1044 = vpop.permute.xlu0 %1043
        %1045 = vrot.lane.b32.xlu0 %v339, 126
        %v1046 = vpop.permute.xlu0 %1045
        %vm1047 = vcmp.lt.s32.totalorder %v341, 126
        %v1048 = vsel %vm1047, %v1044, %v1046
        %v1049 = vsel %vm1047, %v1046, %v1044
        %vm1050 = vcmp.ge.s32.totalorder %v343, 4294967294
        %vm1051 = vcmp.ge.s32.totalorder %v344, 4294967294
        %vm1052 = vcmp.le.s32.totalorder %v343, 13
        %vm1053 = vcmp.le.s32.totalorder %v344, 13
        %vm1054 = vmand %vm1050, %vm1052
        %vm1055 = vmand %vm1051, %vm1053
        %v1056 = vsel %vm1054, 1, 0
        %v1057 = vsel %vm1055, 1, 0
        %vm1058 = vcmp.eq.s32.totalorder %v1056, 1
        %vm1059 = vcmp.eq.s32.totalorder %v1057, 1
        %v1060 = vsel %vm1058, %v1048, 0.0
        %v1061 = vsel %vm1059, %v1049, 0.0
        %1062 = vrot.lane.b32.xlu0 %v1060, 48
        %v1063 = vpop.permute.xlu0 %1062
        %1064 = vrot.lane.b32.xlu0 %v1061, 48
        %v1065 = vpop.permute.xlu0 %1064
        %v1066 = vsel %vm370, %v1063, %v1065
        %v1067 = vsel %vm370, %v1065, %v1063
        %v1068 = vsel %vm381, %v1067, 0.0
        %v1069 = vsel %vm382, %v1066, 0.0
        %1070 = vset.pattern.permute.xlu0 5
        %1071 = vperm.xlu0 %1070, %v385
        %v1072 = vpop.permute.xlu0 %1071
        %v1074 = vmul.f32 %v1072, %v1068
        %v1075 = vmul.f32 %v1072, %v1069
        %v1076 = vadd.f32 %v1041, %v1074
        %v1077 = vadd.f32 %v1042, %v1075
        %1078 = vrot.lane.b32.xlu0 %v1060, 32
        %v1079 = vpop.permute.xlu0 %1078
        %1080 = vrot.lane.b32.xlu0 %v1061, 32
        %v1081 = vpop.permute.xlu0 %1080
        %v1082 = vsel %vm399, %v1079, %v1081
        %v1083 = vsel %vm399, %v1081, %v1079
        %v1084 = vsel %vm410, %v1083, 0.0
        %v1085 = vsel %vm411, %v1082, 0.0
        %1086 = vset.pattern.permute.xlu0 12
        %1087 = vperm.xlu0 %1086, %v385
        %v1088 = vpop.permute.xlu0 %1087
        %v1090 = vmul.f32 %v1088, %v1084
        %v1091 = vmul.f32 %v1088, %v1085
        %v1092 = vadd.f32 %v1076, %v1090
        %v1093 = vadd.f32 %v1077, %v1091
        %1094 = vrot.lane.b32.xlu0 %v1060, 16
        %v1095 = vpop.permute.xlu0 %1094
        %1096 = vrot.lane.b32.xlu0 %v1061, 16
        %v1097 = vpop.permute.xlu0 %1096
        %v1098 = vsel %vm426, %v1095, %v1097
        %v1099 = vsel %vm426, %v1097, %v1095
        %v1100 = vsel %vm437, %v1099, 0.0
        %v1101 = vsel %vm438, %v1098, 0.0
        %1102 = vset.pattern.permute.xlu0 19
        %1103 = vperm.xlu0 %1102, %v385
        %v1104 = vpop.permute.xlu0 %1103
        %v1106 = vmul.f32 %v1104, %v1100
        %v1107 = vmul.f32 %v1104, %v1101
        %v1108 = vadd.f32 %v1092, %v1106
        %v1109 = vadd.f32 %v1093, %v1107
        %v1110 = vsel %vm457, %v1060, 0.0
        %v1111 = vsel %vm458, %v1061, 0.0
        %1112 = vset.pattern.permute.xlu0 26
        %1113 = vperm.xlu0 %1112, %v385
        %v1114 = vpop.permute.xlu0 %1113
        %v1116 = vmul.f32 %v1114, %v1110
        %v1117 = vmul.f32 %v1114, %v1111
        %v1118 = vadd.f32 %v1108, %v1116
        %v1119 = vadd.f32 %v1109, %v1117
        %1120 = vrot.lane.b32.xlu0 %v1060, 112
        %v1121 = vpop.permute.xlu0 %1120
        %1122 = vrot.lane.b32.xlu0 %v1061, 112
        %v1123 = vpop.permute.xlu0 %1122
        %v1124 = vsel %vm473, %v1121, %v1123
        %v1125 = vsel %vm473, %v1123, %v1121
        %v1126 = vsel %vm484, %v1124, 0.0
        %v1127 = vsel %vm485, %v1125, 0.0
        %1128 = vset.pattern.permute.xlu0 33
        %1129 = vperm.xlu0 %1128, %v385
        %v1130 = vpop.permute.xlu0 %1129
        %v1132 = vmul.f32 %v1130, %v1126
        %v1133 = vmul.f32 %v1130, %v1127
        %v1134 = vadd.f32 %v1118, %v1132
        %v1135 = vadd.f32 %v1119, %v1133
        %1136 = vrot.lane.b32.xlu0 %v1060, 96
        %v1137 = vpop.permute.xlu0 %1136
        %1138 = vrot.lane.b32.xlu0 %v1061, 96
        %v1139 = vpop.permute.xlu0 %1138
        %v1140 = vsel %vm500, %v1137, %v1139
        %v1141 = vsel %vm500, %v1139, %v1137
        %v1142 = vsel %vm511, %v1140, 0.0
        %v1143 = vsel %vm512, %v1141, 0.0
        %1144 = vset.pattern.permute.xlu0 40
        %1145 = vperm.xlu0 %1144, %v385
        %v1146 = vpop.permute.xlu0 %1145
        %v1148 = vmul.f32 %v1146, %v1142
        %v1149 = vmul.f32 %v1146, %v1143
        %v1150 = vadd.f32 %v1134, %v1148
        %v1151 = vadd.f32 %v1135, %v1149
        %1152 = vrot.lane.b32.xlu0 %v1060, 80
        %v1153 = vpop.permute.xlu0 %1152
        %1154 = vrot.lane.b32.xlu0 %v1061, 80
        %v1155 = vpop.permute.xlu0 %1154
        %v1156 = vsel %vm527, %v1153, %v1155
        %v1157 = vsel %vm527, %v1155, %v1153
        %v1158 = vsel %vm538, %v1156, 0.0
        %v1159 = vsel %vm539, %v1157, 0.0
        %1160 = vset.pattern.permute.xlu0 47
        %1161 = vperm.xlu0 %1160, %v385
        %v1162 = vpop.permute.xlu0 %1161
        %v1164 = vmul.f32 %v1162, %v1158
        %v1165 = vmul.f32 %v1162, %v1159
        %v1166 = vadd.f32 %v1150, %v1164
        %v1167 = vadd.f32 %v1151, %v1165
        %1168 = vrot.lane.b32.xlu0 %v338, 125
        %v1169 = vpop.permute.xlu0 %1168
        %1170 = vrot.lane.b32.xlu0 %v339, 125
        %v1171 = vpop.permute.xlu0 %1170
        %vm1172 = vcmp.lt.s32.totalorder %v341, 125
        %v1173 = vsel %vm1172, %v1169, %v1171
        %v1174 = vsel %vm1172, %v1171, %v1169
        %vm1175 = vcmp.ge.s32.totalorder %v343, 4294967293
        %vm1176 = vcmp.ge.s32.totalorder %v344, 4294967293
        %vm1177 = vcmp.le.s32.totalorder %v343, 12
        %vm1178 = vcmp.le.s32.totalorder %v344, 12
        %vm1179 = vmand %vm1175, %vm1177
        %vm1180 = vmand %vm1176, %vm1178
        %v1181 = vsel %vm1179, 1, 0
        %v1182 = vsel %vm1180, 1, 0
        %vm1183 = vcmp.eq.s32.totalorder %v1181, 1
        %vm1184 = vcmp.eq.s32.totalorder %v1182, 1
        %v1185 = vsel %vm1183, %v1173, 0.0
        %v1186 = vsel %vm1184, %v1174, 0.0
        %1187 = vrot.lane.b32.xlu0 %v1185, 48
        %v1188 = vpop.permute.xlu0 %1187
        %1189 = vrot.lane.b32.xlu0 %v1186, 48
        %v1190 = vpop.permute.xlu0 %1189
        %v1191 = vsel %vm370, %v1188, %v1190
        %v1192 = vsel %vm370, %v1190, %v1188
        %v1193 = vsel %vm381, %v1192, 0.0
        %v1194 = vsel %vm382, %v1191, 0.0
        %1195 = vset.pattern.permute.xlu0 6
        %1196 = vperm.xlu0 %1195, %v385
        %v1197 = vpop.permute.xlu0 %1196
        %v1199 = vmul.f32 %v1197, %v1193
        %v1200 = vmul.f32 %v1197, %v1194
        %v1201 = vadd.f32 %v1166, %v1199
        %v1202 = vadd.f32 %v1167, %v1200
        %1203 = vrot.lane.b32.xlu0 %v1185, 32
        %v1204 = vpop.permute.xlu0 %1203
        %1205 = vrot.lane.b32.xlu0 %v1186, 32
        %v1206 = vpop.permute.xlu0 %1205
        %v1207 = vsel %vm399, %v1204, %v1206
        %v1208 = vsel %vm399, %v1206, %v1204
        %v1209 = vsel %vm410, %v1208, 0.0
        %v1210 = vsel %vm411, %v1207, 0.0
        %1211 = vset.pattern.permute.xlu0 13
        %1212 = vperm.xlu0 %1211, %v385
        %v1213 = vpop.permute.xlu0 %1212
        %v1215 = vmul.f32 %v1213, %v1209
        %v1216 = vmul.f32 %v1213, %v1210
        %v1217 = vadd.f32 %v1201, %v1215
        %v1218 = vadd.f32 %v1202, %v1216
        %1219 = vrot.lane.b32.xlu0 %v1185, 16
        %v1220 = vpop.permute.xlu0 %1219
        %1221 = vrot.lane.b32.xlu0 %v1186, 16
        %v1222 = vpop.permute.xlu0 %1221
        %v1223 = vsel %vm426, %v1220, %v1222
        %v1224 = vsel %vm426, %v1222, %v1220
        %v1225 = vsel %vm437, %v1224, 0.0
        %v1226 = vsel %vm438, %v1223, 0.0
        %1227 = vset.pattern.permute.xlu0 20
        %1228 = vperm.xlu0 %1227, %v385
        %v1229 = vpop.permute.xlu0 %1228
        %v1231 = vmul.f32 %v1229, %v1225
        %v1232 = vmul.f32 %v1229, %v1226
        %v1233 = vadd.f32 %v1217, %v1231
        %v1234 = vadd.f32 %v1218, %v1232
        %v1235 = vsel %vm457, %v1185, 0.0
        %v1236 = vsel %vm458, %v1186, 0.0
        %1237 = vset.pattern.permute.xlu0 27
        %1238 = vperm.xlu0 %1237, %v385
        %v1239 = vpop.permute.xlu0 %1238
        %v1241 = vmul.f32 %v1239, %v1235
        %v1242 = vmul.f32 %v1239, %v1236
        %v1243 = vadd.f32 %v1233, %v1241
        %v1244 = vadd.f32 %v1234, %v1242
        %1245 = vrot.lane.b32.xlu0 %v1185, 112
        %v1246 = vpop.permute.xlu0 %1245
        %1247 = vrot.lane.b32.xlu0 %v1186, 112
        %v1248 = vpop.permute.xlu0 %1247
        %v1249 = vsel %vm473, %v1246, %v1248
        %v1250 = vsel %vm473, %v1248, %v1246
        %v1251 = vsel %vm484, %v1249, 0.0
        %v1252 = vsel %vm485, %v1250, 0.0
        %1253 = vset.pattern.permute.xlu0 34
        %1254 = vperm.xlu0 %1253, %v385
        %v1255 = vpop.permute.xlu0 %1254
        %v1257 = vmul.f32 %v1255, %v1251
        %v1258 = vmul.f32 %v1255, %v1252
        %v1259 = vadd.f32 %v1243, %v1257
        %v1260 = vadd.f32 %v1244, %v1258
        %1261 = vrot.lane.b32.xlu0 %v1185, 96
        %v1262 = vpop.permute.xlu0 %1261
        %1263 = vrot.lane.b32.xlu0 %v1186, 96
        %v1264 = vpop.permute.xlu0 %1263
        %v1265 = vsel %vm500, %v1262, %v1264
        %v1266 = vsel %vm500, %v1264, %v1262
        %v1267 = vsel %vm511, %v1265, 0.0
        %v1268 = vsel %vm512, %v1266, 0.0
        %1269 = vset.pattern.permute.xlu0 41
        %1270 = vperm.xlu0 %1269, %v385
        %v1271 = vpop.permute.xlu0 %1270
        %v1273 = vmul.f32 %v1271, %v1267
        %v1274 = vmul.f32 %v1271, %v1268
        %v1275 = vadd.f32 %v1259, %v1273
        %v1276 = vadd.f32 %v1260, %v1274
        %1277 = vrot.lane.b32.xlu0 %v1185, 80
        %v1278 = vpop.permute.xlu0 %1277
        %1279 = vrot.lane.b32.xlu0 %v1186, 80
        %v1280 = vpop.permute.xlu0 %1279
        %v1281 = vsel %vm527, %v1278, %v1280
        %v1282 = vsel %vm527, %v1280, %v1278
        %v1283 = vsel %vm538, %v1281, 0.0
        %v1284 = vsel %vm539, %v1282, 0.0
        %1285 = vset.pattern.permute.xlu0 48
        %1286 = vperm.xlu0 %1285, %v385
        %v1287 = vpop.permute.xlu0 %1286
        %v1289 = vmul.f32 %v1287, %v1283
        %v1290 = vmul.f32 %v1287, %v1284
        %v1291 = vadd.f32 %v1275, %v1289
        %v1292 = vadd.f32 %v1276, %v1290
        %vm1293 = vcmask 1041408
        %v1294 = vsel %vm1293, %v1291, 0.0
        %v1295 = vrot.slane %v1294, 4
        %v1296 = vadd.f32 %v1294, %v1295
        %v1297 = vrot.slane %v1296, 2
        %v1298 = vadd.f32 %v1296, %v1297
        %v1299 = vrot.slane %v1298, 1
        %v1300 = vadd.f32 %v1298, %v1299
        %v1301 = vsel %vm1293, %v1292, 0.0
        %v1302 = vrot.slane %v1301, 4
        %v1303 = vadd.f32 %v1301, %v1302
        %v1304 = vrot.slane %v1303, 2
        %v1305 = vadd.f32 %v1303, %v1304
        %v1306 = vrot.slane %v1305, 1
        %v1307 = vadd.f32 %v1305, %v1306
        %v1308 = vxor.u32 %v1300, 2147483648
        %v1309 = vxor.u32 %v1307, 2147483648
        %v1310 = vmul.f32 %v1308, 1.442695
        %v1311 = vpow.pop %v1310
        %v1312 = vmul.f32 %v1309, 1.442695
        %v1313 = vpow.pop %v1312
        %v1314 = vadd.f32 %v1311, 1.0
        %v1315 = vadd.f32 %v1313, 1.0
        %v1316 = vrcp.pop %v1314
        %v1317 = vmul.f32 1.0, %v1316
        %v1318 = vrcp.pop %v1315
        %v1319 = vmul.f32 1.0, %v1318
        %v1320 = vmul.f32 %v308, %v1317
        %v1321 = vmul.f32 %v309, %v1319
        %1322 = vst [vmem:[%s213] sm:$0xff] %v1320
        %1323 = vst [vmem:[%s213 + $0x8] sm:$0xff] %v1321
        %s1324 = sand.u32 %s118, 1
        %s1325 = scalar_lea.sflag [#allocation4], %s1324
        %s1326 = sand.u32 %s118, 1
        %s1327 = smul.addr %s1326, 16
        %s1328 = scalar_lea.vmem [#allocation5], %s1327
        // Predicated region
        $region41: #{tpu_custom_call.1} parent=35 // pred_check
          %p1329 = pneg %p128
        $region42: #{tpu_custom_call.1} parent=35 // pred_check_branch
          %1331 = sbr.rel (%p1329) target = $region44
        $region43: #{tpu_custom_call.1} parent=35 // pred_region
          %s1333 = ssub.s32 256, 256
          %1334 = vsyncadd %s1325, %s1333
          %s1335 = smul.addr %s21, 2
          %s1336 = smul.addr %s1335, 128
          %s1337 = scalar_lea.hbm %s4, %s1336
          %s1339 = sshll.u32 %s1328, 4
          %s1340 = int_to_ptr.vmem [resolvable:$true] %s1339
          %1342 = dma.vmem_to_hbm [thread:$0]  %s1340, 256, %s1337, %s1325
        $region44: #{tpu_custom_call.1} parent=35 // pred_fallthru
          _
      $region36: #{tpu_custom_call.1} parent=5 // pred_fallthru
        _
      %p1343 = scmp.le.s32.totalorder 2, %s16
      // Predicated region
      $region45: #{tpu_custom_call.1} parent=5 // pred_check
        %p1344 = pneg %p1343
      $region46: #{tpu_custom_call.1} parent=5 // pred_check_branch
        %1346 = sbr.rel (%p1344) target = $region48
      $region47: #{tpu_custom_call.1} parent=5 // pred_region
        %s1347 = ssub.s32 %s16, 2
        // Predicated region
        $region49: #{tpu_custom_call.1} parent=47 // pred_check
          %p1348 = pneg %p134
        $region50: #{tpu_custom_call.1} parent=47 // pred_check_branch
          %1350 = sbr.rel (%p1348) target = $region52
        $region51: #{tpu_custom_call.1} parent=47 // pred_region
          %s1351 = sand.u32 %s119, 1
          %s1352 = scalar_lea.sflag [#allocation4], %s1351
          %s1353 = sand.u32 %s119, 1
          %s1354 = smul.addr %s1353, 16
          %s1355 = scalar_lea.vmem [#allocation5], %s1354
          %1356 = dma.done %s1352, 256
        $region52: #{tpu_custom_call.1} parent=47 // pred_fallthru
          _
      $region48: #{tpu_custom_call.1} parent=5 // pred_fallthru
        _
    $region6: #{tpu_custom_call.1} parent=1 // loop_footer
      %s20 = sadd.s32 1, %s16
    $region7: #{tpu_custom_call.1} parent=1 // loop_footer_branch
      %15 = sbr.rel target = $region3
    $region8: #{tpu_custom_call.1} parent=1 // loop_exit
      _
    %1357 = vsyncpa [#allocation3], 1
    %s1358 = scalar_lea.sflag [#allocation3], 1
    %1359 = vsyncpa %s1358, 1
    %1360 = vsyncpa [#allocation4], 1
    %s1361 = scalar_lea.sflag [#allocation4], 1
    %1362 = vsyncpa %s1361, 1

</llo_original>
